<compile_context>
chip_gen: v5e
topology: v5e:2x2
jax: 0.10.0
libtpu: 0.0.40
codegen_flags: <defaults>
</compile_context>

<pallas_src>
import numpy as np

import jax
import jax.numpy as jnp
from jax.experimental import pallas as pl
from jax.experimental.pallas import tpu as pltpu

# ---------------------------------------------------------------------------
# Model dimensions (scaled-down stand-in for efficientnet-b2, in_channels=1)
# ---------------------------------------------------------------------------
EPS = 1e-3                 # EfficientNet batch_norm_epsilon
BATCH = 2
OUT_SIZE = 128             # extractor out_size (original default 1000; scaled down)

C0, C1, CEXP, C2, CHEAD, NCLS = 8, 8, 32, 16, 64, 32
SE1, SE2 = 2, 2            # SE squeeze widths
H_IN = W_IN = 16
H1 = W1 = 8                # spatial after stem (stride 2)
H2 = W2 = 4                # spatial after block-2 depthwise (stride 2)
R1 = BATCH * H1 * W1       # 128 rows (lane axis) for 8x8 feature maps
R2 = BATCH * H2 * W2       # 32 rows for 4x4 feature maps
HW1 = H1 * W1              # 64
HW2 = H2 * W2              # 16

PARAM_COLS = 128

# ---------------------------------------------------------------------------
# Parameter slab layout (single f32 slab, each entry at a static 8-aligned row)
# ---------------------------------------------------------------------------
_PARAM_LAYOUT = (
    ("stem_w_T",  C0, 9),      ("stem_bn", C0, 2),
    ("b1_dw",     C0, 9),      ("b1_bn1",  C0, 2),
    ("b1_se_w1T", SE1, C0),    ("b1_se_b1", SE1, 1),
    ("b1_se_w2T", C0, SE1),    ("b1_se_b2", C0, 1),
    ("b1_projT",  C1, C0),     ("b1_bn2",  C1, 2),
    ("b2_expT",   CEXP, C1),   ("b2_bn0",  CEXP, 2),
    ("b2_dw",     CEXP, 9),    ("b2_bn1",  CEXP, 2),
    ("b2_se_w1T", SE2, CEXP),  ("b2_se_b1", SE2, 1),
    ("b2_se_w2T", CEXP, SE2),  ("b2_se_b2", CEXP, 1),
    ("b2_projT",  C2, CEXP),   ("b2_bn2",  C2, 2),
    ("head_wT",   CHEAD, C2),  ("head_bn", CHEAD, 2),
    ("fc_w",      CHEAD, NCLS),("fc_b",    1, NCLS),
    ("m1_br",     BATCH, R1),  ("m2_br",   BATCH, R2),
    ("dense_w",   BATCH * NCLS, OUT_SIZE), ("dense_b", 1, OUT_SIZE),
)


def _compute_offsets():
    offs, r = {}, 0
    for name, nr, nc in _PARAM_LAYOUT:
        offs[name] = (r, nr, nc)
        r += ((nr + 7) // 8) * 8            # keep every entry sublane-(8)-aligned
    return offs, r


_PARAM_OFFS, PARAM_ROWS = _compute_offsets()


# ---------------------------------------------------------------------------
# The single fused kernel
# ---------------------------------------------------------------------------
def _fused_enet_kernel(colsT_ref, sel1_ref, sel2_ref, prm_ref, out_ref):
    f32 = jnp.float32

    def param(name):
        r0, nr, nc = _PARAM_OFFS[name]      # static Python ints -> zero-cost ref slices
        return prm_ref[r0:r0 + nr, 0:nc]

    def bn(x, name, swish):
        # Train-mode BatchNorm over all N*H*W rows (lane axis); XLU lane reductions.
        p = param(name)
        gamma, beta = p[:, 0:1], p[:, 1:2]
        inv_n = 1.0 / x.shape[1]
        mean = jnp.sum(x, axis=1, keepdims=True) * inv_n
        var = jnp.sum(x * x, axis=1, keepdims=True) * inv_n - mean * mean
        var = jnp.maximum(var, 0.0)          # guard one-pass f32 cancellation
        y = (x - mean) * jax.lax.rsqrt(var + EPS) * gamma + beta
        if swish:
            y = y * jax.nn.sigmoid(y)
        return y

    def dwconv(x, wname, sel_ref):
        # Depthwise 3x3 conv as ONE fused matmul: LHS = 9 weight-scaled copies of x
        # concatenated along K (lanes), RHS = host-precomputed 0/1 select slab.
        w_ck = param(wname)                                        # (C, 9)
        xb = jnp.concatenate([x * w_ck[:, k:k + 1] for k in range(9)],
                             axis=1).astype(jnp.bfloat16)          # (C, 9*R_in)
        return jnp.dot(xb, sel_ref[...], preferred_element_type=f32)   # (C, R_out) f32

    def se(x, w1, b1, w2, b2, mname, hw):
        # Squeeze-and-Excite in (channels, rows) layout via tiny constant matmuls.
        m_br = param(mname)                                        # (B, R) one-hot rows
        s = jax.lax.dot_general(x, m_br, (((1,), (1,)), ((), ())),
                                preferred_element_type=f32) * (1.0 / hw)   # (C, B) pool
        s = jnp.dot(param(w1), s, preferred_element_type=f32) + param(b1)  # (SE, B)
        s = s * jax.nn.sigmoid(s)                                  # swish
        s = jnp.dot(param(w2), s, preferred_element_type=f32) + param(b2)  # (C, B)
        s = jax.nn.sigmoid(s)
        return x * jnp.dot(s, m_br, preferred_element_type=f32)    # per-batch scale (C, R)

    # ---- stem: 3x3 s2 conv (bias=False) + BN + swish
    x = jnp.dot(param("stem_w_T"), colsT_ref[...], preferred_element_type=f32)  # (C0, R1)
    x = bn(x, "stem_bn", True)

    # ---- MBConv block 1 (expand_ratio=1, stride=1, id_skip)
    identity = x
    h = dwconv(x, "b1_dw", sel1_ref)                               # (C0, R1)
    h = bn(h, "b1_bn1", True)
    h = se(h, "b1_se_w1T", "b1_se_b1", "b1_se_w2T", "b1_se_b2", "m1_br", HW1)
    h = jnp.dot(param("b1_projT"), h, preferred_element_type=f32)  # (C1, R1)
    h = bn(h, "b1_bn2", False)
    x = h + identity
    # TODO(synk): drop_connect (stochastic depth) omitted — rate is 0 for block idx 0.

    # ---- MBConv block 2 (expand_ratio=4, stride=2, no skip)
    h = jnp.dot(param("b2_expT"), x, preferred_element_type=f32)   # (CEXP, R1)
    h = bn(h, "b2_bn0", True)
    h = dwconv(h, "b2_dw", sel2_ref)                               # (CEXP, R2)
    h = bn(h, "b2_bn1", True)
    h = se(h, "b2_se_w1T", "b2_se_b1", "b2_se_w2T", "b2_se_b2", "m2_br", HW2)
    h = jnp.dot(param("b2_projT"), h, preferred_element_type=f32)  # (C2, R2)
    h = bn(h, "b2_bn2", False)

    # ---- head 1x1 conv + BN + swish, global average pool
    h = jnp.dot(param("head_wT"), h, preferred_element_type=f32)   # (CHEAD, R2)
    h = bn(h, "head_bn", True)
    feat = jax.lax.dot_general(param("m2_br"), h, (((1,), (1,)), ((), ())),
                               preferred_element_type=f32) * (1.0 / HW2)   # (B, CHEAD)

    # TODO(synk): training-mode Dropout before the classifier fc omitted (stochastic).
    logits = jnp.dot(feat, param("fc_w"), preferred_element_type=f32) + param("fc_b")  # (B, NCLS)

    # ---- extractor: dense(efficientnet(img).flatten())
    # Row-major flatten of (B, NCLS) via a lane-axis concat -> single K = B*NCLS matmul.
    flat = jnp.concatenate([logits[b:b + 1, :] for b in range(BATCH)], axis=1)  # (1, B*NCLS)
    out_ref[...] = (jnp.dot(flat, param("dense_w"), preferred_element_type=f32)
                    + param("dense_b"))                            # lane-dense (1, 128)


# ---------------------------------------------------------------------------
# Host-side constant tables and stem im2col (input image only)
# ---------------------------------------------------------------------------
def _stem_im2col_T(img_nchw):
    # (B, 1, 16, 16) NCHW -> transposed im2col (9, B*8*8) for the 3x3 stride-2 "same" conv.
    x = img_nchw[:, 0, :, :].astype(jnp.float32)                   # (B, 16, 16)
    xp = jnp.pad(x, ((0, 0), (0, 1), (0, 1)))                      # TF-"same": pad (0, 1)
    taps = [xp[:, i:i + 2 * H1:2, j:j + 2 * W1:2] for i in range(3) for j in range(3)]
    return jnp.stack(taps, axis=0).reshape(9, R1)                  # (9, R1) lane-dense


def _dw_select(batch, h, w, stride):
    # Host-precomputed fused 0/1 select slab for the depthwise conv:
    # S[k*r_in + src_row, out_row] = 1 iff src_row feeds out_row under tap k (TF-"same" pad).
    oh, ow = -(-h // stride), -(-w // stride)
    ph = max((oh - 1) * stride + 3 - h, 0)
    pw = max((ow - 1) * stride + 3 - w, 0)
    pt, pleft = ph // 2, pw // 2
    r_in, r_out = batch * h * w, batch * oh * ow
    S = np.zeros((9 * r_in, r_out), np.float32)
    for k in range(9):
        di, dj = k // 3, k % 3
        for b in range(batch):
            for y in range(oh):
                for xx in range(ow):
                    hs = y * stride + di - pt
                    ws = xx * stride + dj - pleft
                    if 0 <= hs < h and 0 <= ws < w:
                        S[k * r_in + (b * h + hs) * w + ws, (b * oh + y) * ow + xx] = 1.0
    return jnp.asarray(S, dtype=jnp.bfloat16)      # 0/1 exact in bf16; MXU-friendly


def _batch_onehot(batch, hw):
    # (B, B*hw) row->batch one-hot; used for SE pooling (scaled by 1/hw in-kernel),
    # SE per-batch broadcast, and the head global pool.
    m = np.zeros((batch, batch * hw), np.float32)
    for b in range(batch):
        m[b, b * hw:(b + 1) * hw] = 1.0
    return m


# ---------------------------------------------------------------------------
# Parameters (deterministic synthetic init) and slab packing
# ---------------------------------------------------------------------------
def init_params(key):
    cnt = [0]

    def w(shape, scale=0.1):
        cnt[0] += 1
        return np.asarray(scale * jax.random.normal(jax.random.fold_in(key, cnt[0]), shape),
                          np.float32)

    def bnp(c):                                  # (C, 2): gamma=1 (col 0), beta=0 (col 1)
        z = np.zeros((c, 2), np.float32)
        z[:, 0] = 1.0
        return z

    zeros = lambda s: np.zeros(s, np.float32)

    d = {}
    # stem: 3x3 s2 conv 1 -> C0 (bias=False) + BN          -- weights stored (C_out, C_in*9)
    d["stem_w_T"] = w((C0, 9));      d["stem_bn"] = bnp(C0)
    # MBConv block 1: expand_ratio=1, stride=1, C0 -> C1, SE squeeze 2
    d["b1_dw"] = w((C0, 9));         d["b1_bn1"] = bnp(C0)
    d["b1_se_w1T"] = w((SE1, C0));   d["b1_se_b1"] = zeros((SE1, 1))
    d["b1_se_w2T"] = w((C0, SE1));   d["b1_se_b2"] = zeros((C0, 1))
    d["b1_projT"] = w((C1, C0));     d["b1_bn2"] = bnp(C1)
    # MBConv block 2: expand_ratio=4, stride=2, C1 -> C2, SE squeeze 2
    d["b2_expT"] = w((CEXP, C1));    d["b2_bn0"] = bnp(CEXP)
    d["b2_dw"] = w((CEXP, 9));       d["b2_bn1"] = bnp(CEXP)
    d["b2_se_w1T"] = w((SE2, CEXP)); d["b2_se_b1"] = zeros((SE2, 1))
    d["b2_se_w2T"] = w((CEXP, SE2)); d["b2_se_b2"] = zeros((CEXP, 1))
    d["b2_projT"] = w((C2, CEXP));   d["b2_bn2"] = bnp(C2)
    # head 1x1 conv (bias=False) + BN, classifier fc
    d["head_wT"] = w((CHEAD, C2));   d["head_bn"] = bnp(CHEAD)
    d["fc_w"] = w((CHEAD, NCLS));    d["fc_b"] = zeros((1, NCLS))
    # pooling / per-batch broadcast one-hots
    d["m1_br"] = _batch_onehot(BATCH, HW1)
    d["m2_br"] = _batch_onehot(BATCH, HW2)
    # extractor dense: Linear(B*NCLS -> OUT_SIZE)
    kw, kb = jax.random.split(jax.random.fold_in(key, 1000))
    d["dense_w"] = np.asarray(0.1 * jax.random.normal(kw, (BATCH * NCLS, OUT_SIZE)), np.float32)
    d["dense_b"] = np.asarray(0.01 * jax.random.normal(kb, (1, OUT_SIZE)), np.float32)
    return d


def pack_param_slab(d):
    slab = np.zeros((PARAM_ROWS, PARAM_COLS), np.float32)
    for name, nr, nc in _PARAM_LAYOUT:
        r0 = _PARAM_OFFS[name][0]
        slab[r0:r0 + nr, :nc] = np.asarray(d[name], np.float32).reshape(nr, nc)
    return jnp.asarray(slab)


# ---------------------------------------------------------------------------
# Forward pass: dense(efficientnet(img).flatten()) -- one pallas_call, 4 input DMAs
# ---------------------------------------------------------------------------
def efficientnet_extractor_forward(img_nchw, prm_slab, sel1, sel2):
    colsT = _stem_im2col_T(img_nchw)
    out = pl.pallas_call(
        _fused_enet_kernel,
        out_shape=jax.ShapeDtypeStruct((1, OUT_SIZE), jnp.float32),
        in_specs=[pl.BlockSpec(memory_space=pltpu.MemorySpace.VMEM)] * 4,
        out_specs=pl.BlockSpec(memory_space=pltpu.MemorySpace.VMEM),
    )(colsT, sel1, sel2, prm_slab)
    return out.reshape(-1)                                         # (OUT_SIZE,)


if __name__ == "__main__":
    key = jax.random.PRNGKey(0)
    params = init_params(jax.random.fold_in(key, 7))
    prm_slab = pack_param_slab(params)                             # (608, 128) f32
    sel1 = _dw_select(BATCH, H1, W1, stride=1)                     # (1152, 128) bf16
    sel2 = _dw_select(BATCH, H1, W1, stride=2)                     # (1152, 32)  bf16

    img = jax.random.normal(jax.random.fold_in(key, 99),
                            (BATCH, 1, H_IN, W_IN), jnp.float32)

    fwd = jax.jit(efficientnet_extractor_forward)
    out = jax.block_until_ready(fwd(img, prm_slab, sel1, sel2))
    assert out.shape == (OUT_SIZE,) and out.dtype == jnp.float32
    assert bool(jnp.all(jnp.isfinite(out)))
    print("KERNEL_OK")
</pallas_src>

<mosaic_0001>
module attributes {stable_mosaic.version = 11 : i64} {
  func.func @_fused_enet_kernel(%arg0: memref<9x128xf32, #tpu.memory_space<vmem>>, %arg1: memref<1152x128xbf16, #tpu.memory_space<vmem>>, %arg2: memref<1152x32xbf16, #tpu.memory_space<vmem>>, %arg3: memref<608x128xf32, #tpu.memory_space<vmem>>, %arg4: memref<1x128xf32, #tpu.memory_space<vmem>>) attributes {dimension_semantics = [], scalar_prefetch = 0 : i64, scratch_operands = 0 : i64, tpu.core_type = #tpu.core_type<tc>} {
    %c0 = arith.constant 0 : index
    %c0_0 = arith.constant 0 : index
    %0 = vector.load %arg3[%c0, %c0_0] : memref<608x128xf32, #tpu.memory_space<vmem>>, vector<8x9xf32>
    %c0_1 = arith.constant 0 : index
    %c0_2 = arith.constant 0 : index
    %1 = vector.load %arg0[%c0_1, %c0_2] : memref<9x128xf32, #tpu.memory_space<vmem>>, vector<9x128xf32>
    %cst = arith.constant dense<0.000000e+00> : vector<8x128xf32>
    %2 = tpu.matmul %0, %1, %cst {dimension_numbers = #tpu.dot_dimension_numbers<[1], [0], [0], [1], [0, 0, 1, 1], [], []>} : vector<8x9xf32>, vector<9x128xf32>, vector<8x128xf32> -> vector<8x128xf32>
    %c8 = arith.constant 8 : index
    %c0_3 = arith.constant 0 : index
    %3 = vector.load %arg3[%c8, %c0_3] : memref<608x128xf32, #tpu.memory_space<vmem>>, vector<8x2xf32>
    %4 = vector.extract_strided_slice %3 {offsets = [0, 0], sizes = [8, 1], strides = [1, 1]} : vector<8x2xf32> to vector<8x1xf32>
    %5 = vector.extract_strided_slice %3 {offsets = [0, 1], sizes = [8, 1], strides = [1, 1]} : vector<8x2xf32> to vector<8x1xf32>
    %cst_4 = arith.constant dense<0.000000e+00> : vector<8xf32>
    %6 = vector.multi_reduction <add>, %2, %cst_4 [1] : vector<8x128xf32> to vector<8xf32>
    %7 = vector.shape_cast %6 : vector<8xf32> to vector<8x1xf32>
    %cst_5 = arith.constant 7.812500e-03 : f32
    %8 = vector.broadcast %cst_5 : f32 to vector<8x1xf32>
    %9 = arith.mulf %7, %8 : vector<8x1xf32>
    %10 = arith.mulf %2, %2 : vector<8x128xf32>
    %cst_6 = arith.constant dense<0.000000e+00> : vector<8xf32>
    %11 = vector.multi_reduction <add>, %10, %cst_6 [1] : vector<8x128xf32> to vector<8xf32>
    %12 = vector.shape_cast %11 : vector<8xf32> to vector<8x1xf32>
    %cst_7 = arith.constant 7.812500e-03 : f32
    %13 = vector.broadcast %cst_7 : f32 to vector<8x1xf32>
    %14 = arith.mulf %12, %13 : vector<8x1xf32>
    %15 = arith.mulf %9, %9 : vector<8x1xf32>
    %16 = arith.subf %14, %15 : vector<8x1xf32>
    %cst_8 = arith.constant 0.000000e+00 : f32
    %17 = vector.broadcast %cst_8 : f32 to vector<8x1xf32>
    %18 = arith.maximumf %16, %17 : vector<8x1xf32>
    %19 = vector.broadcast %9 : vector<8x1xf32> to vector<8x128xf32>
    %20 = arith.subf %2, %19 : vector<8x128xf32>
    %cst_9 = arith.constant 1.000000e-03 : f32
    %21 = vector.broadcast %cst_9 : f32 to vector<8x1xf32>
    %22 = arith.addf %18, %21 : vector<8x1xf32>
    %23 = math.rsqrt %22 : vector<8x1xf32>
    %24 = vector.broadcast %23 : vector<8x1xf32> to vector<8x128xf32>
    %25 = arith.mulf %20, %24 : vector<8x128xf32>
    %26 = vector.broadcast %4 : vector<8x1xf32> to vector<8x128xf32>
    %27 = arith.mulf %25, %26 : vector<8x128xf32>
    %28 = vector.broadcast %5 : vector<8x1xf32> to vector<8x128xf32>
    %29 = arith.addf %27, %28 : vector<8x128xf32>
    %30 = arith.negf %29 : vector<8x128xf32>
    %31 = math.exp %30 : vector<8x128xf32>
    %cst_10 = arith.constant 1.000000e+00 : f32
    %32 = vector.broadcast %cst_10 : f32 to vector<8x128xf32>
    %33 = arith.addf %32, %31 : vector<8x128xf32>
    %34 = arith.divf %32, %33 : vector<8x128xf32>
    %35 = arith.mulf %29, %34 : vector<8x128xf32>
    %c16 = arith.constant 16 : index
    %c0_11 = arith.constant 0 : index
    %36 = vector.load %arg3[%c16, %c0_11] : memref<608x128xf32, #tpu.memory_space<vmem>>, vector<8x9xf32>
    %37 = vector.extract_strided_slice %36 {offsets = [0, 0], sizes = [8, 1], strides = [1, 1]} : vector<8x9xf32> to vector<8x1xf32>
    %38 = vector.broadcast %37 : vector<8x1xf32> to vector<8x128xf32>
    %39 = arith.mulf %35, %38 : vector<8x128xf32>
    %40 = vector.extract_strided_slice %36 {offsets = [0, 1], sizes = [8, 1], strides = [1, 1]} : vector<8x9xf32> to vector<8x1xf32>
    %41 = vector.broadcast %40 : vector<8x1xf32> to vector<8x128xf32>
    %42 = arith.mulf %35, %41 : vector<8x128xf32>
    %43 = vector.extract_strided_slice %36 {offsets = [0, 2], sizes = [8, 1], strides = [1, 1]} : vector<8x9xf32> to vector<8x1xf32>
    %44 = vector.broadcast %43 : vector<8x1xf32> to vector<8x128xf32>
    %45 = arith.mulf %35, %44 : vector<8x128xf32>
    %46 = vector.extract_strided_slice %36 {offsets = [0, 3], sizes = [8, 1], strides = [1, 1]} : vector<8x9xf32> to vector<8x1xf32>
    %47 = vector.broadcast %46 : vector<8x1xf32> to vector<8x128xf32>
    %48 = arith.mulf %35, %47 : vector<8x128xf32>
    %49 = vector.extract_strided_slice %36 {offsets = [0, 4], sizes = [8, 1], strides = [1, 1]} : vector<8x9xf32> to vector<8x1xf32>
    %50 = vector.broadcast %49 : vector<8x1xf32> to vector<8x128xf32>
    %51 = arith.mulf %35, %50 : vector<8x128xf32>
    %52 = vector.extract_strided_slice %36 {offsets = [0, 5], sizes = [8, 1], strides = [1, 1]} : vector<8x9xf32> to vector<8x1xf32>
    %53 = vector.broadcast %52 : vector<8x1xf32> to vector<8x128xf32>
    %54 = arith.mulf %35, %53 : vector<8x128xf32>
    %55 = vector.extract_strided_slice %36 {offsets = [0, 6], sizes = [8, 1], strides = [1, 1]} : vector<8x9xf32> to vector<8x1xf32>
    %56 = vector.broadcast %55 : vector<8x1xf32> to vector<8x128xf32>
    %57 = arith.mulf %35, %56 : vector<8x128xf32>
    %58 = vector.extract_strided_slice %36 {offsets = [0, 7], sizes = [8, 1], strides = [1, 1]} : vector<8x9xf32> to vector<8x1xf32>
    %59 = vector.broadcast %58 : vector<8x1xf32> to vector<8x128xf32>
    %60 = arith.mulf %35, %59 : vector<8x128xf32>
    %61 = vector.extract_strided_slice %36 {offsets = [0, 8], sizes = [8, 1], strides = [1, 1]} : vector<8x9xf32> to vector<8x1xf32>
    %62 = vector.broadcast %61 : vector<8x1xf32> to vector<8x128xf32>
    %63 = arith.mulf %35, %62 : vector<8x128xf32>
    %64 = tpu.concatenate %39, %42, %45, %48, %51, %54, %57, %60, %63 in 1 : vector<8x128xf32>, vector<8x128xf32>, vector<8x128xf32>, vector<8x128xf32>, vector<8x128xf32>, vector<8x128xf32>, vector<8x128xf32>, vector<8x128xf32>, vector<8x128xf32> -> vector<8x1152xf32>
    %65 = arith.truncf %64 : vector<8x1152xf32> to vector<8x1152xbf16>
    %c0_12 = arith.constant 0 : index
    %c0_13 = arith.constant 0 : index
    %66 = vector.load %arg1[%c0_12, %c0_13] : memref<1152x128xbf16, #tpu.memory_space<vmem>>, vector<1152x128xbf16>
    %cst_14 = arith.constant dense<0.000000e+00> : vector<8x128xf32>
    %67 = tpu.matmul %65, %66, %cst_14 {dimension_numbers = #tpu.dot_dimension_numbers<[1], [0], [0], [1], [0, 0, 1, 1], [], []>} : vector<8x1152xbf16>, vector<1152x128xbf16>, vector<8x128xf32> -> vector<8x128xf32>
    %c24 = arith.constant 24 : index
    %c0_15 = arith.constant 0 : index
    %68 = vector.load %arg3[%c24, %c0_15] : memref<608x128xf32, #tpu.memory_space<vmem>>, vector<8x2xf32>
    %69 = vector.extract_strided_slice %68 {offsets = [0, 0], sizes = [8, 1], strides = [1, 1]} : vector<8x2xf32> to vector<8x1xf32>
    %70 = vector.extract_strided_slice %68 {offsets = [0, 1], sizes = [8, 1], strides = [1, 1]} : vector<8x2xf32> to vector<8x1xf32>
    %cst_16 = arith.constant dense<0.000000e+00> : vector<8xf32>
    %71 = vector.multi_reduction <add>, %67, %cst_16 [1] : vector<8x128xf32> to vector<8xf32>
    %72 = vector.shape_cast %71 : vector<8xf32> to vector<8x1xf32>
    %cst_17 = arith.constant 7.812500e-03 : f32
    %73 = vector.broadcast %cst_17 : f32 to vector<8x1xf32>
    %74 = arith.mulf %72, %73 : vector<8x1xf32>
    %75 = arith.mulf %67, %67 : vector<8x128xf32>
    %cst_18 = arith.constant dense<0.000000e+00> : vector<8xf32>
    %76 = vector.multi_reduction <add>, %75, %cst_18 [1] : vector<8x128xf32> to vector<8xf32>
    %77 = vector.shape_cast %76 : vector<8xf32> to vector<8x1xf32>
    %cst_19 = arith.constant 7.812500e-03 : f32
    %78 = vector.broadcast %cst_19 : f32 to vector<8x1xf32>
    %79 = arith.mulf %77, %78 : vector<8x1xf32>
    %80 = arith.mulf %74, %74 : vector<8x1xf32>
    %81 = arith.subf %79, %80 : vector<8x1xf32>
    %cst_20 = arith.constant 0.000000e+00 : f32
    %82 = vector.broadcast %cst_20 : f32 to vector<8x1xf32>
    %83 = arith.maximumf %81, %82 : vector<8x1xf32>
    %84 = vector.broadcast %74 : vector<8x1xf32> to vector<8x128xf32>
    %85 = arith.subf %67, %84 : vector<8x128xf32>
    %cst_21 = arith.constant 1.000000e-03 : f32
    %86 = vector.broadcast %cst_21 : f32 to vector<8x1xf32>
    %87 = arith.addf %83, %86 : vector<8x1xf32>
    %88 = math.rsqrt %87 : vector<8x1xf32>
    %89 = vector.broadcast %88 : vector<8x1xf32> to vector<8x128xf32>
    %90 = arith.mulf %85, %89 : vector<8x128xf32>
    %91 = vector.broadcast %69 : vector<8x1xf32> to vector<8x128xf32>
    %92 = arith.mulf %90, %91 : vector<8x128xf32>
    %93 = vector.broadcast %70 : vector<8x1xf32> to vector<8x128xf32>
    %94 = arith.addf %92, %93 : vector<8x128xf32>
    %95 = arith.negf %94 : vector<8x128xf32>
    %96 = math.exp %95 : vector<8x128xf32>
    %cst_22 = arith.constant 1.000000e+00 : f32
    %97 = vector.broadcast %cst_22 : f32 to vector<8x128xf32>
    %98 = arith.addf %97, %96 : vector<8x128xf32>
    %99 = arith.divf %97, %98 : vector<8x128xf32>
    %100 = arith.mulf %94, %99 : vector<8x128xf32>
    %c520 = arith.constant 520 : index
    %c0_23 = arith.constant 0 : index
    %101 = vector.load %arg3[%c520, %c0_23] : memref<608x128xf32, #tpu.memory_space<vmem>>, vector<2x128xf32>
    %cst_24 = arith.constant dense<0.000000e+00> : vector<8x2xf32>
    %102 = tpu.matmul %100, %101, %cst_24 {dimension_numbers = #tpu.dot_dimension_numbers<[1], [1], [0], [0], [0, 0, 1, 0], [], []>} : vector<8x128xf32>, vector<2x128xf32>, vector<8x2xf32> -> vector<8x2xf32>
    %cst_25 = arith.constant 1.562500e-02 : f32
    %103 = vector.broadcast %cst_25 : f32 to vector<8x2xf32>
    %104 = arith.mulf %102, %103 : vector<8x2xf32>
    %c32 = arith.constant 32 : index
    %c0_26 = arith.constant 0 : index
    %105 = vector.load %arg3[%c32, %c0_26] : memref<608x128xf32, #tpu.memory_space<vmem>>, vector<2x8xf32>
    %cst_27 = arith.constant dense<0.000000e+00> : vector<2x2xf32>
    %106 = tpu.matmul %105, %104, %cst_27 {dimension_numbers = #tpu.dot_dimension_numbers<[1], [0], [0], [1], [0, 0, 1, 1], [], []>} : vector<2x8xf32>, vector<8x2xf32>, vector<2x2xf32> -> vector<2x2xf32>
    %c40 = arith.constant 40 : index
    %c0_28 = arith.constant 0 : index
    %107 = vector.load %arg3[%c40, %c0_28] : memref<608x128xf32, #tpu.memory_space<vmem>>, vector<2x1xf32>
    %108 = vector.broadcast %107 : vector<2x1xf32> to vector<2x2xf32>
    %109 = arith.addf %106, %108 : vector<2x2xf32>
    %110 = arith.negf %109 : vector<2x2xf32>
    %111 = math.exp %110 : vector<2x2xf32>
    %cst_29 = arith.constant 1.000000e+00 : f32
    %112 = vector.broadcast %cst_29 : f32 to vector<2x2xf32>
    %113 = arith.addf %112, %111 : vector<2x2xf32>
    %114 = arith.divf %112, %113 : vector<2x2xf32>
    %115 = arith.mulf %109, %114 : vector<2x2xf32>
    %c48 = arith.constant 48 : index
    %c0_30 = arith.constant 0 : index
    %116 = vector.load %arg3[%c48, %c0_30] : memref<608x128xf32, #tpu.memory_space<vmem>>, vector<8x2xf32>
    %cst_31 = arith.constant dense<0.000000e+00> : vector<8x2xf32>
    %117 = tpu.matmul %116, %115, %cst_31 {dimension_numbers = #tpu.dot_dimension_numbers<[1], [0], [0], [1], [0, 0, 1, 1], [], []>} : vector<8x2xf32>, vector<2x2xf32>, vector<8x2xf32> -> vector<8x2xf32>
    %c56 = arith.constant 56 : index
    %c0_32 = arith.constant 0 : index
    %118 = vector.load %arg3[%c56, %c0_32] : memref<608x128xf32, #tpu.memory_space<vmem>>, vector<8x1xf32>
    %119 = vector.broadcast %118 : vector<8x1xf32> to vector<8x2xf32>
    %120 = arith.addf %117, %119 : vector<8x2xf32>
    %121 = arith.negf %120 : vector<8x2xf32>
    %122 = math.exp %121 : vector<8x2xf32>
    %cst_33 = arith.constant 1.000000e+00 : f32
    %123 = vector.broadcast %cst_33 : f32 to vector<8x2xf32>
    %124 = arith.addf %123, %122 : vector<8x2xf32>
    %125 = arith.divf %123, %124 : vector<8x2xf32>
    %cst_34 = arith.constant dense<0.000000e+00> : vector<8x128xf32>
    %126 = tpu.matmul %125, %101, %cst_34 {dimension_numbers = #tpu.dot_dimension_numbers<[1], [0], [0], [1], [0, 0, 1, 1], [], []>} : vector<8x2xf32>, vector<2x128xf32>, vector<8x128xf32> -> vector<8x128xf32>
    %127 = arith.mulf %100, %126 : vector<8x128xf32>
    %c64 = arith.constant 64 : index
    %c0_35 = arith.constant 0 : index
    %128 = vector.load %arg3[%c64, %c0_35] : memref<608x128xf32, #tpu.memory_space<vmem>>, vector<8x8xf32>
    %cst_36 = arith.constant dense<0.000000e+00> : vector<8x128xf32>
    %129 = tpu.matmul %128, %127, %cst_36 {dimension_numbers = #tpu.dot_dimension_numbers<[1], [0], [0], [1], [0, 0, 1, 1], [], []>} : vector<8x8xf32>, vector<8x128xf32>, vector<8x128xf32> -> vector<8x128xf32>
    %c72 = arith.constant 72 : index
    %c0_37 = arith.constant 0 : index
    %130 = vector.load %arg3[%c72, %c0_37] : memref<608x128xf32, #tpu.memory_space<vmem>>, vector<8x2xf32>
    %131 = vector.extract_strided_slice %130 {offsets = [0, 0], sizes = [8, 1], strides = [1, 1]} : vector<8x2xf32> to vector<8x1xf32>
    %132 = vector.extract_strided_slice %130 {offsets = [0, 1], sizes = [8, 1], strides = [1, 1]} : vector<8x2xf32> to vector<8x1xf32>
    %cst_38 = arith.constant dense<0.000000e+00> : vector<8xf32>
    %133 = vector.multi_reduction <add>, %129, %cst_38 [1] : vector<8x128xf32> to vector<8xf32>
    %134 = vector.shape_cast %133 : vector<8xf32> to vector<8x1xf32>
    %cst_39 = arith.constant 7.812500e-03 : f32
    %135 = vector.broadcast %cst_39 : f32 to vector<8x1xf32>
    %136 = arith.mulf %134, %135 : vector<8x1xf32>
    %137 = arith.mulf %129, %129 : vector<8x128xf32>
    %cst_40 = arith.constant dense<0.000000e+00> : vector<8xf32>
    %138 = vector.multi_reduction <add>, %137, %cst_40 [1] : vector<8x128xf32> to vector<8xf32>
    %139 = vector.shape_cast %138 : vector<8xf32> to vector<8x1xf32>
    %cst_41 = arith.constant 7.812500e-03 : f32
    %140 = vector.broadcast %cst_41 : f32 to vector<8x1xf32>
    %141 = arith.mulf %139, %140 : vector<8x1xf32>
    %142 = arith.mulf %136, %136 : vector<8x1xf32>
    %143 = arith.subf %141, %142 : vector<8x1xf32>
    %cst_42 = arith.constant 0.000000e+00 : f32
    %144 = vector.broadcast %cst_42 : f32 to vector<8x1xf32>
    %145 = arith.maximumf %143, %144 : vector<8x1xf32>
    %146 = vector.broadcast %136 : vector<8x1xf32> to vector<8x128xf32>
    %147 = arith.subf %129, %146 : vector<8x128xf32>
    %cst_43 = arith.constant 1.000000e-03 : f32
    %148 = vector.broadcast %cst_43 : f32 to vector<8x1xf32>
    %149 = arith.addf %145, %148 : vector<8x1xf32>
    %150 = math.rsqrt %149 : vector<8x1xf32>
    %151 = vector.broadcast %150 : vector<8x1xf32> to vector<8x128xf32>
    %152 = arith.mulf %147, %151 : vector<8x128xf32>
    %153 = vector.broadcast %131 : vector<8x1xf32> to vector<8x128xf32>
    %154 = arith.mulf %152, %153 : vector<8x128xf32>
    %155 = vector.broadcast %132 : vector<8x1xf32> to vector<8x128xf32>
    %156 = arith.addf %154, %155 : vector<8x128xf32>
    %157 = arith.addf %156, %35 : vector<8x128xf32>
    %c80 = arith.constant 80 : index
    %c0_44 = arith.constant 0 : index
    %158 = vector.load %arg3[%c80, %c0_44] : memref<608x128xf32, #tpu.memory_space<vmem>>, vector<32x8xf32>
    %cst_45 = arith.constant dense<0.000000e+00> : vector<32x128xf32>
    %159 = tpu.matmul %158, %157, %cst_45 {dimension_numbers = #tpu.dot_dimension_numbers<[1], [0], [0], [1], [0, 0, 1, 1], [], []>} : vector<32x8xf32>, vector<8x128xf32>, vector<32x128xf32> -> vector<32x128xf32>
    %c112 = arith.constant 112 : index
    %c0_46 = arith.constant 0 : index
    %160 = vector.load %arg3[%c112, %c0_46] : memref<608x128xf32, #tpu.memory_space<vmem>>, vector<32x2xf32>
    %161 = vector.extract_strided_slice %160 {offsets = [0, 0], sizes = [32, 1], strides = [1, 1]} : vector<32x2xf32> to vector<32x1xf32>
    %162 = vector.extract_strided_slice %160 {offsets = [0, 1], sizes = [32, 1], strides = [1, 1]} : vector<32x2xf32> to vector<32x1xf32>
    %cst_47 = arith.constant dense<0.000000e+00> : vector<32xf32>
    %163 = vector.multi_reduction <add>, %159, %cst_47 [1] : vector<32x128xf32> to vector<32xf32>
    %164 = vector.shape_cast %163 : vector<32xf32> to vector<32x1xf32>
    %cst_48 = arith.constant 7.812500e-03 : f32
    %165 = vector.broadcast %cst_48 : f32 to vector<32x1xf32>
    %166 = arith.mulf %164, %165 : vector<32x1xf32>
    %167 = arith.mulf %159, %159 : vector<32x128xf32>
    %cst_49 = arith.constant dense<0.000000e+00> : vector<32xf32>
    %168 = vector.multi_reduction <add>, %167, %cst_49 [1] : vector<32x128xf32> to vector<32xf32>
    %169 = vector.shape_cast %168 : vector<32xf32> to vector<32x1xf32>
    %cst_50 = arith.constant 7.812500e-03 : f32
    %170 = vector.broadcast %cst_50 : f32 to vector<32x1xf32>
    %171 = arith.mulf %169, %170 : vector<32x1xf32>
    %172 = arith.mulf %166, %166 : vector<32x1xf32>
    %173 = arith.subf %171, %172 : vector<32x1xf32>
    %cst_51 = arith.constant 0.000000e+00 : f32
    %174 = vector.broadcast %cst_51 : f32 to vector<32x1xf32>
    %175 = arith.maximumf %173, %174 : vector<32x1xf32>
    %176 = vector.broadcast %166 : vector<32x1xf32> to vector<32x128xf32>
    %177 = arith.subf %159, %176 : vector<32x128xf32>
    %cst_52 = arith.constant 1.000000e-03 : f32
    %178 = vector.broadcast %cst_52 : f32 to vector<32x1xf32>
    %179 = arith.addf %175, %178 : vector<32x1xf32>
    %180 = math.rsqrt %179 : vector<32x1xf32>
    %181 = vector.broadcast %180 : vector<32x1xf32> to vector<32x128xf32>
    %182 = arith.mulf %177, %181 : vector<32x128xf32>
    %183 = vector.broadcast %161 : vector<32x1xf32> to vector<32x128xf32>
    %184 = arith.mulf %182, %183 : vector<32x128xf32>
    %185 = vector.broadcast %162 : vector<32x1xf32> to vector<32x128xf32>
    %186 = arith.addf %184, %185 : vector<32x128xf32>
    %187 = arith.negf %186 : vector<32x128xf32>
    %188 = math.exp %187 : vector<32x128xf32>
    %cst_53 = arith.constant 1.000000e+00 : f32
    %189 = vector.broadcast %cst_53 : f32 to vector<32x128xf32>
    %190 = arith.addf %189, %188 : vector<32x128xf32>
    %191 = arith.divf %189, %190 : vector<32x128xf32>
    %192 = arith.mulf %186, %191 : vector<32x128xf32>
    %c144 = arith.constant 144 : index
    %c0_54 = arith.constant 0 : index
    %193 = vector.load %arg3[%c144, %c0_54] : memref<608x128xf32, #tpu.memory_space<vmem>>, vector<32x9xf32>
    %194 = vector.extract_strided_slice %193 {offsets = [0, 0], sizes = [32, 1], strides = [1, 1]} : vector<32x9xf32> to vector<32x1xf32>
    %195 = vector.broadcast %194 : vector<32x1xf32> to vector<32x128xf32>
    %196 = arith.mulf %192, %195 : vector<32x128xf32>
    %197 = vector.extract_strided_slice %193 {offsets = [0, 1], sizes = [32, 1], strides = [1, 1]} : vector<32x9xf32> to vector<32x1xf32>
    %198 = vector.broadcast %197 : vector<32x1xf32> to vector<32x128xf32>
    %199 = arith.mulf %192, %198 : vector<32x128xf32>
    %200 = vector.extract_strided_slice %193 {offsets = [0, 2], sizes = [32, 1], strides = [1, 1]} : vector<32x9xf32> to vector<32x1xf32>
    %201 = vector.broadcast %200 : vector<32x1xf32> to vector<32x128xf32>
    %202 = arith.mulf %192, %201 : vector<32x128xf32>
    %203 = vector.extract_strided_slice %193 {offsets = [0, 3], sizes = [32, 1], strides = [1, 1]} : vector<32x9xf32> to vector<32x1xf32>
    %204 = vector.broadcast %203 : vector<32x1xf32> to vector<32x128xf32>
    %205 = arith.mulf %192, %204 : vector<32x128xf32>
    %206 = vector.extract_strided_slice %193 {offsets = [0, 4], sizes = [32, 1], strides = [1, 1]} : vector<32x9xf32> to vector<32x1xf32>
    %207 = vector.broadcast %206 : vector<32x1xf32> to vector<32x128xf32>
    %208 = arith.mulf %192, %207 : vector<32x128xf32>
    %209 = vector.extract_strided_slice %193 {offsets = [0, 5], sizes = [32, 1], strides = [1, 1]} : vector<32x9xf32> to vector<32x1xf32>
    %210 = vector.broadcast %209 : vector<32x1xf32> to vector<32x128xf32>
    %211 = arith.mulf %192, %210 : vector<32x128xf32>
    %212 = vector.extract_strided_slice %193 {offsets = [0, 6], sizes = [32, 1], strides = [1, 1]} : vector<32x9xf32> to vector<32x1xf32>
    %213 = vector.broadcast %212 : vector<32x1xf32> to vector<32x128xf32>
    %214 = arith.mulf %192, %213 : vector<32x128xf32>
    %215 = vector.extract_strided_slice %193 {offsets = [0, 7], sizes = [32, 1], strides = [1, 1]} : vector<32x9xf32> to vector<32x1xf32>
    %216 = vector.broadcast %215 : vector<32x1xf32> to vector<32x128xf32>
    %217 = arith.mulf %192, %216 : vector<32x128xf32>
    %218 = vector.extract_strided_slice %193 {offsets = [0, 8], sizes = [32, 1], strides = [1, 1]} : vector<32x9xf32> to vector<32x1xf32>
    %219 = vector.broadcast %218 : vector<32x1xf32> to vector<32x128xf32>
    %220 = arith.mulf %192, %219 : vector<32x128xf32>
    %221 = tpu.concatenate %196, %199, %202, %205, %208, %211, %214, %217, %220 in 1 : vector<32x128xf32>, vector<32x128xf32>, vector<32x128xf32>, vector<32x128xf32>, vector<32x128xf32>, vector<32x128xf32>, vector<32x128xf32>, vector<32x128xf32>, vector<32x128xf32> -> vector<32x1152xf32>
    %222 = arith.truncf %221 : vector<32x1152xf32> to vector<32x1152xbf16>
    %c0_55 = arith.constant 0 : index
    %c0_56 = arith.constant 0 : index
    %223 = vector.load %arg2[%c0_55, %c0_56] : memref<1152x32xbf16, #tpu.memory_space<vmem>>, vector<1152x32xbf16>
    %cst_57 = arith.constant dense<0.000000e+00> : vector<32x32xf32>
    %224 = tpu.matmul %222, %223, %cst_57 {dimension_numbers = #tpu.dot_dimension_numbers<[1], [0], [0], [1], [0, 0, 1, 1], [], []>} : vector<32x1152xbf16>, vector<1152x32xbf16>, vector<32x32xf32> -> vector<32x32xf32>
    %c176 = arith.constant 176 : index
    %c0_58 = arith.constant 0 : index
    %225 = vector.load %arg3[%c176, %c0_58] : memref<608x128xf32, #tpu.memory_space<vmem>>, vector<32x2xf32>
    %226 = vector.extract_strided_slice %225 {offsets = [0, 0], sizes = [32, 1], strides = [1, 1]} : vector<32x2xf32> to vector<32x1xf32>
    %227 = vector.extract_strided_slice %225 {offsets = [0, 1], sizes = [32, 1], strides = [1, 1]} : vector<32x2xf32> to vector<32x1xf32>
    %cst_59 = arith.constant dense<0.000000e+00> : vector<32xf32>
    %228 = vector.multi_reduction <add>, %224, %cst_59 [1] : vector<32x32xf32> to vector<32xf32>
    %229 = vector.shape_cast %228 : vector<32xf32> to vector<32x1xf32>
    %cst_60 = arith.constant 3.125000e-02 : f32
    %230 = vector.broadcast %cst_60 : f32 to vector<32x1xf32>
    %231 = arith.mulf %229, %230 : vector<32x1xf32>
    %232 = arith.mulf %224, %224 : vector<32x32xf32>
    %cst_61 = arith.constant dense<0.000000e+00> : vector<32xf32>
    %233 = vector.multi_reduction <add>, %232, %cst_61 [1] : vector<32x32xf32> to vector<32xf32>
    %234 = vector.shape_cast %233 : vector<32xf32> to vector<32x1xf32>
    %cst_62 = arith.constant 3.125000e-02 : f32
    %235 = vector.broadcast %cst_62 : f32 to vector<32x1xf32>
    %236 = arith.mulf %234, %235 : vector<32x1xf32>
    %237 = arith.mulf %231, %231 : vector<32x1xf32>
    %238 = arith.subf %236, %237 : vector<32x1xf32>
    %cst_63 = arith.constant 0.000000e+00 : f32
    %239 = vector.broadcast %cst_63 : f32 to vector<32x1xf32>
    %240 = arith.maximumf %238, %239 : vector<32x1xf32>
    %241 = vector.broadcast %231 : vector<32x1xf32> to vector<32x32xf32>
    %242 = arith.subf %224, %241 : vector<32x32xf32>
    %cst_64 = arith.constant 1.000000e-03 : f32
    %243 = vector.broadcast %cst_64 : f32 to vector<32x1xf32>
    %244 = arith.addf %240, %243 : vector<32x1xf32>
    %245 = math.rsqrt %244 : vector<32x1xf32>
    %246 = vector.broadcast %245 : vector<32x1xf32> to vector<32x32xf32>
    %247 = arith.mulf %242, %246 : vector<32x32xf32>
    %248 = vector.broadcast %226 : vector<32x1xf32> to vector<32x32xf32>
    %249 = arith.mulf %247, %248 : vector<32x32xf32>
    %250 = vector.broadcast %227 : vector<32x1xf32> to vector<32x32xf32>
    %251 = arith.addf %249, %250 : vector<32x32xf32>
    %252 = arith.negf %251 : vector<32x32xf32>
    %253 = math.exp %252 : vector<32x32xf32>
    %cst_65 = arith.constant 1.000000e+00 : f32
    %254 = vector.broadcast %cst_65 : f32 to vector<32x32xf32>
    %255 = arith.addf %254, %253 : vector<32x32xf32>
    %256 = arith.divf %254, %255 : vector<32x32xf32>
    %257 = arith.mulf %251, %256 : vector<32x32xf32>
    %c528 = arith.constant 528 : index
    %c0_66 = arith.constant 0 : index
    %258 = vector.load %arg3[%c528, %c0_66] : memref<608x128xf32, #tpu.memory_space<vmem>>, vector<2x32xf32>
    %cst_67 = arith.constant dense<0.000000e+00> : vector<32x2xf32>
    %259 = tpu.matmul %257, %258, %cst_67 {dimension_numbers = #tpu.dot_dimension_numbers<[1], [1], [0], [0], [0, 0, 1, 0], [], []>} : vector<32x32xf32>, vector<2x32xf32>, vector<32x2xf32> -> vector<32x2xf32>
    %cst_68 = arith.constant 6.250000e-02 : f32
    %260 = vector.broadcast %cst_68 : f32 to vector<32x2xf32>
    %261 = arith.mulf %259, %260 : vector<32x2xf32>
    %c208 = arith.constant 208 : index
    %c0_69 = arith.constant 0 : index
    %262 = vector.load %arg3[%c208, %c0_69] : memref<608x128xf32, #tpu.memory_space<vmem>>, vector<2x32xf32>
    %cst_70 = arith.constant dense<0.000000e+00> : vector<2x2xf32>
    %263 = tpu.matmul %262, %261, %cst_70 {dimension_numbers = #tpu.dot_dimension_numbers<[1], [0], [0], [1], [0, 0, 1, 1], [], []>} : vector<2x32xf32>, vector<32x2xf32>, vector<2x2xf32> -> vector<2x2xf32>
    %c216 = arith.constant 216 : index
    %c0_71 = arith.constant 0 : index
    %264 = vector.load %arg3[%c216, %c0_71] : memref<608x128xf32, #tpu.memory_space<vmem>>, vector<2x1xf32>
    %265 = vector.broadcast %264 : vector<2x1xf32> to vector<2x2xf32>
    %266 = arith.addf %263, %265 : vector<2x2xf32>
    %267 = arith.negf %266 : vector<2x2xf32>
    %268 = math.exp %267 : vector<2x2xf32>
    %cst_72 = arith.constant 1.000000e+00 : f32
    %269 = vector.broadcast %cst_72 : f32 to vector<2x2xf32>
    %270 = arith.addf %269, %268 : vector<2x2xf32>
    %271 = arith.divf %269, %270 : vector<2x2xf32>
    %272 = arith.mulf %266, %271 : vector<2x2xf32>
    %c224 = arith.constant 224 : index
    %c0_73 = arith.constant 0 : index
    %273 = vector.load %arg3[%c224, %c0_73] : memref<608x128xf32, #tpu.memory_space<vmem>>, vector<32x2xf32>
    %cst_74 = arith.constant dense<0.000000e+00> : vector<32x2xf32>
    %274 = tpu.matmul %273, %272, %cst_74 {dimension_numbers = #tpu.dot_dimension_numbers<[1], [0], [0], [1], [0, 0, 1, 1], [], []>} : vector<32x2xf32>, vector<2x2xf32>, vector<32x2xf32> -> vector<32x2xf32>
    %c256 = arith.constant 256 : index
    %c0_75 = arith.constant 0 : index
    %275 = vector.load %arg3[%c256, %c0_75] : memref<608x128xf32, #tpu.memory_space<vmem>>, vector<32x1xf32>
    %276 = vector.broadcast %275 : vector<32x1xf32> to vector<32x2xf32>
    %277 = arith.addf %274, %276 : vector<32x2xf32>
    %278 = arith.negf %277 : vector<32x2xf32>
    %279 = math.exp %278 : vector<32x2xf32>
    %cst_76 = arith.constant 1.000000e+00 : f32
    %280 = vector.broadcast %cst_76 : f32 to vector<32x2xf32>
    %281 = arith.addf %280, %279 : vector<32x2xf32>
    %282 = arith.divf %280, %281 : vector<32x2xf32>
    %cst_77 = arith.constant dense<0.000000e+00> : vector<32x32xf32>
    %283 = tpu.matmul %282, %258, %cst_77 {dimension_numbers = #tpu.dot_dimension_numbers<[1], [0], [0], [1], [0, 0, 1, 1], [], []>} : vector<32x2xf32>, vector<2x32xf32>, vector<32x32xf32> -> vector<32x32xf32>
    %284 = arith.mulf %257, %283 : vector<32x32xf32>
    %c288 = arith.constant 288 : index
    %c0_78 = arith.constant 0 : index
    %285 = vector.load %arg3[%c288, %c0_78] : memref<608x128xf32, #tpu.memory_space<vmem>>, vector<16x32xf32>
    %cst_79 = arith.constant dense<0.000000e+00> : vector<16x32xf32>
    %286 = tpu.matmul %285, %284, %cst_79 {dimension_numbers = #tpu.dot_dimension_numbers<[1], [0], [0], [1], [0, 0, 1, 1], [], []>} : vector<16x32xf32>, vector<32x32xf32>, vector<16x32xf32> -> vector<16x32xf32>
    %c304 = arith.constant 304 : index
    %c0_80 = arith.constant 0 : index
    %287 = vector.load %arg3[%c304, %c0_80] : memref<608x128xf32, #tpu.memory_space<vmem>>, vector<16x2xf32>
    %288 = vector.extract_strided_slice %287 {offsets = [0, 0], sizes = [16, 1], strides = [1, 1]} : vector<16x2xf32> to vector<16x1xf32>
    %289 = vector.extract_strided_slice %287 {offsets = [0, 1], sizes = [16, 1], strides = [1, 1]} : vector<16x2xf32> to vector<16x1xf32>
    %cst_81 = arith.constant dense<0.000000e+00> : vector<16xf32>
    %290 = vector.multi_reduction <add>, %286, %cst_81 [1] : vector<16x32xf32> to vector<16xf32>
    %291 = vector.shape_cast %290 : vector<16xf32> to vector<16x1xf32>
    %cst_82 = arith.constant 3.125000e-02 : f32
    %292 = vector.broadcast %cst_82 : f32 to vector<16x1xf32>
    %293 = arith.mulf %291, %292 : vector<16x1xf32>
    %294 = arith.mulf %286, %286 : vector<16x32xf32>
    %cst_83 = arith.constant dense<0.000000e+00> : vector<16xf32>
    %295 = vector.multi_reduction <add>, %294, %cst_83 [1] : vector<16x32xf32> to vector<16xf32>
    %296 = vector.shape_cast %295 : vector<16xf32> to vector<16x1xf32>
    %cst_84 = arith.constant 3.125000e-02 : f32
    %297 = vector.broadcast %cst_84 : f32 to vector<16x1xf32>
    %298 = arith.mulf %296, %297 : vector<16x1xf32>
    %299 = arith.mulf %293, %293 : vector<16x1xf32>
    %300 = arith.subf %298, %299 : vector<16x1xf32>
    %cst_85 = arith.constant 0.000000e+00 : f32
    %301 = vector.broadcast %cst_85 : f32 to vector<16x1xf32>
    %302 = arith.maximumf %300, %301 : vector<16x1xf32>
    %303 = vector.broadcast %293 : vector<16x1xf32> to vector<16x32xf32>
    %304 = arith.subf %286, %303 : vector<16x32xf32>
    %cst_86 = arith.constant 1.000000e-03 : f32
    %305 = vector.broadcast %cst_86 : f32 to vector<16x1xf32>
    %306 = arith.addf %302, %305 : vector<16x1xf32>
    %307 = math.rsqrt %306 : vector<16x1xf32>
    %308 = vector.broadcast %307 : vector<16x1xf32> to vector<16x32xf32>
    %309 = arith.mulf %304, %308 : vector<16x32xf32>
    %310 = vector.broadcast %288 : vector<16x1xf32> to vector<16x32xf32>
    %311 = arith.mulf %309, %310 : vector<16x32xf32>
    %312 = vector.broadcast %289 : vector<16x1xf32> to vector<16x32xf32>
    %313 = arith.addf %311, %312 : vector<16x32xf32>
    %c320 = arith.constant 320 : index
    %c0_87 = arith.constant 0 : index
    %314 = vector.load %arg3[%c320, %c0_87] : memref<608x128xf32, #tpu.memory_space<vmem>>, vector<64x16xf32>
    %cst_88 = arith.constant dense<0.000000e+00> : vector<64x32xf32>
    %315 = tpu.matmul %314, %313, %cst_88 {dimension_numbers = #tpu.dot_dimension_numbers<[1], [0], [0], [1], [0, 0, 1, 1], [], []>} : vector<64x16xf32>, vector<16x32xf32>, vector<64x32xf32> -> vector<64x32xf32>
    %c384 = arith.constant 384 : index
    %c0_89 = arith.constant 0 : index
    %316 = vector.load %arg3[%c384, %c0_89] : memref<608x128xf32, #tpu.memory_space<vmem>>, vector<64x2xf32>
    %317 = vector.extract_strided_slice %316 {offsets = [0, 0], sizes = [64, 1], strides = [1, 1]} : vector<64x2xf32> to vector<64x1xf32>
    %318 = vector.extract_strided_slice %316 {offsets = [0, 1], sizes = [64, 1], strides = [1, 1]} : vector<64x2xf32> to vector<64x1xf32>
    %cst_90 = arith.constant dense<0.000000e+00> : vector<64xf32>
    %319 = vector.multi_reduction <add>, %315, %cst_90 [1] : vector<64x32xf32> to vector<64xf32>
    %320 = vector.shape_cast %319 : vector<64xf32> to vector<64x1xf32>
    %cst_91 = arith.constant 3.125000e-02 : f32
    %321 = vector.broadcast %cst_91 : f32 to vector<64x1xf32>
    %322 = arith.mulf %320, %321 : vector<64x1xf32>
    %323 = arith.mulf %315, %315 : vector<64x32xf32>
    %cst_92 = arith.constant dense<0.000000e+00> : vector<64xf32>
    %324 = vector.multi_reduction <add>, %323, %cst_92 [1] : vector<64x32xf32> to vector<64xf32>
    %325 = vector.shape_cast %324 : vector<64xf32> to vector<64x1xf32>
    %cst_93 = arith.constant 3.125000e-02 : f32
    %326 = vector.broadcast %cst_93 : f32 to vector<64x1xf32>
    %327 = arith.mulf %325, %326 : vector<64x1xf32>
    %328 = arith.mulf %322, %322 : vector<64x1xf32>
    %329 = arith.subf %327, %328 : vector<64x1xf32>
    %cst_94 = arith.constant 0.000000e+00 : f32
    %330 = vector.broadcast %cst_94 : f32 to vector<64x1xf32>
    %331 = arith.maximumf %329, %330 : vector<64x1xf32>
    %332 = vector.broadcast %322 : vector<64x1xf32> to vector<64x32xf32>
    %333 = arith.subf %315, %332 : vector<64x32xf32>
    %cst_95 = arith.constant 1.000000e-03 : f32
    %334 = vector.broadcast %cst_95 : f32 to vector<64x1xf32>
    %335 = arith.addf %331, %334 : vector<64x1xf32>
    %336 = math.rsqrt %335 : vector<64x1xf32>
    %337 = vector.broadcast %336 : vector<64x1xf32> to vector<64x32xf32>
    %338 = arith.mulf %333, %337 : vector<64x32xf32>
    %339 = vector.broadcast %317 : vector<64x1xf32> to vector<64x32xf32>
    %340 = arith.mulf %338, %339 : vector<64x32xf32>
    %341 = vector.broadcast %318 : vector<64x1xf32> to vector<64x32xf32>
    %342 = arith.addf %340, %341 : vector<64x32xf32>
    %343 = arith.negf %342 : vector<64x32xf32>
    %344 = math.exp %343 : vector<64x32xf32>
    %cst_96 = arith.constant 1.000000e+00 : f32
    %345 = vector.broadcast %cst_96 : f32 to vector<64x32xf32>
    %346 = arith.addf %345, %344 : vector<64x32xf32>
    %347 = arith.divf %345, %346 : vector<64x32xf32>
    %348 = arith.mulf %342, %347 : vector<64x32xf32>
    %c528_97 = arith.constant 528 : index
    %c0_98 = arith.constant 0 : index
    %349 = vector.load %arg3[%c528_97, %c0_98] : memref<608x128xf32, #tpu.memory_space<vmem>>, vector<2x32xf32>
    %cst_99 = arith.constant dense<0.000000e+00> : vector<2x64xf32>
    %350 = tpu.matmul %349, %348, %cst_99 {dimension_numbers = #tpu.dot_dimension_numbers<[1], [1], [0], [0], [0, 0, 1, 0], [], []>} : vector<2x32xf32>, vector<64x32xf32>, vector<2x64xf32> -> vector<2x64xf32>
    %cst_100 = arith.constant 6.250000e-02 : f32
    %351 = vector.broadcast %cst_100 : f32 to vector<2x64xf32>
    %352 = arith.mulf %350, %351 : vector<2x64xf32>
    %c448 = arith.constant 448 : index
    %c0_101 = arith.constant 0 : index
    %353 = vector.load %arg3[%c448, %c0_101] : memref<608x128xf32, #tpu.memory_space<vmem>>, vector<64x32xf32>
    %cst_102 = arith.constant dense<0.000000e+00> : vector<2x32xf32>
    %354 = tpu.matmul %352, %353, %cst_102 {dimension_numbers = #tpu.dot_dimension_numbers<[1], [0], [0], [1], [0, 0, 1, 1], [], []>} : vector<2x64xf32>, vector<64x32xf32>, vector<2x32xf32> -> vector<2x32xf32>
    %c512 = arith.constant 512 : index
    %c0_103 = arith.constant 0 : index
    %355 = vector.load %arg3[%c512, %c0_103] : memref<608x128xf32, #tpu.memory_space<vmem>>, vector<1x32xf32>
    %356 = vector.broadcast %355 : vector<1x32xf32> to vector<2x32xf32>
    %357 = arith.addf %354, %356 : vector<2x32xf32>
    %358 = vector.extract_strided_slice %357 {offsets = [0, 0], sizes = [1, 32], strides = [1, 1]} : vector<2x32xf32> to vector<1x32xf32>
    %359 = vector.extract_strided_slice %357 {offsets = [1, 0], sizes = [1, 32], strides = [1, 1]} : vector<2x32xf32> to vector<1x32xf32>
    %360 = tpu.concatenate %358, %359 in 1 : vector<1x32xf32>, vector<1x32xf32> -> vector<1x64xf32>
    %c536 = arith.constant 536 : index
    %c0_104 = arith.constant 0 : index
    %361 = vector.load %arg3[%c536, %c0_104] : memref<608x128xf32, #tpu.memory_space<vmem>>, vector<64x128xf32>
    %cst_105 = arith.constant dense<0.000000e+00> : vector<1x128xf32>
    %362 = tpu.matmul %360, %361, %cst_105 {dimension_numbers = #tpu.dot_dimension_numbers<[1], [0], [0], [1], [0, 0, 1, 1], [], []>} : vector<1x64xf32>, vector<64x128xf32>, vector<1x128xf32> -> vector<1x128xf32>
    %c600 = arith.constant 600 : index
    %c0_106 = arith.constant 0 : index
    %363 = vector.load %arg3[%c600, %c0_106] : memref<608x128xf32, #tpu.memory_space<vmem>>, vector<1x128xf32>
    %364 = arith.addf %362, %363 : vector<1x128xf32>
    %c0_107 = arith.constant 0 : index
    %c0_108 = arith.constant 0 : index
    %365 = vector.load %arg4[%c0_107, %c0_108] : memref<1x128xf32, #tpu.memory_space<vmem>>, vector<1x128xf32>
    tpu.vector_store %arg4[%c0_107, %c0_108], %364 {strides = array<i32>} : memref<1x128xf32, #tpu.memory_space<vmem>>, vector<1x128xf32>,
    return
  }
}

</mosaic_0001>

<llo_original>
// kernel: efficientnet_extractor_forward.1
$region0: #{efficientnet_extractor_forward.1}
  #allocation0 [shape = 'u32[]', space=smem, size = 0x4, offset = 0x4, fixed_abs, tag = 'smem constant byte address 0x4 - core index']
  #allocation1 [shape = 'u32[72,128]{1,0:T(1,128)}', space=vmem, size = 0x9000, scoped, tag = 'internal scratch']
  %s0 = inlined_call_operand.vmem [shape: f32[9,128], index: 0, kind: input, shape index: {}]
  %s1 = inlined_call_operand.hbm [shape: bf16[1152,128], index: 1, kind: input, shape index: {}]
  %s2 = inlined_call_operand.vmem [shape: bf16[1152,32], index: 2, kind: input, shape index: {}]
  %s3 = inlined_call_operand.vmem [shape: f32[608,128], index: 3, kind: input, shape index: {}]
  %s4 = inlined_call_operand.hbm [shape: f32[1,128], index: 4, kind: output, shape index: {}]
  %s5 = sld [smem:[#allocation0]]
  $region30: #{efficientnet_extractor_forward.1} parent=0
    _
  %s7 = ssub.s32 1, %s5
  %s8 = scalar_select 0, %s7, %s5
  $region1: #{efficientnet_extractor_forward.1} parent=0
    #allocation2 [shape = 'u8[294912]{0}', space=vmem, size = 0x48000, scoped, tag = 'input window, operand 1, single buffered']
    #allocation3 [shape = 's32[1]{0}', space=sflag, size = 0x4, scoped, tag = 'scoped memory for efficientnet_extractor_forward.1']
    #allocation4 [shape = 's32[1]{0}', space=sflag, size = 0x4, scoped, tag = 'scoped memory for efficientnet_extractor_forward.1']
    #allocation5 [shape = 'u8[512]{0}', space=vmem, size = 0x400, scoped, tag = 'output window, operand 0, single buffered']
    %9 = vsyncpa [#allocation3], 0
    %10 = vsyncpa [#allocation4], 0
    // Predicated region
    $region2: #{efficientnet_extractor_forward.1} parent=1 // pred_check
      _
    $region3: #{efficientnet_extractor_forward.1} parent=1 // pred_check_branch
      %12 = sbr.rel (0) target = $region5
    $region4: #{efficientnet_extractor_forward.1} parent=1 // pred_region
      _
    $region5: #{efficientnet_extractor_forward.1} parent=1 // pred_fallthru
      _
    // Predicated region
    $region6: #{efficientnet_extractor_forward.1} parent=1 // pred_check
      _
    $region7: #{efficientnet_extractor_forward.1} parent=1 // pred_check_branch
      %14 = sbr.rel (0) target = $region9
    $region8: #{efficientnet_extractor_forward.1} parent=1 // pred_region
      %16 = vsyncadd [#allocation3], 0
      %s17 = sshll.u32 %s1, 4
      %s18 = int_to_ptr.hbm [resolvable:$true] %s17
      %s19 = sshll.u32 [#allocation2], 4
      %s20 = int_to_ptr.vmem [resolvable:$true] %s19
      %25 = dma.hbm_to_vmem [thread:$0]  %s18, 9216, %s20, [#allocation3], 64, 64, 4
    $region9: #{efficientnet_extractor_forward.1} parent=1 // pred_fallthru
      _
    // Predicated region
    $region10: #{efficientnet_extractor_forward.1} parent=1 // pred_check
      _
    $region11: #{efficientnet_extractor_forward.1} parent=1 // pred_check_branch
      %27 = sbr.rel (0) target = $region13
    $region12: #{efficientnet_extractor_forward.1} parent=1 // pred_region
      _
    $region13: #{efficientnet_extractor_forward.1} parent=1 // pred_fallthru
      _
    // Predicated region
    $region14: #{efficientnet_extractor_forward.1} parent=1 // pred_check
      _
    $region15: #{efficientnet_extractor_forward.1} parent=1 // pred_check_branch
      %29 = sbr.rel (0) target = $region17
    $region16: #{efficientnet_extractor_forward.1} parent=1 // pred_region
      _
    $region17: #{efficientnet_extractor_forward.1} parent=1 // pred_fallthru
      _
    // Predicated region
    $region18: #{efficientnet_extractor_forward.1} parent=1 // pred_check
      _
    $region19: #{efficientnet_extractor_forward.1} parent=1 // pred_check_branch
      %31 = sbr.rel (0) target = $region21
    $region20: #{efficientnet_extractor_forward.1} parent=1 // pred_region
      %33 = dma.done [#allocation3], 9216
    $region21: #{efficientnet_extractor_forward.1} parent=1 // pred_fallthru
      _
    %v34 = vld [vmem:[%s3] sm:$0xff]
    %v35 = vld [vmem:[%s0] sm:$0xff]
    %v36 = vld [vmem:[%s0 + $0x8] sm:$0x1]
    %vm37 = vcmask 72704
    %v39 = vsel %vm37, %v34, 0
    %vm41 = vcmask 1040384
    %v43 = vsel %vm41, %v36, 0
    %45 = vmatpush.msra.mxu0 0.0
    %46 = vmatpush.msra.mxu0 0.0
    %47 = vmatpush.msra.mxu0 0.0
    %48 = vmatpush.msra.mxu0 0.0
    %49 = vmatpush.msra.mxu0 0.0
    %50 = vmatpush.msra.mxu0 0.0
    %51 = vmatpush.msra.mxu0 0.0
    %52 = vmatpush.msra.mxu0 0.0
    %53 = vmatpush.msra.mxu0 0.0
    %54 = vmatpush.msra.mxu0 0.0
    %55 = vmatpush.msra.mxu0 0.0
    %56 = vmatpush.msra.mxu0 0.0
    %57 = vmatpush.msra.mxu0 0.0
    %58 = vmatpush.msra.mxu0 0.0
    %59 = vmatpush.msra.mxu0 %v43
    %60 = vmatpush.msra.mxu0 %v35
    %61 = vmatmul.f32.gmra.mxu0 %v39
    %v62 = vpop.f32.mrf.mxu0
    %v63 = vadd.f32 0.0, %v62
    %64 = vdwg.mxu0
    %v65 = vld [vmem:[%s3 + $0x8] sm:$0xff]
    %66 = vadd.xlane.f32.xlu0 %v63
    %v67 = vpop.xlane.xlu0 %66
    %v68 = vmul.f32 %v67, 0.0078125
    %v69 = vmul.f32 %v63, %v63
    %70 = vadd.xlane.f32.xlu0 %v69
    %v71 = vpop.xlane.xlu0 %70
    %v72 = vmul.f32 %v71, 0.0078125
    %v73 = vmul.f32 %v68, %v68
    %v74 = vsub.f32 %v72, %v73
    %v75 = vmax.f32 %v74, 0.0
    %v76 = vsub.f32 %v63, %v68
    %v77 = vadd.f32 %v75, 0.001
    %v78 = vrsqrt.pop %v77
    %v79 = vmul.f32 %v78, %v77
    %v80 = vmul.f32 %v79, %v78
    %v81 = vmul.f32 0.5, %v80
    %v82 = vsub.f32 1.5, %v81
    %v83 = vmul.f32 %v78, %v82
    %vm84 = vweird.f32 %v77
    %vm85 = vweird.f32 %v78
    %vm86 = vmor %vm84, %vm85
    %v87 = vsel %vm86, %v78, %v83
    %v88 = vmul.f32 %v76, %v87
    %90 = vset.pattern.permute.xlu0 0
    %91 = vperm.xlu0 %90, %v65
    %v92 = vpop.permute.xlu0 %91
    %v94 = vmul.f32 %v88, %v92
    %95 = vset.pattern.permute.xlu0 1
    %96 = vperm.xlu0 %95, %v65
    %v97 = vpop.permute.xlu0 %96
    %v99 = vadd.f32 %v94, %v97
    %v100 = vxor.u32 %v99, 2147483648
    %v101 = vmul.f32 %v100, 1.442695
    %v102 = vpow.pop %v101
    %v103 = vadd.f32 %v102, 1.0
    %v104 = vrcp.pop %v103
    %v105 = vmul.f32 %v103, %v104
    %v106 = vsub.f32 1.0, %v105
    %v107 = vmul.f32 %v104, %v106
    %v108 = vadd.f32 %v104, %v107
    %vm109 = vweird.f32 %v103
    %vm110 = vweird.f32 %v104
    %vm111 = vmor %vm109, %vm110
    %v112 = vsel %vm111, %v104, %v108
    %v113 = vand.u32 2147483647, %v103
    %vm114 = vcmp.eq.f32.partialorder %v113, 8.507059e+37
    %v115 = vand.u32 %v103, 2147483648
    %v116 = vor.u32 1.1754944e-38, %v115
    %v117 = vsel %vm114, %v116, %v112
    %v118 = vmul.f32 1.0, %v117
    %v119 = vmul.f32 %v99, %v118
    %v120 = vld [vmem:[%s3 + $0x10] sm:$0xff]
    %122 = vset.pattern.permute.xlu0 0
    %123 = vperm.xlu0 %122, %v120
    %v124 = vpop.permute.xlu0 %123
    %v126 = vmul.f32 %v119, %v124
    %127 = vset.pattern.permute.xlu0 1
    %128 = vperm.xlu0 %127, %v120
    %v129 = vpop.permute.xlu0 %128
    %v131 = vmul.f32 %v119, %v129
    %132 = vset.pattern.permute.xlu0 2
    %133 = vperm.xlu0 %132, %v120
    %v134 = vpop.permute.xlu0 %133
    %v136 = vmul.f32 %v119, %v134
    %137 = vset.pattern.permute.xlu0 3
    %138 = vperm.xlu0 %137, %v120
    %v139 = vpop.permute.xlu0 %138
    %v141 = vmul.f32 %v119, %v139
    %142 = vset.pattern.permute.xlu0 4
    %143 = vperm.xlu0 %142, %v120
    %v144 = vpop.permute.xlu0 %143
    %v146 = vmul.f32 %v119, %v144
    %147 = vset.pattern.permute.xlu0 5
    %148 = vperm.xlu0 %147, %v120
    %v149 = vpop.permute.xlu0 %148
    %v151 = vmul.f32 %v119, %v149
    %152 = vset.pattern.permute.xlu0 6
    %153 = vperm.xlu0 %152, %v120
    %v154 = vpop.permute.xlu0 %153
    %v156 = vmul.f32 %v119, %v154
    %157 = vset.pattern.permute.xlu0 7
    %158 = vperm.xlu0 %157, %v120
    %v159 = vpop.permute.xlu0 %158
    %v161 = vmul.f32 %v119, %v159
    %162 = vset.pattern.permute.xlu0 8
    %163 = vperm.xlu0 %162, %v120
    %v164 = vpop.permute.xlu0 %163
    %v166 = vmul.f32 %v119, %v164
    %v167 = vpack.c.bf16 %v126, %v126
    %v168 = vpack.c.bf16 %v131, %v131
    %v169 = vpack.c.bf16 %v136, %v136
    %v170 = vpack.c.bf16 %v141, %v141
    %v171 = vpack.c.bf16 %v146, %v146
    %v172 = vpack.c.bf16 %v151, %v151
    %v173 = vpack.c.bf16 %v156, %v156
    %v174 = vpack.c.bf16 %v161, %v161
    %v175 = vpack.c.bf16 %v166, %v166
    %v176 = vld [vmem:[#allocation2] sm:$0xf]
    %v177 = vld [vmem:[#allocation2 + $0x4] sm:$0xf]
    %v178 = vld [vmem:[#allocation2 + $0x8] sm:$0xf]
    %v179 = vld [vmem:[#allocation2 + $0xc] sm:$0xf]
    %v180 = vld [vmem:[#allocation2 + $0x10] sm:$0xf]
    %v181 = vld [vmem:[#allocation2 + $0x14] sm:$0xf]
    %v182 = vld [vmem:[#allocation2 + $0x18] sm:$0xf]
    %v183 = vld [vmem:[#allocation2 + $0x1c] sm:$0xf]
    %v184 = vld [vmem:[#allocation2 + $0x20] sm:$0xf]
    %v185 = vld [vmem:[#allocation2 + $0x24] sm:$0xf]
    %v186 = vld [vmem:[#allocation2 + $0x28] sm:$0xf]
    %v187 = vld [vmem:[#allocation2 + $0x2c] sm:$0xf]
    %v188 = vld [vmem:[#allocation2 + $0x30] sm:$0xf]
    %v189 = vld [vmem:[#allocation2 + $0x34] sm:$0xf]
    %v190 = vld [vmem:[#allocation2 + $0x38] sm:$0xf]
    %v191 = vld [vmem:[#allocation2 + $0x3c] sm:$0xf]
    %v192 = vld [vmem:[#allocation2 + $0x40] sm:$0xf]
    %v193 = vld [vmem:[#allocation2 + $0x44] sm:$0xf]
    %v194 = vld [vmem:[#allocation2 + $0x48] sm:$0xf]
    %v195 = vld [vmem:[#allocation2 + $0x4c] sm:$0xf]
    %v196 = vld [vmem:[#allocation2 + $0x50] sm:$0xf]
    %v197 = vld [vmem:[#allocation2 + $0x54] sm:$0xf]
    %v198 = vld [vmem:[#allocation2 + $0x58] sm:$0xf]
    %v199 = vld [vmem:[#allocation2 + $0x5c] sm:$0xf]
    %v200 = vld [vmem:[#allocation2 + $0x60] sm:$0xf]
    %v201 = vld [vmem:[#allocation2 + $0x64] sm:$0xf]
    %v202 = vld [vmem:[#allocation2 + $0x68] sm:$0xf]
    %v203 = vld [vmem:[#allocation2 + $0x6c] sm:$0xf]
    %v204 = vld [vmem:[#allocation2 + $0x70] sm:$0xf]
    %v205 = vld [vmem:[#allocation2 + $0x74] sm:$0xf]
    %v206 = vld [vmem:[#allocation2 + $0x78] sm:$0xf]
    %v207 = vld [vmem:[#allocation2 + $0x7c] sm:$0xf]
    %v208 = vld [vmem:[#allocation2 + $0x80] sm:$0xf]
    %v209 = vld [vmem:[#allocation2 + $0x84] sm:$0xf]
    %v210 = vld [vmem:[#allocation2 + $0x88] sm:$0xf]
    %v211 = vld [vmem:[#allocation2 + $0x8c] sm:$0xf]
    %v212 = vld [vmem:[#allocation2 + $0x90] sm:$0xf]
    %v213 = vld [vmem:[#allocation2 + $0x94] sm:$0xf]
    %v214 = vld [vmem:[#allocation2 + $0x98] sm:$0xf]
    %v215 = vld [vmem:[#allocation2 + $0x9c] sm:$0xf]
    %v216 = vld [vmem:[#allocation2 + $0xa0] sm:$0xf]
    %v217 = vld [vmem:[#allocation2 + $0xa4] sm:$0xf]
    %v218 = vld [vmem:[#allocation2 + $0xa8] sm:$0xf]
    %v219 = vld [vmem:[#allocation2 + $0xac] sm:$0xf]
    %v220 = vld [vmem:[#allocation2 + $0xb0] sm:$0xf]
    %v221 = vld [vmem:[#allocation2 + $0xb4] sm:$0xf]
    %v222 = vld [vmem:[#allocation2 + $0xb8] sm:$0xf]
    %v223 = vld [vmem:[#allocation2 + $0xbc] sm:$0xf]
    %v224 = vld [vmem:[#allocation2 + $0xc0] sm:$0xf]
    %v225 = vld [vmem:[#allocation2 + $0xc4] sm:$0xf]
    %v226 = vld [vmem:[#allocation2 + $0xc8] sm:$0xf]
    %v227 = vld [vmem:[#allocation2 + $0xcc] sm:$0xf]
    %v228 = vld [vmem:[#allocation2 + $0xd0] sm:$0xf]
    %v229 = vld [vmem:[#allocation2 + $0xd4] sm:$0xf]
    %v230 = vld [vmem:[#allocation2 + $0xd8] sm:$0xf]
    %v231 = vld [vmem:[#allocation2 + $0xdc] sm:$0xf]
    %v232 = vld [vmem:[#allocation2 + $0xe0] sm:$0xf]
    %v233 = vld [vmem:[#allocation2 + $0xe4] sm:$0xf]
    %v234 = vld [vmem:[#allocation2 + $0xe8] sm:$0xf]
    %v235 = vld [vmem:[#allocation2 + $0xec] sm:$0xf]
    %v236 = vld [vmem:[#allocation2 + $0xf0] sm:$0xf]
    %v237 = vld [vmem:[#allocation2 + $0xf4] sm:$0xf]
    %v238 = vld [vmem:[#allocation2 + $0xf8] sm:$0xf]
    %v239 = vld [vmem:[#allocation2 + $0xfc] sm:$0xf]
    %v240 = vld [vmem:[#allocation2 + $0x100] sm:$0xf]
    %v241 = vld [vmem:[#allocation2 + $0x104] sm:$0xf]
    %v242 = vld [vmem:[#allocation2 + $0x108] sm:$0xf]
    %v243 = vld [vmem:[#allocation2 + $0x10c] sm:$0xf]
    %v244 = vld [vmem:[#allocation2 + $0x110] sm:$0xf]
    %v245 = vld [vmem:[#allocation2 + $0x114] sm:$0xf]
    %v246 = vld [vmem:[#allocation2 + $0x118] sm:$0xf]
    %v247 = vld [vmem:[#allocation2 + $0x11c] sm:$0xf]
    %v248 = vld [vmem:[#allocation2 + $0x120] sm:$0xf]
    %v249 = vld [vmem:[#allocation2 + $0x124] sm:$0xf]
    %v250 = vld [vmem:[#allocation2 + $0x128] sm:$0xf]
    %v251 = vld [vmem:[#allocation2 + $0x12c] sm:$0xf]
    %v252 = vld [vmem:[#allocation2 + $0x130] sm:$0xf]
    %v253 = vld [vmem:[#allocation2 + $0x134] sm:$0xf]
    %v254 = vld [vmem:[#allocation2 + $0x138] sm:$0xf]
    %v255 = vld [vmem:[#allocation2 + $0x13c] sm:$0xf]
    %v256 = vld [vmem:[#allocation2 + $0x140] sm:$0xf]
    %v257 = vld [vmem:[#allocation2 + $0x144] sm:$0xf]
    %v258 = vld [vmem:[#allocation2 + $0x148] sm:$0xf]
    %v259 = vld [vmem:[#allocation2 + $0x14c] sm:$0xf]
    %v260 = vld [vmem:[#allocation2 + $0x150] sm:$0xf]
    %v261 = vld [vmem:[#allocation2 + $0x154] sm:$0xf]
    %v262 = vld [vmem:[#allocation2 + $0x158] sm:$0xf]
    %v263 = vld [vmem:[#allocation2 + $0x15c] sm:$0xf]
    %v264 = vld [vmem:[#allocation2 + $0x160] sm:$0xf]
    %v265 = vld [vmem:[#allocation2 + $0x164] sm:$0xf]
    %v266 = vld [vmem:[#allocation2 + $0x168] sm:$0xf]
    %v267 = vld [vmem:[#allocation2 + $0x16c] sm:$0xf]
    %v268 = vld [vmem:[#allocation2 + $0x170] sm:$0xf]
    %v269 = vld [vmem:[#allocation2 + $0x174] sm:$0xf]
    %v270 = vld [vmem:[#allocation2 + $0x178] sm:$0xf]
    %v271 = vld [vmem:[#allocation2 + $0x17c] sm:$0xf]
    %v272 = vld [vmem:[#allocation2 + $0x180] sm:$0xf]
    %v273 = vld [vmem:[#allocation2 + $0x184] sm:$0xf]
    %v274 = vld [vmem:[#allocation2 + $0x188] sm:$0xf]
    %v275 = vld [vmem:[#allocation2 + $0x18c] sm:$0xf]
    %v276 = vld [vmem:[#allocation2 + $0x190] sm:$0xf]
    %v277 = vld [vmem:[#allocation2 + $0x194] sm:$0xf]
    %v278 = vld [vmem:[#allocation2 + $0x198] sm:$0xf]
    %v279 = vld [vmem:[#allocation2 + $0x19c] sm:$0xf]
    %v280 = vld [vmem:[#allocation2 + $0x1a0] sm:$0xf]
    %v281 = vld [vmem:[#allocation2 + $0x1a4] sm:$0xf]
    %v282 = vld [vmem:[#allocation2 + $0x1a8] sm:$0xf]
    %v283 = vld [vmem:[#allocation2 + $0x1ac] sm:$0xf]
    %v284 = vld [vmem:[#allocation2 + $0x1b0] sm:$0xf]
    %v285 = vld [vmem:[#allocation2 + $0x1b4] sm:$0xf]
    %v286 = vld [vmem:[#allocation2 + $0x1b8] sm:$0xf]
    %v287 = vld [vmem:[#allocation2 + $0x1bc] sm:$0xf]
    %v288 = vld [vmem:[#allocation2 + $0x1c0] sm:$0xf]
    %v289 = vld [vmem:[#allocation2 + $0x1c4] sm:$0xf]
    %v290 = vld [vmem:[#allocation2 + $0x1c8] sm:$0xf]
    %v291 = vld [vmem:[#allocation2 + $0x1cc] sm:$0xf]
    %v292 = vld [vmem:[#allocation2 + $0x1d0] sm:$0xf]
    %v293 = vld [vmem:[#allocation2 + $0x1d4] sm:$0xf]
    %v294 = vld [vmem:[#allocation2 + $0x1d8] sm:$0xf]
    %v295 = vld [vmem:[#allocation2 + $0x1dc] sm:$0xf]
    %v296 = vld [vmem:[#allocation2 + $0x1e0] sm:$0xf]
    %v297 = vld [vmem:[#allocation2 + $0x1e4] sm:$0xf]
    %v298 = vld [vmem:[#allocation2 + $0x1e8] sm:$0xf]
    %v299 = vld [vmem:[#allocation2 + $0x1ec] sm:$0xf]
    %v300 = vld [vmem:[#allocation2 + $0x1f0] sm:$0xf]
    %v301 = vld [vmem:[#allocation2 + $0x1f4] sm:$0xf]
    %v302 = vld [vmem:[#allocation2 + $0x1f8] sm:$0xf]
    %v303 = vld [vmem:[#allocation2 + $0x1fc] sm:$0xf]
    %v304 = vld [vmem:[#allocation2 + $0x200] sm:$0xf]
    %v305 = vld [vmem:[#allocation2 + $0x204] sm:$0xf]
    %v306 = vld [vmem:[#allocation2 + $0x208] sm:$0xf]
    %v307 = vld [vmem:[#allocation2 + $0x20c] sm:$0xf]
    %v308 = vld [vmem:[#allocation2 + $0x210] sm:$0xf]
    %v309 = vld [vmem:[#allocation2 + $0x214] sm:$0xf]
    %v310 = vld [vmem:[#allocation2 + $0x218] sm:$0xf]
    %v311 = vld [vmem:[#allocation2 + $0x21c] sm:$0xf]
    %v312 = vld [vmem:[#allocation2 + $0x220] sm:$0xf]
    %v313 = vld [vmem:[#allocation2 + $0x224] sm:$0xf]
    %v314 = vld [vmem:[#allocation2 + $0x228] sm:$0xf]
    %v315 = vld [vmem:[#allocation2 + $0x22c] sm:$0xf]
    %v316 = vld [vmem:[#allocation2 + $0x230] sm:$0xf]
    %v317 = vld [vmem:[#allocation2 + $0x234] sm:$0xf]
    %v318 = vld [vmem:[#allocation2 + $0x238] sm:$0xf]
    %v319 = vld [vmem:[#allocation2 + $0x23c] sm:$0xf]
    %v464 = vunpack.c.l.b16 %v176
    %v465 = vunpack.c.l.b16 %v177
    %v466 = vunpack.c.l.b16 %v178
    %v467 = vunpack.c.l.b16 %v179
    %v468 = vunpack.c.l.b16 %v180
    %v469 = vunpack.c.l.b16 %v181
    %v470 = vunpack.c.l.b16 %v182
    %v471 = vunpack.c.l.b16 %v183
    %v472 = vunpack.c.l.b16 %v184
    %v473 = vunpack.c.l.b16 %v185
    %v474 = vunpack.c.l.b16 %v186
    %v475 = vunpack.c.l.b16 %v187
    %v476 = vunpack.c.l.b16 %v188
    %v477 = vunpack.c.l.b16 %v189
    %v478 = vunpack.c.l.b16 %v190
    %v479 = vunpack.c.l.b16 %v191
    %v480 = vunpack.c.l.b16 %v192
    %v481 = vunpack.c.l.b16 %v193
    %v482 = vunpack.c.l.b16 %v194
    %v483 = vunpack.c.l.b16 %v195
    %v484 = vunpack.c.l.b16 %v196
    %v485 = vunpack.c.l.b16 %v197
    %v486 = vunpack.c.l.b16 %v198
    %v487 = vunpack.c.l.b16 %v199
    %v488 = vunpack.c.l.b16 %v200
    %v489 = vunpack.c.l.b16 %v201
    %v490 = vunpack.c.l.b16 %v202
    %v491 = vunpack.c.l.b16 %v203
    %v492 = vunpack.c.l.b16 %v204
    %v493 = vunpack.c.l.b16 %v205
    %v494 = vunpack.c.l.b16 %v206
    %v495 = vunpack.c.l.b16 %v207
    %v496 = vunpack.c.l.b16 %v208
    %v497 = vunpack.c.l.b16 %v209
    %v498 = vunpack.c.l.b16 %v210
    %v499 = vunpack.c.l.b16 %v211
    %v500 = vunpack.c.l.b16 %v212
    %v501 = vunpack.c.l.b16 %v213
    %v502 = vunpack.c.l.b16 %v214
    %v503 = vunpack.c.l.b16 %v215
    %v504 = vunpack.c.l.b16 %v216
    %v505 = vunpack.c.l.b16 %v217
    %v506 = vunpack.c.l.b16 %v218
    %v507 = vunpack.c.l.b16 %v219
    %v508 = vunpack.c.l.b16 %v220
    %v509 = vunpack.c.l.b16 %v221
    %v510 = vunpack.c.l.b16 %v222
    %v511 = vunpack.c.l.b16 %v223
    %v512 = vunpack.c.l.b16 %v224
    %v513 = vunpack.c.l.b16 %v225
    %v514 = vunpack.c.l.b16 %v226
    %v515 = vunpack.c.l.b16 %v227
    %v516 = vunpack.c.l.b16 %v228
    %v517 = vunpack.c.l.b16 %v229
    %v518 = vunpack.c.l.b16 %v230
    %v519 = vunpack.c.l.b16 %v231
    %v520 = vunpack.c.l.b16 %v232
    %v521 = vunpack.c.l.b16 %v233
    %v522 = vunpack.c.l.b16 %v234
    %v523 = vunpack.c.l.b16 %v235
    %v524 = vunpack.c.l.b16 %v236
    %v525 = vunpack.c.l.b16 %v237
    %v526 = vunpack.c.l.b16 %v238
    %v527 = vunpack.c.l.b16 %v239
    %v528 = vunpack.c.l.b16 %v240
    %v529 = vunpack.c.l.b16 %v241
    %v530 = vunpack.c.l.b16 %v242
    %v531 = vunpack.c.l.b16 %v243
    %v532 = vunpack.c.l.b16 %v244
    %v533 = vunpack.c.l.b16 %v245
    %v534 = vunpack.c.l.b16 %v246
    %v535 = vunpack.c.l.b16 %v247
    %v536 = vunpack.c.l.b16 %v248
    %v537 = vunpack.c.l.b16 %v249
    %v538 = vunpack.c.l.b16 %v250
    %v539 = vunpack.c.l.b16 %v251
    %v540 = vunpack.c.l.b16 %v252
    %v541 = vunpack.c.l.b16 %v253
    %v542 = vunpack.c.l.b16 %v254
    %v543 = vunpack.c.l.b16 %v255
    %v544 = vunpack.c.l.b16 %v256
    %v545 = vunpack.c.l.b16 %v257
    %v546 = vunpack.c.l.b16 %v258
    %v547 = vunpack.c.l.b16 %v259
    %v548 = vunpack.c.l.b16 %v260
    %v549 = vunpack.c.l.b16 %v261
    %v550 = vunpack.c.l.b16 %v262
    %v551 = vunpack.c.l.b16 %v263
    %v552 = vunpack.c.l.b16 %v264
    %v553 = vunpack.c.l.b16 %v265
    %v554 = vunpack.c.l.b16 %v266
    %v555 = vunpack.c.l.b16 %v267
    %v556 = vunpack.c.l.b16 %v268
    %v557 = vunpack.c.l.b16 %v269
    %v558 = vunpack.c.l.b16 %v270
    %v559 = vunpack.c.l.b16 %v271
    %v560 = vunpack.c.l.b16 %v272
    %v561 = vunpack.c.l.b16 %v273
    %v562 = vunpack.c.l.b16 %v274
    %v563 = vunpack.c.l.b16 %v275
    %v564 = vunpack.c.l.b16 %v276
    %v565 = vunpack.c.l.b16 %v277
    %v566 = vunpack.c.l.b16 %v278
    %v567 = vunpack.c.l.b16 %v279
    %v568 = vunpack.c.l.b16 %v280
    %v569 = vunpack.c.l.b16 %v281
    %v570 = vunpack.c.l.b16 %v282
    %v571 = vunpack.c.l.b16 %v283
    %v572 = vunpack.c.l.b16 %v284
    %v573 = vunpack.c.l.b16 %v285
    %v574 = vunpack.c.l.b16 %v286
    %v575 = vunpack.c.l.b16 %v287
    %v576 = vunpack.c.l.b16 %v288
    %v577 = vunpack.c.l.b16 %v289
    %v578 = vunpack.c.l.b16 %v290
    %v579 = vunpack.c.l.b16 %v291
    %v580 = vunpack.c.l.b16 %v292
    %v581 = vunpack.c.l.b16 %v293
    %v582 = vunpack.c.l.b16 %v294
    %v583 = vunpack.c.l.b16 %v295
    %v584 = vunpack.c.l.b16 %v296
    %v585 = vunpack.c.l.b16 %v297
    %v586 = vunpack.c.l.b16 %v298
    %v587 = vunpack.c.l.b16 %v299
    %v588 = vunpack.c.l.b16 %v300
    %v589 = vunpack.c.l.b16 %v301
    %v590 = vunpack.c.l.b16 %v302
    %v591 = vunpack.c.l.b16 %v303
    %v592 = vunpack.c.l.b16 %v304
    %v593 = vunpack.c.l.b16 %v305
    %v594 = vunpack.c.l.b16 %v306
    %v595 = vunpack.c.l.b16 %v307
    %v596 = vunpack.c.l.b16 %v308
    %v597 = vunpack.c.l.b16 %v309
    %v598 = vunpack.c.l.b16 %v310
    %v599 = vunpack.c.l.b16 %v311
    %v600 = vunpack.c.l.b16 %v312
    %v601 = vunpack.c.l.b16 %v313
    %v602 = vunpack.c.l.b16 %v314
    %v603 = vunpack.c.l.b16 %v315
    %v604 = vunpack.c.l.b16 %v316
    %v605 = vunpack.c.l.b16 %v317
    %v606 = vunpack.c.l.b16 %v318
    %v607 = vunpack.c.l.b16 %v319
    %v608 = vpack.c.b16 %v465, %v464
    %v609 = vpack.c.b16 %v467, %v466
    %v610 = vpack.c.b16 %v469, %v468
    %v611 = vpack.c.b16 %v471, %v470
    %v612 = vpack.c.b16 %v473, %v472
    %v613 = vpack.c.b16 %v475, %v474
    %v614 = vpack.c.b16 %v477, %v476
    %v615 = vpack.c.b16 %v479, %v478
    %v616 = vpack.c.b16 %v481, %v480
    %v617 = vpack.c.b16 %v483, %v482
    %v618 = vpack.c.b16 %v485, %v484
    %v619 = vpack.c.b16 %v487, %v486
    %v620 = vpack.c.b16 %v489, %v488
    %v621 = vpack.c.b16 %v491, %v490
    %v622 = vpack.c.b16 %v493, %v492
    %v623 = vpack.c.b16 %v495, %v494
    %v624 = vpack.c.b16 %v497, %v496
    %v625 = vpack.c.b16 %v499, %v498
    %v626 = vpack.c.b16 %v501, %v500
    %v627 = vpack.c.b16 %v503, %v502
    %v628 = vpack.c.b16 %v505, %v504
    %v629 = vpack.c.b16 %v507, %v506
    %v630 = vpack.c.b16 %v509, %v508
    %v631 = vpack.c.b16 %v511, %v510
    %v632 = vpack.c.b16 %v513, %v512
    %v633 = vpack.c.b16 %v515, %v514
    %v634 = vpack.c.b16 %v517, %v516
    %v635 = vpack.c.b16 %v519, %v518
    %v636 = vpack.c.b16 %v521, %v520
    %v637 = vpack.c.b16 %v523, %v522
    %v638 = vpack.c.b16 %v525, %v524
    %v639 = vpack.c.b16 %v527, %v526
    %v640 = vpack.c.b16 %v529, %v528
    %v641 = vpack.c.b16 %v531, %v530
    %v642 = vpack.c.b16 %v533, %v532
    %v643 = vpack.c.b16 %v535, %v534
    %v644 = vpack.c.b16 %v537, %v536
    %v645 = vpack.c.b16 %v539, %v538
    %v646 = vpack.c.b16 %v541, %v540
    %v647 = vpack.c.b16 %v543, %v542
    %v648 = vpack.c.b16 %v545, %v544
    %v649 = vpack.c.b16 %v547, %v546
    %v650 = vpack.c.b16 %v549, %v548
    %v651 = vpack.c.b16 %v551, %v550
    %v652 = vpack.c.b16 %v553, %v552
    %v653 = vpack.c.b16 %v555, %v554
    %v654 = vpack.c.b16 %v557, %v556
    %v655 = vpack.c.b16 %v559, %v558
    %v656 = vpack.c.b16 %v561, %v560
    %v657 = vpack.c.b16 %v563, %v562
    %v658 = vpack.c.b16 %v565, %v564
    %v659 = vpack.c.b16 %v567, %v566
    %v660 = vpack.c.b16 %v569, %v568
    %v661 = vpack.c.b16 %v571, %v570
    %v662 = vpack.c.b16 %v573, %v572
    %v663 = vpack.c.b16 %v575, %v574
    %v664 = vpack.c.b16 %v577, %v576
    %v665 = vpack.c.b16 %v579, %v578
    %v666 = vpack.c.b16 %v581, %v580
    %v667 = vpack.c.b16 %v583, %v582
    %v668 = vpack.c.b16 %v585, %v584
    %v669 = vpack.c.b16 %v587, %v586
    %v670 = vpack.c.b16 %v589, %v588
    %v671 = vpack.c.b16 %v591, %v590
    %v672 = vpack.c.b16 %v593, %v592
    %v673 = vpack.c.b16 %v595, %v594
    %v674 = vpack.c.b16 %v597, %v596
    %v675 = vpack.c.b16 %v599, %v598
    %v676 = vpack.c.b16 %v601, %v600
    %v677 = vpack.c.b16 %v603, %v602
    %v678 = vpack.c.b16 %v605, %v604
    %v679 = vpack.c.b16 %v607, %v606
    %752 = vmatpush.bf16.msra.mxu0 %v615
    %753 = vmatpush.bf16.msra.mxu0 %v614
    %754 = vmatpush.bf16.msra.mxu0 %v613
    %755 = vmatpush.bf16.msra.mxu0 %v612
    %756 = vmatpush.bf16.msra.mxu0 %v611
    %757 = vmatpush.bf16.msra.mxu0 %v610
    %758 = vmatpush.bf16.msra.mxu0 %v609
    %759 = vmatpush.bf16.msra.mxu0 %v608
    %760 = vmatmul.bf16.gmra.mxu0 %v167
    %v761 = vpop.f32.mrf.mxu0
    %v762 = vadd.f32 0.0, %v761
    %v763 = vpop.f32.mrf.mxu0
    %764 = vdwg.mxu0
    %765 = vmatpush.bf16.msra.mxu0 %v623
    %766 = vmatpush.bf16.msra.mxu0 %v622
    %767 = vmatpush.bf16.msra.mxu0 %v621
    %768 = vmatpush.bf16.msra.mxu0 %v620
    %769 = vmatpush.bf16.msra.mxu0 %v619
    %770 = vmatpush.bf16.msra.mxu0 %v618
    %771 = vmatpush.bf16.msra.mxu0 %v617
    %772 = vmatpush.bf16.msra.mxu0 %v616
    %773 = vmatmul.bf16.gmra.mxu0 %v168
    %v774 = vpop.f32.mrf.mxu0
    %v775 = vadd.f32 %v762, %v774
    %v776 = vpop.f32.mrf.mxu0
    %777 = vdwg.mxu0
    %778 = vmatpush.bf16.msra.mxu0 %v631
    %779 = vmatpush.bf16.msra.mxu0 %v630
    %780 = vmatpush.bf16.msra.mxu0 %v629
    %781 = vmatpush.bf16.msra.mxu0 %v628
    %782 = vmatpush.bf16.msra.mxu0 %v627
    %783 = vmatpush.bf16.msra.mxu0 %v626
    %784 = vmatpush.bf16.msra.mxu0 %v625
    %785 = vmatpush.bf16.msra.mxu0 %v624
    %786 = vmatmul.bf16.gmra.mxu0 %v169
    %v787 = vpop.f32.mrf.mxu0
    %v788 = vadd.f32 %v775, %v787
    %v789 = vpop.f32.mrf.mxu0
    %790 = vdwg.mxu0
    %791 = vmatpush.bf16.msra.mxu0 %v639
    %792 = vmatpush.bf16.msra.mxu0 %v638
    %793 = vmatpush.bf16.msra.mxu0 %v637
    %794 = vmatpush.bf16.msra.mxu0 %v636
    %795 = vmatpush.bf16.msra.mxu0 %v635
    %796 = vmatpush.bf16.msra.mxu0 %v634
    %797 = vmatpush.bf16.msra.mxu0 %v633
    %798 = vmatpush.bf16.msra.mxu0 %v632
    %799 = vmatmul.bf16.gmra.mxu0 %v170
    %v800 = vpop.f32.mrf.mxu0
    %v801 = vadd.f32 %v788, %v800
    %v802 = vpop.f32.mrf.mxu0
    %803 = vdwg.mxu0
    %804 = vmatpush.bf16.msra.mxu0 %v647
    %805 = vmatpush.bf16.msra.mxu0 %v646
    %806 = vmatpush.bf16.msra.mxu0 %v645
    %807 = vmatpush.bf16.msra.mxu0 %v644
    %808 = vmatpush.bf16.msra.mxu0 %v643
    %809 = vmatpush.bf16.msra.mxu0 %v642
    %810 = vmatpush.bf16.msra.mxu0 %v641
    %811 = vmatpush.bf16.msra.mxu0 %v640
    %812 = vmatmul.bf16.gmra.mxu0 %v171
    %v813 = vpop.f32.mrf.mxu0
    %v814 = vadd.f32 %v801, %v813
    %v815 = vpop.f32.mrf.mxu0
    %816 = vdwg.mxu0
    %817 = vmatpush.bf16.msra.mxu0 %v655
    %818 = vmatpush.bf16.msra.mxu0 %v654
    %819 = vmatpush.bf16.msra.mxu0 %v653
    %820 = vmatpush.bf16.msra.mxu0 %v652
    %821 = vmatpush.bf16.msra.mxu0 %v651
    %822 = vmatpush.bf16.msra.mxu0 %v650
    %823 = vmatpush.bf16.msra.mxu0 %v649
    %824 = vmatpush.bf16.msra.mxu0 %v648
    %825 = vmatmul.bf16.gmra.mxu0 %v172
    %v826 = vpop.f32.mrf.mxu0
    %v827 = vadd.f32 %v814, %v826
    %v828 = vpop.f32.mrf.mxu0
    %829 = vdwg.mxu0
    %830 = vmatpush.bf16.msra.mxu0 %v663
    %831 = vmatpush.bf16.msra.mxu0 %v662
    %832 = vmatpush.bf16.msra.mxu0 %v661
    %833 = vmatpush.bf16.msra.mxu0 %v660
    %834 = vmatpush.bf16.msra.mxu0 %v659
    %835 = vmatpush.bf16.msra.mxu0 %v658
    %836 = vmatpush.bf16.msra.mxu0 %v657
    %837 = vmatpush.bf16.msra.mxu0 %v656
    %838 = vmatmul.bf16.gmra.mxu0 %v173
    %v839 = vpop.f32.mrf.mxu0
    %v840 = vadd.f32 %v827, %v839
    %v841 = vpop.f32.mrf.mxu0
    %842 = vdwg.mxu0
    %843 = vmatpush.bf16.msra.mxu0 %v671
    %844 = vmatpush.bf16.msra.mxu0 %v670
    %845 = vmatpush.bf16.msra.mxu0 %v669
    %846 = vmatpush.bf16.msra.mxu0 %v668
    %847 = vmatpush.bf16.msra.mxu0 %v667
    %848 = vmatpush.bf16.msra.mxu0 %v666
    %849 = vmatpush.bf16.msra.mxu0 %v665
    %850 = vmatpush.bf16.msra.mxu0 %v664
    %851 = vmatmul.bf16.gmra.mxu0 %v174
    %v852 = vpop.f32.mrf.mxu0
    %v853 = vadd.f32 %v840, %v852
    %v854 = vpop.f32.mrf.mxu0
    %855 = vdwg.mxu0
    %856 = vmatpush.bf16.msra.mxu0 %v679
    %857 = vmatpush.bf16.msra.mxu0 %v678
    %858 = vmatpush.bf16.msra.mxu0 %v677
    %859 = vmatpush.bf16.msra.mxu0 %v676
    %860 = vmatpush.bf16.msra.mxu0 %v675
    %861 = vmatpush.bf16.msra.mxu0 %v674
    %862 = vmatpush.bf16.msra.mxu0 %v673
    %863 = vmatpush.bf16.msra.mxu0 %v672
    %864 = vmatmul.bf16.gmra.mxu0 %v175
    %v865 = vpop.f32.mrf.mxu0
    %v866 = vadd.f32 %v853, %v865
    %v867 = vpop.f32.mrf.mxu0
    %868 = vdwg.mxu0
    %v869 = vld [vmem:[%s3 + $0x18] sm:$0xff]
    %870 = vadd.xlane.f32.xlu0 %v866
    %v871 = vpop.xlane.xlu0 %870
    %v872 = vmul.f32 %v871, 0.0078125
    %v873 = vmul.f32 %v866, %v866
    %874 = vadd.xlane.f32.xlu0 %v873
    %v875 = vpop.xlane.xlu0 %874
    %v876 = vmul.f32 %v875, 0.0078125
    %v877 = vmul.f32 %v872, %v872
    %v878 = vsub.f32 %v876, %v877
    %v879 = vmax.f32 %v878, 0.0
    %v880 = vsub.f32 %v866, %v872
    %v881 = vadd.f32 %v879, 0.001
    %v882 = vrsqrt.pop %v881
    %v883 = vmul.f32 %v882, %v881
    %v884 = vmul.f32 %v883, %v882
    %v885 = vmul.f32 0.5, %v884
    %v886 = vsub.f32 1.5, %v885
    %v887 = vmul.f32 %v882, %v886
    %vm888 = vweird.f32 %v881
    %vm889 = vweird.f32 %v882
    %vm890 = vmor %vm888, %vm889
    %v891 = vsel %vm890, %v882, %v887
    %v892 = vmul.f32 %v880, %v891
    %894 = vset.pattern.permute.xlu0 0
    %895 = vperm.xlu0 %894, %v869
    %v896 = vpop.permute.xlu0 %895
    %v898 = vmul.f32 %v892, %v896
    %899 = vset.pattern.permute.xlu0 1
    %900 = vperm.xlu0 %899, %v869
    %v901 = vpop.permute.xlu0 %900
    %v903 = vadd.f32 %v898, %v901
    %v904 = vxor.u32 %v903, 2147483648
    %v905 = vmul.f32 %v904, 1.442695
    %v906 = vpow.pop %v905
    %v907 = vadd.f32 %v906, 1.0
    %v908 = vrcp.pop %v907
    %v909 = vmul.f32 %v907, %v908
    %v910 = vsub.f32 1.0, %v909
    %v911 = vmul.f32 %v908, %v910
    %v912 = vadd.f32 %v908, %v911
    %vm913 = vweird.f32 %v907
    %vm914 = vweird.f32 %v908
    %vm915 = vmor %vm913, %vm914
    %v916 = vsel %vm915, %v908, %v912
    %v917 = vand.u32 2147483647, %v907
    %vm918 = vcmp.eq.f32.partialorder %v917, 8.507059e+37
    %v919 = vand.u32 %v907, 2147483648
    %v920 = vor.u32 1.1754944e-38, %v919
    %v921 = vsel %vm918, %v920, %v916
    %v922 = vmul.f32 1.0, %v921
    %v923 = vmul.f32 %v903, %v922
    %v924 = vld [vmem:[%s3 + $0x208] sm:$0x3]
    %925 = vmatpush.xpose.msra.mxu0 0.0
    %926 = vmatpush.xpose.msra.mxu0 0.0
    %927 = vmatpush.xpose.msra.mxu0 0.0
    %928 = vmatpush.xpose.msra.mxu0 0.0
    %929 = vmatpush.xpose.msra.mxu0 0.0
    %930 = vmatpush.xpose.msra.mxu0 0.0
    %931 = vmatpush.xpose.msra.mxu0 0.0
    %932 = vmatpush.xpose.msra.mxu0 0.0
    %933 = vmatpush.xpose.msra.mxu0 0.0
    %934 = vmatpush.xpose.msra.mxu0 0.0
    %935 = vmatpush.xpose.msra.mxu0 0.0
    %936 = vmatpush.xpose.msra.mxu0 0.0
    %937 = vmatpush.xpose.msra.mxu0 0.0
    %938 = vmatpush.xpose.msra.mxu0 0.0
    %939 = vmatpush.xpose.msra.mxu0 0.0
    %940 = vmatpush.xpose.msra.mxu0 %v924
    %941 = vmatmul.f32.gmra.mxu0 %v923
    %v942 = vpop.f32.mrf.mxu0
    %v943 = vadd.f32 0.0, %v942
    %944 = vdwg.mxu0
    %v945 = vmul.f32 %v943, 0.015625
    %v946 = vld [vmem:[%s3 + $0x20] sm:$0x3]
    %v947 = vld [vmem:[%s3 + $0x28] sm:$0x3]
    %949 = vset.pattern.permute.xlu0 0
    %950 = vperm.xlu0 %949, %v947
    %v951 = vpop.permute.xlu0 %950
    %vm953 = vcmask 64512
    %v955 = vsel %vm953, %v946, 0
    %957 = vmatpush.msra.mxu0 0.0
    %958 = vmatpush.msra.mxu0 0.0
    %959 = vmatpush.msra.mxu0 0.0
    %960 = vmatpush.msra.mxu0 0.0
    %961 = vmatpush.msra.mxu0 0.0
    %962 = vmatpush.msra.mxu0 0.0
    %963 = vmatpush.msra.mxu0 0.0
    %964 = vmatpush.msra.mxu0 0.0
    %965 = vmatpush.msra.mxu0 0.0
    %966 = vmatpush.msra.mxu0 0.0
    %967 = vmatpush.msra.mxu0 0.0
    %968 = vmatpush.msra.mxu0 0.0
    %969 = vmatpush.msra.mxu0 0.0
    %970 = vmatpush.msra.mxu0 0.0
    %971 = vmatpush.msra.mxu0 0.0
    %972 = vmatpush.msra.mxu0 %v945
    %973 = vmatmul.f32.gmra.mxu0 %v955
    %v974 = vpop.f32.mrf.mxu0
    %v975 = vadd.f32 %v951, %v974
    %976 = vdwg.mxu0
    %v977 = vxor.u32 %v975, 2147483648
    %v978 = vmul.f32 %v977, 1.442695
    %v979 = vpow.pop %v978
    %v980 = vadd.f32 %v979, 1.0
    %v981 = vrcp.pop %v980
    %v982 = vmul.f32 %v980, %v981
    %v983 = vsub.f32 1.0, %v982
    %v984 = vmul.f32 %v981, %v983
    %v985 = vadd.f32 %v981, %v984
    %vm986 = vweird.f32 %v980
    %vm987 = vweird.f32 %v981
    %vm988 = vmor %vm986, %vm987
    %v989 = vsel %vm988, %v981, %v985
    %v990 = vand.u32 2147483647, %v980
    %vm991 = vcmp.eq.f32.partialorder %v990, 8.507059e+37
    %v992 = vand.u32 %v980, 2147483648
    %v993 = vor.u32 1.1754944e-38, %v992
    %v994 = vsel %vm991, %v993, %v989
    %v995 = vmul.f32 1.0, %v994
    %v996 = vmul.f32 %v975, %v995
    %v997 = vld [vmem:[%s3 + $0x30] sm:$0xff]
    %v998 = vld [vmem:[%s3 + $0x38] sm:$0xff]
    %1000 = vset.pattern.permute.xlu0 0
    %1001 = vperm.xlu0 %1000, %v998
    %v1002 = vpop.permute.xlu0 %1001
    %vm1004 = vcmask 15360
    %v1006 = vsel %vm1004, %v997, 0
    %vm1008 = vcmask 1041408
    %v1010 = vsel %vm1008, %v996, 0
    %1012 = vmatpush.msra.mxu0 0.0
    %1013 = vmatpush.msra.mxu0 0.0
    %1014 = vmatpush.msra.mxu0 0.0
    %1015 = vmatpush.msra.mxu0 0.0
    %1016 = vmatpush.msra.mxu0 0.0
    %1017 = vmatpush.msra.mxu0 0.0
    %1018 = vmatpush.msra.mxu0 0.0
    %1019 = vmatpush.msra.mxu0 0.0
    %1020 = vmatpush.msra.mxu0 0.0
    %1021 = vmatpush.msra.mxu0 0.0
    %1022 = vmatpush.msra.mxu0 0.0
    %1023 = vmatpush.msra.mxu0 0.0
    %1024 = vmatpush.msra.mxu0 0.0
    %1025 = vmatpush.msra.mxu0 0.0
    %1026 = vmatpush.msra.mxu0 0.0
    %1027 = vmatpush.msra.mxu0 %v1010
    %1028 = vmatmul.f32.gmra.mxu0 %v1006
    %v1029 = vpop.f32.mrf.mxu0
    %v1030 = vadd.f32 %v1002, %v1029
    %1031 = vdwg.mxu0
    %v1032 = vxor.u32 %v1030, 2147483648
    %v1033 = vmul.f32 %v1032, 1.442695
    %v1034 = vpow.pop %v1033
    %v1035 = vadd.f32 %v1034, 1.0
    %v1036 = vrcp.pop %v1035
    %v1037 = vmul.f32 %v1035, %v1036
    %v1038 = vsub.f32 1.0, %v1037
    %v1039 = vmul.f32 %v1036, %v1038
    %v1040 = vadd.f32 %v1036, %v1039
    %vm1041 = vweird.f32 %v1035
    %vm1042 = vweird.f32 %v1036
    %vm1043 = vmor %vm1041, %vm1042
    %v1044 = vsel %vm1043, %v1036, %v1040
    %v1045 = vand.u32 2147483647, %v1035
    %vm1046 = vcmp.eq.f32.partialorder %v1045, 8.507059e+37
    %v1047 = vand.u32 %v1035, 2147483648
    %v1048 = vor.u32 1.1754944e-38, %v1047
    %v1049 = vsel %vm1046, %v1048, %v1044
    %v1050 = vmul.f32 1.0, %v1049
    %v1052 = vsel %vm1004, %v1050, 0
    %v1055 = vsel %vm1008, %v924, 0
    %1057 = vmatpush.msra.mxu0 0.0
    %1058 = vmatpush.msra.mxu0 0.0
    %1059 = vmatpush.msra.mxu0 0.0
    %1060 = vmatpush.msra.mxu0 0.0
    %1061 = vmatpush.msra.mxu0 0.0
    %1062 = vmatpush.msra.mxu0 0.0
    %1063 = vmatpush.msra.mxu0 0.0
    %1064 = vmatpush.msra.mxu0 0.0
    %1065 = vmatpush.msra.mxu0 0.0
    %1066 = vmatpush.msra.mxu0 0.0
    %1067 = vmatpush.msra.mxu0 0.0
    %1068 = vmatpush.msra.mxu0 0.0
    %1069 = vmatpush.msra.mxu0 0.0
    %1070 = vmatpush.msra.mxu0 0.0
    %1071 = vmatpush.msra.mxu0 0.0
    %1072 = vmatpush.msra.mxu0 %v1055
    %1073 = vmatmul.f32.gmra.mxu0 %v1052
    %v1074 = vpop.f32.mrf.mxu0
    %v1075 = vadd.f32 0.0, %v1074
    %1076 = vdwg.mxu0
    %v1077 = vmul.f32 %v923, %v1075
    %v1078 = vld [vmem:[%s3 + $0x40] sm:$0xff]
    %v1080 = vsel %vm953, %v1078, 0
    %1082 = vmatpush.msra.mxu0 0.0
    %1083 = vmatpush.msra.mxu0 0.0
    %1084 = vmatpush.msra.mxu0 0.0
    %1085 = vmatpush.msra.mxu0 0.0
    %1086 = vmatpush.msra.mxu0 0.0
    %1087 = vmatpush.msra.mxu0 0.0
    %1088 = vmatpush.msra.mxu0 0.0
    %1089 = vmatpush.msra.mxu0 0.0
    %1090 = vmatpush.msra.mxu0 0.0
    %1091 = vmatpush.msra.mxu0 0.0
    %1092 = vmatpush.msra.mxu0 0.0
    %1093 = vmatpush.msra.mxu0 0.0
    %1094 = vmatpush.msra.mxu0 0.0
    %1095 = vmatpush.msra.mxu0 0.0
    %1096 = vmatpush.msra.mxu0 0.0
    %1097 = vmatpush.msra.mxu0 %v1077
    %1098 = vmatmul.f32.gmra.mxu0 %v1080
    %v1099 = vpop.f32.mrf.mxu0
    %v1100 = vadd.f32 0.0, %v1099
    %1101 = vdwg.mxu0
    %v1102 = vld [vmem:[%s3 + $0x48] sm:$0xff]
    %1103 = vadd.xlane.f32.xlu0 %v1100
    %v1104 = vpop.xlane.xlu0 %1103
    %v1105 = vmul.f32 %v1104, 0.0078125
    %v1106 = vmul.f32 %v1100, %v1100
    %1107 = vadd.xlane.f32.xlu0 %v1106
    %v1108 = vpop.xlane.xlu0 %1107
    %v1109 = vmul.f32 %v1108, 0.0078125
    %v1110 = vmul.f32 %v1105, %v1105
    %v1111 = vsub.f32 %v1109, %v1110
    %v1112 = vmax.f32 %v1111, 0.0
    %v1113 = vsub.f32 %v1100, %v1105
    %v1114 = vadd.f32 %v1112, 0.001
    %v1115 = vrsqrt.pop %v1114
    %v1116 = vmul.f32 %v1115, %v1114
    %v1117 = vmul.f32 %v1116, %v1115
    %v1118 = vmul.f32 0.5, %v1117
    %v1119 = vsub.f32 1.5, %v1118
    %v1120 = vmul.f32 %v1115, %v1119
    %vm1121 = vweird.f32 %v1114
    %vm1122 = vweird.f32 %v1115
    %vm1123 = vmor %vm1121, %vm1122
    %v1124 = vsel %vm1123, %v1115, %v1120
    %v1125 = vmul.f32 %v1113, %v1124
    %1127 = vset.pattern.permute.xlu0 0
    %1128 = vperm.xlu0 %1127, %v1102
    %v1129 = vpop.permute.xlu0 %1128
    %v1131 = vmul.f32 %v1125, %v1129
    %1132 = vset.pattern.permute.xlu0 1
    %1133 = vperm.xlu0 %1132, %v1102
    %v1134 = vpop.permute.xlu0 %1133
    %v1136 = vadd.f32 %v1131, %v1134
    %v1137 = vadd.f32 %v1136, %v119
    %v1138 = vld [vmem:[%s3 + $0x50] sm:$0xff]
    %v1139 = vld [vmem:[%s3 + $0x58] sm:$0xff]
    %v1140 = vld [vmem:[%s3 + $0x60] sm:$0xff]
    %v1141 = vld [vmem:[%s3 + $0x68] sm:$0xff]
    %v1143 = vsel %vm953, %v1138, 0
    %v1146 = vsel %vm953, %v1139, 0
    %v1149 = vsel %vm953, %v1140, 0
    %v1152 = vsel %vm953, %v1141, 0
    %1154 = vmatpush.msra.mxu0 0.0
    %1155 = vmatpush.msra.mxu0 0.0
    %1156 = vmatpush.msra.mxu0 0.0
    %1157 = vmatpush.msra.mxu0 0.0
    %1158 = vmatpush.msra.mxu0 0.0
    %1159 = vmatpush.msra.mxu0 0.0
    %1160 = vmatpush.msra.mxu0 0.0
    %1161 = vmatpush.msra.mxu0 0.0
    %1162 = vmatpush.msra.mxu0 0.0
    %1163 = vmatpush.msra.mxu0 0.0
    %1164 = vmatpush.msra.mxu0 0.0
    %1165 = vmatpush.msra.mxu0 0.0
    %1166 = vmatpush.msra.mxu0 0.0
    %1167 = vmatpush.msra.mxu0 0.0
    %1168 = vmatpush.msra.mxu0 0.0
    %1169 = vmatpush.msra.mxu0 %v1137
    %1170 = vmatmul.f32.gmra.mxu0 %v1143
    %v1171 = vpop.f32.mrf.mxu0
    %v1172 = vadd.f32 0.0, %v1171
    %1173 = vmatmul.f32.gmra.mxu0 %v1146
    %v1174 = vpop.f32.mrf.mxu0
    %v1175 = vadd.f32 0.0, %v1174
    %1176 = vmatmul.f32.gmra.mxu0 %v1149
    %v1177 = vpop.f32.mrf.mxu0
    %v1178 = vadd.f32 0.0, %v1177
    %1179 = vmatmul.f32.gmra.mxu0 %v1152
    %v1180 = vpop.f32.mrf.mxu0
    %v1181 = vadd.f32 0.0, %v1180
    %1182 = vdwg.mxu0
    %v1183 = vld [vmem:[%s3 + $0x70] sm:$0xff]
    %v1184 = vld [vmem:[%s3 + $0x78] sm:$0xff]
    %v1185 = vld [vmem:[%s3 + $0x80] sm:$0xff]
    %v1186 = vld [vmem:[%s3 + $0x88] sm:$0xff]
    %1187 = vadd.xlane.f32.xlu0 %v1172
    %v1188 = vpop.xlane.xlu0 %1187
    %1189 = vadd.xlane.f32.xlu0 %v1175
    %v1190 = vpop.xlane.xlu0 %1189
    %1191 = vadd.xlane.f32.xlu0 %v1178
    %v1192 = vpop.xlane.xlu0 %1191
    %1193 = vadd.xlane.f32.xlu0 %v1181
    %v1194 = vpop.xlane.xlu0 %1193
    %v1195 = vmul.f32 %v1188, 0.0078125
    %v1196 = vmul.f32 %v1190, 0.0078125
    %v1197 = vmul.f32 %v1192, 0.0078125
    %v1198 = vmul.f32 %v1194, 0.0078125
    %v1199 = vmul.f32 %v1172, %v1172
    %v1200 = vmul.f32 %v1175, %v1175
    %v1201 = vmul.f32 %v1178, %v1178
    %v1202 = vmul.f32 %v1181, %v1181
    %1203 = vadd.xlane.f32.xlu0 %v1199
    %v1204 = vpop.xlane.xlu0 %1203
    %1205 = vadd.xlane.f32.xlu0 %v1200
    %v1206 = vpop.xlane.xlu0 %1205
    %1207 = vadd.xlane.f32.xlu0 %v1201
    %v1208 = vpop.xlane.xlu0 %1207
    %1209 = vadd.xlane.f32.xlu0 %v1202
    %v1210 = vpop.xlane.xlu0 %1209
    %v1211 = vmul.f32 %v1204, 0.0078125
    %v1212 = vmul.f32 %v1206, 0.0078125
    %v1213 = vmul.f32 %v1208, 0.0078125
    %v1214 = vmul.f32 %v1210, 0.0078125
    %v1215 = vmul.f32 %v1195, %v1195
    %v1216 = vmul.f32 %v1196, %v1196
    %v1217 = vmul.f32 %v1197, %v1197
    %v1218 = vmul.f32 %v1198, %v1198
    %v1219 = vsub.f32 %v1211, %v1215
    %v1220 = vsub.f32 %v1212, %v1216
    %v1221 = vsub.f32 %v1213, %v1217
    %v1222 = vsub.f32 %v1214, %v1218
    %v1223 = vmax.f32 %v1219, 0.0
    %v1224 = vmax.f32 %v1220, 0.0
    %v1225 = vmax.f32 %v1221, 0.0
    %v1226 = vmax.f32 %v1222, 0.0
    %v1227 = vsub.f32 %v1172, %v1195
    %v1228 = vsub.f32 %v1175, %v1196
    %v1229 = vsub.f32 %v1178, %v1197
    %v1230 = vsub.f32 %v1181, %v1198
    %v1231 = vadd.f32 %v1223, 0.001
    %v1232 = vadd.f32 %v1224, 0.001
    %v1233 = vadd.f32 %v1225, 0.001
    %v1234 = vadd.f32 %v1226, 0.001
    %v1235 = vrsqrt.pop %v1231
    %v1236 = vmul.f32 %v1235, %v1231
    %v1237 = vmul.f32 %v1236, %v1235
    %v1238 = vmul.f32 0.5, %v1237
    %v1239 = vsub.f32 1.5, %v1238
    %v1240 = vmul.f32 %v1235, %v1239
    %vm1241 = vweird.f32 %v1231
    %vm1242 = vweird.f32 %v1235
    %vm1243 = vmor %vm1241, %vm1242
    %v1244 = vsel %vm1243, %v1235, %v1240
    %v1245 = vrsqrt.pop %v1232
    %v1246 = vmul.f32 %v1245, %v1232
    %v1247 = vmul.f32 %v1246, %v1245
    %v1248 = vmul.f32 0.5, %v1247
    %v1249 = vsub.f32 1.5, %v1248
    %v1250 = vmul.f32 %v1245, %v1249
    %vm1251 = vweird.f32 %v1232
    %vm1252 = vweird.f32 %v1245
    %vm1253 = vmor %vm1251, %vm1252
    %v1254 = vsel %vm1253, %v1245, %v1250
    %v1255 = vrsqrt.pop %v1233
    %v1256 = vmul.f32 %v1255, %v1233
    %v1257 = vmul.f32 %v1256, %v1255
    %v1258 = vmul.f32 0.5, %v1257
    %v1259 = vsub.f32 1.5, %v1258
    %v1260 = vmul.f32 %v1255, %v1259
    %vm1261 = vweird.f32 %v1233
    %vm1262 = vweird.f32 %v1255
    %vm1263 = vmor %vm1261, %vm1262
    %v1264 = vsel %vm1263, %v1255, %v1260
    %v1265 = vrsqrt.pop %v1234
    %v1266 = vmul.f32 %v1265, %v1234
    %v1267 = vmul.f32 %v1266, %v1265
    %v1268 = vmul.f32 0.5, %v1267
    %v1269 = vsub.f32 1.5, %v1268
    %v1270 = vmul.f32 %v1265, %v1269
    %vm1271 = vweird.f32 %v1234
    %vm1272 = vweird.f32 %v1265
    %vm1273 = vmor %vm1271, %vm1272
    %v1274 = vsel %vm1273, %v1265, %v1270
    %v1275 = vmul.f32 %v1227, %v1244
    %v1276 = vmul.f32 %v1228, %v1254
    %v1277 = vmul.f32 %v1229, %v1264
    %v1278 = vmul.f32 %v1230, %v1274
    %1280 = vset.pattern.permute.xlu0 0
    %1281 = vperm.xlu0 %1280, %v1183
    %v1282 = vpop.permute.xlu0 %1281
    %1285 = vset.pattern.permute.xlu0 0
    %1286 = vperm.xlu0 %1285, %v1184
    %v1287 = vpop.permute.xlu0 %1286
    %1290 = vset.pattern.permute.xlu0 0
    %1291 = vperm.xlu0 %1290, %v1185
    %v1292 = vpop.permute.xlu0 %1291
    %1295 = vset.pattern.permute.xlu0 0
    %1296 = vperm.xlu0 %1295, %v1186
    %v1297 = vpop.permute.xlu0 %1296
    %v1299 = vmul.f32 %v1275, %v1282
    %v1300 = vmul.f32 %v1276, %v1287
    %v1301 = vmul.f32 %v1277, %v1292
    %v1302 = vmul.f32 %v1278, %v1297
    %1303 = vset.pattern.permute.xlu0 1
    %1304 = vperm.xlu0 %1303, %v1183
    %v1305 = vpop.permute.xlu0 %1304
    %1307 = vset.pattern.permute.xlu0 1
    %1308 = vperm.xlu0 %1307, %v1184
    %v1309 = vpop.permute.xlu0 %1308
    %1311 = vset.pattern.permute.xlu0 1
    %1312 = vperm.xlu0 %1311, %v1185
    %v1313 = vpop.permute.xlu0 %1312
    %1315 = vset.pattern.permute.xlu0 1
    %1316 = vperm.xlu0 %1315, %v1186
    %v1317 = vpop.permute.xlu0 %1316
    %v1319 = vadd.f32 %v1299, %v1305
    %v1320 = vadd.f32 %v1300, %v1309
    %v1321 = vadd.f32 %v1301, %v1313
    %v1322 = vadd.f32 %v1302, %v1317
    %v1323 = vxor.u32 %v1319, 2147483648
    %v1324 = vxor.u32 %v1320, 2147483648
    %v1325 = vxor.u32 %v1321, 2147483648
    %v1326 = vxor.u32 %v1322, 2147483648
    %v1327 = vmul.f32 %v1323, 1.442695
    %v1328 = vpow.pop %v1327
    %v1329 = vmul.f32 %v1324, 1.442695
    %v1330 = vpow.pop %v1329
    %v1331 = vmul.f32 %v1325, 1.442695
    %v1332 = vpow.pop %v1331
    %v1333 = vmul.f32 %v1326, 1.442695
    %v1334 = vpow.pop %v1333
    %v1335 = vadd.f32 %v1328, 1.0
    %v1336 = vadd.f32 %v1330, 1.0
    %v1337 = vadd.f32 %v1332, 1.0
    %v1338 = vadd.f32 %v1334, 1.0
    %v1339 = vrcp.pop %v1335
    %v1340 = vmul.f32 %v1335, %v1339
    %v1341 = vsub.f32 1.0, %v1340
    %v1342 = vmul.f32 %v1339, %v1341
    %v1343 = vadd.f32 %v1339, %v1342
    %vm1344 = vweird.f32 %v1335
    %vm1345 = vweird.f32 %v1339
    %vm1346 = vmor %vm1344, %vm1345
    %v1347 = vsel %vm1346, %v1339, %v1343
    %v1348 = vand.u32 2147483647, %v1335
    %vm1349 = vcmp.eq.f32.partialorder %v1348, 8.507059e+37
    %v1350 = vand.u32 %v1335, 2147483648
    %v1351 = vor.u32 1.1754944e-38, %v1350
    %v1352 = vsel %vm1349, %v1351, %v1347
    %v1353 = vmul.f32 1.0, %v1352
    %v1354 = vrcp.pop %v1336
    %v1355 = vmul.f32 %v1336, %v1354
    %v1356 = vsub.f32 1.0, %v1355
    %v1357 = vmul.f32 %v1354, %v1356
    %v1358 = vadd.f32 %v1354, %v1357
    %vm1359 = vweird.f32 %v1336
    %vm1360 = vweird.f32 %v1354
    %vm1361 = vmor %vm1359, %vm1360
    %v1362 = vsel %vm1361, %v1354, %v1358
    %v1363 = vand.u32 2147483647, %v1336
    %vm1364 = vcmp.eq.f32.partialorder %v1363, 8.507059e+37
    %v1365 = vand.u32 %v1336, 2147483648
    %v1366 = vor.u32 1.1754944e-38, %v1365
    %v1367 = vsel %vm1364, %v1366, %v1362
    %v1368 = vmul.f32 1.0, %v1367
    %v1369 = vrcp.pop %v1337
    %v1370 = vmul.f32 %v1337, %v1369
    %v1371 = vsub.f32 1.0, %v1370
    %v1372 = vmul.f32 %v1369, %v1371
    %v1373 = vadd.f32 %v1369, %v1372
    %vm1374 = vweird.f32 %v1337
    %vm1375 = vweird.f32 %v1369
    %vm1376 = vmor %vm1374, %vm1375
    %v1377 = vsel %vm1376, %v1369, %v1373
    %v1378 = vand.u32 2147483647, %v1337
    %vm1379 = vcmp.eq.f32.partialorder %v1378, 8.507059e+37
    %v1380 = vand.u32 %v1337, 2147483648
    %v1381 = vor.u32 1.1754944e-38, %v1380
    %v1382 = vsel %vm1379, %v1381, %v1377
    %v1383 = vmul.f32 1.0, %v1382
    %v1384 = vrcp.pop %v1338
    %v1385 = vmul.f32 %v1338, %v1384
    %v1386 = vsub.f32 1.0, %v1385
    %v1387 = vmul.f32 %v1384, %v1386
    %v1388 = vadd.f32 %v1384, %v1387
    %vm1389 = vweird.f32 %v1338
    %vm1390 = vweird.f32 %v1384
    %vm1391 = vmor %vm1389, %vm1390
    %v1392 = vsel %vm1391, %v1384, %v1388
    %v1393 = vand.u32 2147483647, %v1338
    %vm1394 = vcmp.eq.f32.partialorder %v1393, 8.507059e+37
    %v1395 = vand.u32 %v1338, 2147483648
    %v1396 = vor.u32 1.1754944e-38, %v1395
    %v1397 = vsel %vm1394, %v1396, %v1392
    %v1398 = vmul.f32 1.0, %v1397
    %v1399 = vmul.f32 %v1319, %v1353
    %v1400 = vmul.f32 %v1320, %v1368
    %v1401 = vmul.f32 %v1321, %v1383
    %v1402 = vmul.f32 %v1322, %v1398
    %v1403 = vld [vmem:[%s3 + $0x90] sm:$0xff]
    %v1404 = vld [vmem:[%s3 + $0x98] sm:$0xff]
    %v1405 = vld [vmem:[%s3 + $0xa0] sm:$0xff]
    %v1406 = vld [vmem:[%s3 + $0xa8] sm:$0xff]
    %1408 = vset.pattern.permute.xlu0 0
    %1409 = vperm.xlu0 %1408, %v1403
    %v1410 = vpop.permute.xlu0 %1409
    %1413 = vset.pattern.permute.xlu0 0
    %1414 = vperm.xlu0 %1413, %v1404
    %v1415 = vpop.permute.xlu0 %1414
    %1418 = vset.pattern.permute.xlu0 0
    %1419 = vperm.xlu0 %1418, %v1405
    %v1420 = vpop.permute.xlu0 %1419
    %1423 = vset.pattern.permute.xlu0 0
    %1424 = vperm.xlu0 %1423, %v1406
    %v1425 = vpop.permute.xlu0 %1424
    %v1427 = vmul.f32 %v1399, %v1410
    %v1428 = vmul.f32 %v1400, %v1415
    %v1429 = vmul.f32 %v1401, %v1420
    %v1430 = vmul.f32 %v1402, %v1425
    %1431 = vset.pattern.permute.xlu0 1
    %1432 = vperm.xlu0 %1431, %v1403
    %v1433 = vpop.permute.xlu0 %1432
    %1435 = vset.pattern.permute.xlu0 1
    %1436 = vperm.xlu0 %1435, %v1404
    %v1437 = vpop.permute.xlu0 %1436
    %1439 = vset.pattern.permute.xlu0 1
    %1440 = vperm.xlu0 %1439, %v1405
    %v1441 = vpop.permute.xlu0 %1440
    %1443 = vset.pattern.permute.xlu0 1
    %1444 = vperm.xlu0 %1443, %v1406
    %v1445 = vpop.permute.xlu0 %1444
    %v1447 = vmul.f32 %v1399, %v1433
    %v1448 = vmul.f32 %v1400, %v1437
    %v1449 = vmul.f32 %v1401, %v1441
    %v1450 = vmul.f32 %v1402, %v1445
    %1451 = vset.pattern.permute.xlu0 2
    %1452 = vperm.xlu0 %1451, %v1403
    %v1453 = vpop.permute.xlu0 %1452
    %1455 = vset.pattern.permute.xlu0 2
    %1456 = vperm.xlu0 %1455, %v1404
    %v1457 = vpop.permute.xlu0 %1456
    %1459 = vset.pattern.permute.xlu0 2
    %1460 = vperm.xlu0 %1459, %v1405
    %v1461 = vpop.permute.xlu0 %1460
    %1463 = vset.pattern.permute.xlu0 2
    %1464 = vperm.xlu0 %1463, %v1406
    %v1465 = vpop.permute.xlu0 %1464
    %v1467 = vmul.f32 %v1399, %v1453
    %v1468 = vmul.f32 %v1400, %v1457
    %v1469 = vmul.f32 %v1401, %v1461
    %v1470 = vmul.f32 %v1402, %v1465
    %1471 = vset.pattern.permute.xlu0 3
    %1472 = vperm.xlu0 %1471, %v1403
    %v1473 = vpop.permute.xlu0 %1472
    %1475 = vset.pattern.permute.xlu0 3
    %1476 = vperm.xlu0 %1475, %v1404
    %v1477 = vpop.permute.xlu0 %1476
    %1479 = vset.pattern.permute.xlu0 3
    %1480 = vperm.xlu0 %1479, %v1405
    %v1481 = vpop.permute.xlu0 %1480
    %1483 = vset.pattern.permute.xlu0 3
    %1484 = vperm.xlu0 %1483, %v1406
    %v1485 = vpop.permute.xlu0 %1484
    %v1487 = vmul.f32 %v1399, %v1473
    %v1488 = vmul.f32 %v1400, %v1477
    %v1489 = vmul.f32 %v1401, %v1481
    %v1490 = vmul.f32 %v1402, %v1485
    %1491 = vset.pattern.permute.xlu0 4
    %1492 = vperm.xlu0 %1491, %v1403
    %v1493 = vpop.permute.xlu0 %1492
    %1495 = vset.pattern.permute.xlu0 4
    %1496 = vperm.xlu0 %1495, %v1404
    %v1497 = vpop.permute.xlu0 %1496
    %1499 = vset.pattern.permute.xlu0 4
    %1500 = vperm.xlu0 %1499, %v1405
    %v1501 = vpop.permute.xlu0 %1500
    %1503 = vset.pattern.permute.xlu0 4
    %1504 = vperm.xlu0 %1503, %v1406
    %v1505 = vpop.permute.xlu0 %1504
    %v1507 = vmul.f32 %v1399, %v1493
    %v1508 = vmul.f32 %v1400, %v1497
    %v1509 = vmul.f32 %v1401, %v1501
    %v1510 = vmul.f32 %v1402, %v1505
    %1511 = vset.pattern.permute.xlu0 5
    %1512 = vperm.xlu0 %1511, %v1403
    %v1513 = vpop.permute.xlu0 %1512
    %1515 = vset.pattern.permute.xlu0 5
    %1516 = vperm.xlu0 %1515, %v1404
    %v1517 = vpop.permute.xlu0 %1516
    %1519 = vset.pattern.permute.xlu0 5
    %1520 = vperm.xlu0 %1519, %v1405
    %v1521 = vpop.permute.xlu0 %1520
    %1523 = vset.pattern.permute.xlu0 5
    %1524 = vperm.xlu0 %1523, %v1406
    %v1525 = vpop.permute.xlu0 %1524
    %v1527 = vmul.f32 %v1399, %v1513
    %v1528 = vmul.f32 %v1400, %v1517
    %v1529 = vmul.f32 %v1401, %v1521
    %v1530 = vmul.f32 %v1402, %v1525
    %1531 = vset.pattern.permute.xlu0 6
    %1532 = vperm.xlu0 %1531, %v1403
    %v1533 = vpop.permute.xlu0 %1532
    %1535 = vset.pattern.permute.xlu0 6
    %1536 = vperm.xlu0 %1535, %v1404
    %v1537 = vpop.permute.xlu0 %1536
    %1539 = vset.pattern.permute.xlu0 6
    %1540 = vperm.xlu0 %1539, %v1405
    %v1541 = vpop.permute.xlu0 %1540
    %1543 = vset.pattern.permute.xlu0 6
    %1544 = vperm.xlu0 %1543, %v1406
    %v1545 = vpop.permute.xlu0 %1544
    %v1547 = vmul.f32 %v1399, %v1533
    %v1548 = vmul.f32 %v1400, %v1537
    %v1549 = vmul.f32 %v1401, %v1541
    %v1550 = vmul.f32 %v1402, %v1545
    %1551 = vset.pattern.permute.xlu0 7
    %1552 = vperm.xlu0 %1551, %v1403
    %v1553 = vpop.permute.xlu0 %1552
    %1555 = vset.pattern.permute.xlu0 7
    %1556 = vperm.xlu0 %1555, %v1404
    %v1557 = vpop.permute.xlu0 %1556
    %1559 = vset.pattern.permute.xlu0 7
    %1560 = vperm.xlu0 %1559, %v1405
    %v1561 = vpop.permute.xlu0 %1560
    %1563 = vset.pattern.permute.xlu0 7
    %1564 = vperm.xlu0 %1563, %v1406
    %v1565 = vpop.permute.xlu0 %1564
    %v1567 = vmul.f32 %v1399, %v1553
    %v1568 = vmul.f32 %v1400, %v1557
    %v1569 = vmul.f32 %v1401, %v1561
    %v1570 = vmul.f32 %v1402, %v1565
    %1571 = vset.pattern.permute.xlu0 8
    %1572 = vperm.xlu0 %1571, %v1403
    %v1573 = vpop.permute.xlu0 %1572
    %1575 = vset.pattern.permute.xlu0 8
    %1576 = vperm.xlu0 %1575, %v1404
    %v1577 = vpop.permute.xlu0 %1576
    %1579 = vset.pattern.permute.xlu0 8
    %1580 = vperm.xlu0 %1579, %v1405
    %v1581 = vpop.permute.xlu0 %1580
    %1583 = vset.pattern.permute.xlu0 8
    %1584 = vperm.xlu0 %1583, %v1406
    %v1585 = vpop.permute.xlu0 %1584
    %v1587 = vmul.f32 %v1399, %v1573
    %v1588 = vmul.f32 %v1400, %v1577
    %v1589 = vmul.f32 %v1401, %v1581
    %v1590 = vmul.f32 %v1402, %v1585
    %v1591 = vpack.c.bf16 %v1428, %v1427
    %v1592 = vpack.c.bf16 %v1448, %v1447
    %v1593 = vpack.c.bf16 %v1468, %v1467
    %v1594 = vpack.c.bf16 %v1488, %v1487
    %v1595 = vpack.c.bf16 %v1508, %v1507
    %v1596 = vpack.c.bf16 %v1528, %v1527
    %v1597 = vpack.c.bf16 %v1548, %v1547
    %v1598 = vpack.c.bf16 %v1568, %v1567
    %v1599 = vpack.c.bf16 %v1588, %v1587
    %v1600 = vpack.c.bf16 %v1430, %v1429
    %v1601 = vpack.c.bf16 %v1450, %v1449
    %v1602 = vpack.c.bf16 %v1470, %v1469
    %v1603 = vpack.c.bf16 %v1490, %v1489
    %v1604 = vpack.c.bf16 %v1510, %v1509
    %v1605 = vpack.c.bf16 %v1530, %v1529
    %v1606 = vpack.c.bf16 %v1550, %v1549
    %v1607 = vpack.c.bf16 %v1570, %v1569
    %v1608 = vpack.c.bf16 %v1590, %v1589
    %v1609 = vld [vmem:[%s2] sm:$0xf]
    %v1610 = vld [vmem:[%s2 + $0x4] sm:$0xf]
    %v1611 = vld [vmem:[%s2 + $0x8] sm:$0xf]
    %v1612 = vld [vmem:[%s2 + $0xc] sm:$0xf]
    %v1613 = vld [vmem:[%s2 + $0x10] sm:$0xf]
    %v1614 = vld [vmem:[%s2 + $0x14] sm:$0xf]
    %v1615 = vld [vmem:[%s2 + $0x18] sm:$0xf]
    %v1616 = vld [vmem:[%s2 + $0x1c] sm:$0xf]
    %v1617 = vld [vmem:[%s2 + $0x20] sm:$0xf]
    %v1618 = vld [vmem:[%s2 + $0x24] sm:$0xf]
    %v1619 = vld [vmem:[%s2 + $0x28] sm:$0xf]
    %v1620 = vld [vmem:[%s2 + $0x2c] sm:$0xf]
    %v1621 = vld [vmem:[%s2 + $0x30] sm:$0xf]
    %v1622 = vld [vmem:[%s2 + $0x34] sm:$0xf]
    %v1623 = vld [vmem:[%s2 + $0x38] sm:$0xf]
    %v1624 = vld [vmem:[%s2 + $0x3c] sm:$0xf]
    %v1625 = vld [vmem:[%s2 + $0x40] sm:$0xf]
    %v1626 = vld [vmem:[%s2 + $0x44] sm:$0xf]
    %v1627 = vld [vmem:[%s2 + $0x48] sm:$0xf]
    %v1628 = vld [vmem:[%s2 + $0x4c] sm:$0xf]
    %v1629 = vld [vmem:[%s2 + $0x50] sm:$0xf]
    %v1630 = vld [vmem:[%s2 + $0x54] sm:$0xf]
    %v1631 = vld [vmem:[%s2 + $0x58] sm:$0xf]
    %v1632 = vld [vmem:[%s2 + $0x5c] sm:$0xf]
    %v1633 = vld [vmem:[%s2 + $0x60] sm:$0xf]
    %v1634 = vld [vmem:[%s2 + $0x64] sm:$0xf]
    %v1635 = vld [vmem:[%s2 + $0x68] sm:$0xf]
    %v1636 = vld [vmem:[%s2 + $0x6c] sm:$0xf]
    %v1637 = vld [vmem:[%s2 + $0x70] sm:$0xf]
    %v1638 = vld [vmem:[%s2 + $0x74] sm:$0xf]
    %v1639 = vld [vmem:[%s2 + $0x78] sm:$0xf]
    %v1640 = vld [vmem:[%s2 + $0x7c] sm:$0xf]
    %v1641 = vld [vmem:[%s2 + $0x80] sm:$0xf]
    %v1642 = vld [vmem:[%s2 + $0x84] sm:$0xf]
    %v1643 = vld [vmem:[%s2 + $0x88] sm:$0xf]
    %v1644 = vld [vmem:[%s2 + $0x8c] sm:$0xf]
    %v1645 = vld [vmem:[%s2 + $0x90] sm:$0xf]
    %v1646 = vld [vmem:[%s2 + $0x94] sm:$0xf]
    %v1647 = vld [vmem:[%s2 + $0x98] sm:$0xf]
    %v1648 = vld [vmem:[%s2 + $0x9c] sm:$0xf]
    %v1649 = vld [vmem:[%s2 + $0xa0] sm:$0xf]
    %v1650 = vld [vmem:[%s2 + $0xa4] sm:$0xf]
    %v1651 = vld [vmem:[%s2 + $0xa8] sm:$0xf]
    %v1652 = vld [vmem:[%s2 + $0xac] sm:$0xf]
    %v1653 = vld [vmem:[%s2 + $0xb0] sm:$0xf]
    %v1654 = vld [vmem:[%s2 + $0xb4] sm:$0xf]
    %v1655 = vld [vmem:[%s2 + $0xb8] sm:$0xf]
    %v1656 = vld [vmem:[%s2 + $0xbc] sm:$0xf]
    %v1657 = vld [vmem:[%s2 + $0xc0] sm:$0xf]
    %v1658 = vld [vmem:[%s2 + $0xc4] sm:$0xf]
    %v1659 = vld [vmem:[%s2 + $0xc8] sm:$0xf]
    %v1660 = vld [vmem:[%s2 + $0xcc] sm:$0xf]
    %v1661 = vld [vmem:[%s2 + $0xd0] sm:$0xf]
    %v1662 = vld [vmem:[%s2 + $0xd4] sm:$0xf]
    %v1663 = vld [vmem:[%s2 + $0xd8] sm:$0xf]
    %v1664 = vld [vmem:[%s2 + $0xdc] sm:$0xf]
    %v1665 = vld [vmem:[%s2 + $0xe0] sm:$0xf]
    %v1666 = vld [vmem:[%s2 + $0xe4] sm:$0xf]
    %v1667 = vld [vmem:[%s2 + $0xe8] sm:$0xf]
    %v1668 = vld [vmem:[%s2 + $0xec] sm:$0xf]
    %v1669 = vld [vmem:[%s2 + $0xf0] sm:$0xf]
    %v1670 = vld [vmem:[%s2 + $0xf4] sm:$0xf]
    %v1671 = vld [vmem:[%s2 + $0xf8] sm:$0xf]
    %v1672 = vld [vmem:[%s2 + $0xfc] sm:$0xf]
    %v1673 = vld [vmem:[%s2 + $0x100] sm:$0xf]
    %v1674 = vld [vmem:[%s2 + $0x104] sm:$0xf]
    %v1675 = vld [vmem:[%s2 + $0x108] sm:$0xf]
    %v1676 = vld [vmem:[%s2 + $0x10c] sm:$0xf]
    %v1677 = vld [vmem:[%s2 + $0x110] sm:$0xf]
    %v1678 = vld [vmem:[%s2 + $0x114] sm:$0xf]
    %v1679 = vld [vmem:[%s2 + $0x118] sm:$0xf]
    %v1680 = vld [vmem:[%s2 + $0x11c] sm:$0xf]
    %v1681 = vld [vmem:[%s2 + $0x120] sm:$0xf]
    %v1682 = vld [vmem:[%s2 + $0x124] sm:$0xf]
    %v1683 = vld [vmem:[%s2 + $0x128] sm:$0xf]
    %v1684 = vld [vmem:[%s2 + $0x12c] sm:$0xf]
    %v1685 = vld [vmem:[%s2 + $0x130] sm:$0xf]
    %v1686 = vld [vmem:[%s2 + $0x134] sm:$0xf]
    %v1687 = vld [vmem:[%s2 + $0x138] sm:$0xf]
    %v1688 = vld [vmem:[%s2 + $0x13c] sm:$0xf]
    %v1689 = vld [vmem:[%s2 + $0x140] sm:$0xf]
    %v1690 = vld [vmem:[%s2 + $0x144] sm:$0xf]
    %v1691 = vld [vmem:[%s2 + $0x148] sm:$0xf]
    %v1692 = vld [vmem:[%s2 + $0x14c] sm:$0xf]
    %v1693 = vld [vmem:[%s2 + $0x150] sm:$0xf]
    %v1694 = vld [vmem:[%s2 + $0x154] sm:$0xf]
    %v1695 = vld [vmem:[%s2 + $0x158] sm:$0xf]
    %v1696 = vld [vmem:[%s2 + $0x15c] sm:$0xf]
    %v1697 = vld [vmem:[%s2 + $0x160] sm:$0xf]
    %v1698 = vld [vmem:[%s2 + $0x164] sm:$0xf]
    %v1699 = vld [vmem:[%s2 + $0x168] sm:$0xf]
    %v1700 = vld [vmem:[%s2 + $0x16c] sm:$0xf]
    %v1701 = vld [vmem:[%s2 + $0x170] sm:$0xf]
    %v1702 = vld [vmem:[%s2 + $0x174] sm:$0xf]
    %v1703 = vld [vmem:[%s2 + $0x178] sm:$0xf]
    %v1704 = vld [vmem:[%s2 + $0x17c] sm:$0xf]
    %v1705 = vld [vmem:[%s2 + $0x180] sm:$0xf]
    %v1706 = vld [vmem:[%s2 + $0x184] sm:$0xf]
    %v1707 = vld [vmem:[%s2 + $0x188] sm:$0xf]
    %v1708 = vld [vmem:[%s2 + $0x18c] sm:$0xf]
    %v1709 = vld [vmem:[%s2 + $0x190] sm:$0xf]
    %v1710 = vld [vmem:[%s2 + $0x194] sm:$0xf]
    %v1711 = vld [vmem:[%s2 + $0x198] sm:$0xf]
    %v1712 = vld [vmem:[%s2 + $0x19c] sm:$0xf]
    %v1713 = vld [vmem:[%s2 + $0x1a0] sm:$0xf]
    %v1714 = vld [vmem:[%s2 + $0x1a4] sm:$0xf]
    %v1715 = vld [vmem:[%s2 + $0x1a8] sm:$0xf]
    %v1716 = vld [vmem:[%s2 + $0x1ac] sm:$0xf]
    %v1717 = vld [vmem:[%s2 + $0x1b0] sm:$0xf]
    %v1718 = vld [vmem:[%s2 + $0x1b4] sm:$0xf]
    %v1719 = vld [vmem:[%s2 + $0x1b8] sm:$0xf]
    %v1720 = vld [vmem:[%s2 + $0x1bc] sm:$0xf]
    %v1721 = vld [vmem:[%s2 + $0x1c0] sm:$0xf]
    %v1722 = vld [vmem:[%s2 + $0x1c4] sm:$0xf]
    %v1723 = vld [vmem:[%s2 + $0x1c8] sm:$0xf]
    %v1724 = vld [vmem:[%s2 + $0x1cc] sm:$0xf]
    %v1725 = vld [vmem:[%s2 + $0x1d0] sm:$0xf]
    %v1726 = vld [vmem:[%s2 + $0x1d4] sm:$0xf]
    %v1727 = vld [vmem:[%s2 + $0x1d8] sm:$0xf]
    %v1728 = vld [vmem:[%s2 + $0x1dc] sm:$0xf]
    %v1729 = vld [vmem:[%s2 + $0x1e0] sm:$0xf]
    %v1730 = vld [vmem:[%s2 + $0x1e4] sm:$0xf]
    %v1731 = vld [vmem:[%s2 + $0x1e8] sm:$0xf]
    %v1732 = vld [vmem:[%s2 + $0x1ec] sm:$0xf]
    %v1733 = vld [vmem:[%s2 + $0x1f0] sm:$0xf]
    %v1734 = vld [vmem:[%s2 + $0x1f4] sm:$0xf]
    %v1735 = vld [vmem:[%s2 + $0x1f8] sm:$0xf]
    %v1736 = vld [vmem:[%s2 + $0x1fc] sm:$0xf]
    %v1737 = vld [vmem:[%s2 + $0x200] sm:$0xf]
    %v1738 = vld [vmem:[%s2 + $0x204] sm:$0xf]
    %v1739 = vld [vmem:[%s2 + $0x208] sm:$0xf]
    %v1740 = vld [vmem:[%s2 + $0x20c] sm:$0xf]
    %v1741 = vld [vmem:[%s2 + $0x210] sm:$0xf]
    %v1742 = vld [vmem:[%s2 + $0x214] sm:$0xf]
    %v1743 = vld [vmem:[%s2 + $0x218] sm:$0xf]
    %v1744 = vld [vmem:[%s2 + $0x21c] sm:$0xf]
    %v1745 = vld [vmem:[%s2 + $0x220] sm:$0xf]
    %v1746 = vld [vmem:[%s2 + $0x224] sm:$0xf]
    %v1747 = vld [vmem:[%s2 + $0x228] sm:$0xf]
    %v1748 = vld [vmem:[%s2 + $0x22c] sm:$0xf]
    %v1749 = vld [vmem:[%s2 + $0x230] sm:$0xf]
    %v1750 = vld [vmem:[%s2 + $0x234] sm:$0xf]
    %v1751 = vld [vmem:[%s2 + $0x238] sm:$0xf]
    %v1752 = vld [vmem:[%s2 + $0x23c] sm:$0xf]
    %v1897 = vunpack.c.l.b16 %v1609
    %v1898 = vunpack.c.l.b16 %v1610
    %v1899 = vunpack.c.l.b16 %v1611
    %v1900 = vunpack.c.l.b16 %v1612
    %v1901 = vunpack.c.l.b16 %v1613
    %v1902 = vunpack.c.l.b16 %v1614
    %v1903 = vunpack.c.l.b16 %v1615
    %v1904 = vunpack.c.l.b16 %v1616
    %v1905 = vunpack.c.l.b16 %v1617
    %v1906 = vunpack.c.l.b16 %v1618
    %v1907 = vunpack.c.l.b16 %v1619
    %v1908 = vunpack.c.l.b16 %v1620
    %v1909 = vunpack.c.l.b16 %v1621
    %v1910 = vunpack.c.l.b16 %v1622
    %v1911 = vunpack.c.l.b16 %v1623
    %v1912 = vunpack.c.l.b16 %v1624
    %v1913 = vunpack.c.l.b16 %v1625
    %v1914 = vunpack.c.l.b16 %v1626
    %v1915 = vunpack.c.l.b16 %v1627
    %v1916 = vunpack.c.l.b16 %v1628
    %v1917 = vunpack.c.l.b16 %v1629
    %v1918 = vunpack.c.l.b16 %v1630
    %v1919 = vunpack.c.l.b16 %v1631
    %v1920 = vunpack.c.l.b16 %v1632
    %v1921 = vunpack.c.l.b16 %v1633
    %v1922 = vunpack.c.l.b16 %v1634
    %v1923 = vunpack.c.l.b16 %v1635
    %v1924 = vunpack.c.l.b16 %v1636
    %v1925 = vunpack.c.l.b16 %v1637
    %v1926 = vunpack.c.l.b16 %v1638
    %v1927 = vunpack.c.l.b16 %v1639
    %v1928 = vunpack.c.l.b16 %v1640
    %v1929 = vunpack.c.l.b16 %v1641
    %v1930 = vunpack.c.l.b16 %v1642
    %v1931 = vunpack.c.l.b16 %v1643
    %v1932 = vunpack.c.l.b16 %v1644
    %v1933 = vunpack.c.l.b16 %v1645
    %v1934 = vunpack.c.l.b16 %v1646
    %v1935 = vunpack.c.l.b16 %v1647
    %v1936 = vunpack.c.l.b16 %v1648
    %v1937 = vunpack.c.l.b16 %v1649
    %v1938 = vunpack.c.l.b16 %v1650
    %v1939 = vunpack.c.l.b16 %v1651
    %v1940 = vunpack.c.l.b16 %v1652
    %v1941 = vunpack.c.l.b16 %v1653
    %v1942 = vunpack.c.l.b16 %v1654
    %v1943 = vunpack.c.l.b16 %v1655
    %v1944 = vunpack.c.l.b16 %v1656
    %v1945 = vunpack.c.l.b16 %v1657
    %v1946 = vunpack.c.l.b16 %v1658
    %v1947 = vunpack.c.l.b16 %v1659
    %v1948 = vunpack.c.l.b16 %v1660
    %v1949 = vunpack.c.l.b16 %v1661
    %v1950 = vunpack.c.l.b16 %v1662
    %v1951 = vunpack.c.l.b16 %v1663
    %v1952 = vunpack.c.l.b16 %v1664
    %v1953 = vunpack.c.l.b16 %v1665
    %v1954 = vunpack.c.l.b16 %v1666
    %v1955 = vunpack.c.l.b16 %v1667
    %v1956 = vunpack.c.l.b16 %v1668
    %v1957 = vunpack.c.l.b16 %v1669
    %v1958 = vunpack.c.l.b16 %v1670
    %v1959 = vunpack.c.l.b16 %v1671
    %v1960 = vunpack.c.l.b16 %v1672
    %v1961 = vunpack.c.l.b16 %v1673
    %v1962 = vunpack.c.l.b16 %v1674
    %v1963 = vunpack.c.l.b16 %v1675
    %v1964 = vunpack.c.l.b16 %v1676
    %v1965 = vunpack.c.l.b16 %v1677
    %v1966 = vunpack.c.l.b16 %v1678
    %v1967 = vunpack.c.l.b16 %v1679
    %v1968 = vunpack.c.l.b16 %v1680
    %v1969 = vunpack.c.l.b16 %v1681
    %v1970 = vunpack.c.l.b16 %v1682
    %v1971 = vunpack.c.l.b16 %v1683
    %v1972 = vunpack.c.l.b16 %v1684
    %v1973 = vunpack.c.l.b16 %v1685
    %v1974 = vunpack.c.l.b16 %v1686
    %v1975 = vunpack.c.l.b16 %v1687
    %v1976 = vunpack.c.l.b16 %v1688
    %v1977 = vunpack.c.l.b16 %v1689
    %v1978 = vunpack.c.l.b16 %v1690
    %v1979 = vunpack.c.l.b16 %v1691
    %v1980 = vunpack.c.l.b16 %v1692
    %v1981 = vunpack.c.l.b16 %v1693
    %v1982 = vunpack.c.l.b16 %v1694
    %v1983 = vunpack.c.l.b16 %v1695
    %v1984 = vunpack.c.l.b16 %v1696
    %v1985 = vunpack.c.l.b16 %v1697
    %v1986 = vunpack.c.l.b16 %v1698
    %v1987 = vunpack.c.l.b16 %v1699
    %v1988 = vunpack.c.l.b16 %v1700
    %v1989 = vunpack.c.l.b16 %v1701
    %v1990 = vunpack.c.l.b16 %v1702
    %v1991 = vunpack.c.l.b16 %v1703
    %v1992 = vunpack.c.l.b16 %v1704
    %v1993 = vunpack.c.l.b16 %v1705
    %v1994 = vunpack.c.l.b16 %v1706
    %v1995 = vunpack.c.l.b16 %v1707
    %v1996 = vunpack.c.l.b16 %v1708
    %v1997 = vunpack.c.l.b16 %v1709
    %v1998 = vunpack.c.l.b16 %v1710
    %v1999 = vunpack.c.l.b16 %v1711
    %v2000 = vunpack.c.l.b16 %v1712
    %v2001 = vunpack.c.l.b16 %v1713
    %v2002 = vunpack.c.l.b16 %v1714
    %v2003 = vunpack.c.l.b16 %v1715
    %v2004 = vunpack.c.l.b16 %v1716
    %v2005 = vunpack.c.l.b16 %v1717
    %v2006 = vunpack.c.l.b16 %v1718
    %v2007 = vunpack.c.l.b16 %v1719
    %v2008 = vunpack.c.l.b16 %v1720
    %v2009 = vunpack.c.l.b16 %v1721
    %v2010 = vunpack.c.l.b16 %v1722
    %v2011 = vunpack.c.l.b16 %v1723
    %v2012 = vunpack.c.l.b16 %v1724
    %v2013 = vunpack.c.l.b16 %v1725
    %v2014 = vunpack.c.l.b16 %v1726
    %v2015 = vunpack.c.l.b16 %v1727
    %v2016 = vunpack.c.l.b16 %v1728
    %v2017 = vunpack.c.l.b16 %v1729
    %v2018 = vunpack.c.l.b16 %v1730
    %v2019 = vunpack.c.l.b16 %v1731
    %v2020 = vunpack.c.l.b16 %v1732
    %v2021 = vunpack.c.l.b16 %v1733
    %v2022 = vunpack.c.l.b16 %v1734
    %v2023 = vunpack.c.l.b16 %v1735
    %v2024 = vunpack.c.l.b16 %v1736
    %v2025 = vunpack.c.l.b16 %v1737
    %v2026 = vunpack.c.l.b16 %v1738
    %v2027 = vunpack.c.l.b16 %v1739
    %v2028 = vunpack.c.l.b16 %v1740
    %v2029 = vunpack.c.l.b16 %v1741
    %v2030 = vunpack.c.l.b16 %v1742
    %v2031 = vunpack.c.l.b16 %v1743
    %v2032 = vunpack.c.l.b16 %v1744
    %v2033 = vunpack.c.l.b16 %v1745
    %v2034 = vunpack.c.l.b16 %v1746
    %v2035 = vunpack.c.l.b16 %v1747
    %v2036 = vunpack.c.l.b16 %v1748
    %v2037 = vunpack.c.l.b16 %v1749
    %v2038 = vunpack.c.l.b16 %v1750
    %v2039 = vunpack.c.l.b16 %v1751
    %v2040 = vunpack.c.l.b16 %v1752
    %v2041 = vpack.c.b16 %v1898, %v1897
    %v2042 = vpack.c.b16 %v1900, %v1899
    %v2043 = vpack.c.b16 %v1902, %v1901
    %v2044 = vpack.c.b16 %v1904, %v1903
    %v2045 = vpack.c.b16 %v1906, %v1905
    %v2046 = vpack.c.b16 %v1908, %v1907
    %v2047 = vpack.c.b16 %v1910, %v1909
    %v2048 = vpack.c.b16 %v1912, %v1911
    %v2049 = vpack.c.b16 %v1914, %v1913
    %v2050 = vpack.c.b16 %v1916, %v1915
    %v2051 = vpack.c.b16 %v1918, %v1917
    %v2052 = vpack.c.b16 %v1920, %v1919
    %v2053 = vpack.c.b16 %v1922, %v1921
    %v2054 = vpack.c.b16 %v1924, %v1923
    %v2055 = vpack.c.b16 %v1926, %v1925
    %v2056 = vpack.c.b16 %v1928, %v1927
    %v2057 = vpack.c.b16 %v1930, %v1929
    %v2058 = vpack.c.b16 %v1932, %v1931
    %v2059 = vpack.c.b16 %v1934, %v1933
    %v2060 = vpack.c.b16 %v1936, %v1935
    %v2061 = vpack.c.b16 %v1938, %v1937
    %v2062 = vpack.c.b16 %v1940, %v1939
    %v2063 = vpack.c.b16 %v1942, %v1941
    %v2064 = vpack.c.b16 %v1944, %v1943
    %v2065 = vpack.c.b16 %v1946, %v1945
    %v2066 = vpack.c.b16 %v1948, %v1947
    %v2067 = vpack.c.b16 %v1950, %v1949
    %v2068 = vpack.c.b16 %v1952, %v1951
    %v2069 = vpack.c.b16 %v1954, %v1953
    %v2070 = vpack.c.b16 %v1956, %v1955
    %v2071 = vpack.c.b16 %v1958, %v1957
    %v2072 = vpack.c.b16 %v1960, %v1959
    %v2073 = vpack.c.b16 %v1962, %v1961
    %v2074 = vpack.c.b16 %v1964, %v1963
    %v2075 = vpack.c.b16 %v1966, %v1965
    %v2076 = vpack.c.b16 %v1968, %v1967
    %v2077 = vpack.c.b16 %v1970, %v1969
    %v2078 = vpack.c.b16 %v1972, %v1971
    %v2079 = vpack.c.b16 %v1974, %v1973
    %v2080 = vpack.c.b16 %v1976, %v1975
    %v2081 = vpack.c.b16 %v1978, %v1977
    %v2082 = vpack.c.b16 %v1980, %v1979
    %v2083 = vpack.c.b16 %v1982, %v1981
    %v2084 = vpack.c.b16 %v1984, %v1983
    %v2085 = vpack.c.b16 %v1986, %v1985
    %v2086 = vpack.c.b16 %v1988, %v1987
    %v2087 = vpack.c.b16 %v1990, %v1989
    %v2088 = vpack.c.b16 %v1992, %v1991
    %v2089 = vpack.c.b16 %v1994, %v1993
    %v2090 = vpack.c.b16 %v1996, %v1995
    %v2091 = vpack.c.b16 %v1998, %v1997
    %v2092 = vpack.c.b16 %v2000, %v1999
    %v2093 = vpack.c.b16 %v2002, %v2001
    %v2094 = vpack.c.b16 %v2004, %v2003
    %v2095 = vpack.c.b16 %v2006, %v2005
    %v2096 = vpack.c.b16 %v2008, %v2007
    %v2097 = vpack.c.b16 %v2010, %v2009
    %v2098 = vpack.c.b16 %v2012, %v2011
    %v2099 = vpack.c.b16 %v2014, %v2013
    %v2100 = vpack.c.b16 %v2016, %v2015
    %v2101 = vpack.c.b16 %v2018, %v2017
    %v2102 = vpack.c.b16 %v2020, %v2019
    %v2103 = vpack.c.b16 %v2022, %v2021
    %v2104 = vpack.c.b16 %v2024, %v2023
    %v2105 = vpack.c.b16 %v2026, %v2025
    %v2106 = vpack.c.b16 %v2028, %v2027
    %v2107 = vpack.c.b16 %v2030, %v2029
    %v2108 = vpack.c.b16 %v2032, %v2031
    %v2109 = vpack.c.b16 %v2034, %v2033
    %v2110 = vpack.c.b16 %v2036, %v2035
    %v2111 = vpack.c.b16 %v2038, %v2037
    %v2112 = vpack.c.b16 %v2040, %v2039
    %2185 = vmatpush.bf16.msra.mxu0 %v2048
    %2186 = vmatpush.bf16.msra.mxu0 %v2047
    %2187 = vmatpush.bf16.msra.mxu0 %v2046
    %2188 = vmatpush.bf16.msra.mxu0 %v2045
    %2189 = vmatpush.bf16.msra.mxu0 %v2044
    %2190 = vmatpush.bf16.msra.mxu0 %v2043
    %2191 = vmatpush.bf16.msra.mxu0 %v2042
    %2192 = vmatpush.bf16.msra.mxu0 %v2041
    %2193 = vmatmul.bf16.gmra.mxu0 %v1591
    %v2194 = vpop.f32.mrf.mxu0
    %v2195 = vadd.f32 0.0, %v2194
    %v2196 = vpop.f32.mrf.mxu0
    %v2197 = vadd.f32 0.0, %v2196
    %2198 = vmatmul.bf16.gmra.mxu0 %v1600
    %v2199 = vpop.f32.mrf.mxu0
    %v2200 = vadd.f32 0.0, %v2199
    %v2201 = vpop.f32.mrf.mxu0
    %v2202 = vadd.f32 0.0, %v2201
    %2203 = vdwg.mxu0
    %2204 = vmatpush.bf16.msra.mxu0 %v2056
    %2205 = vmatpush.bf16.msra.mxu0 %v2055
    %2206 = vmatpush.bf16.msra.mxu0 %v2054
    %2207 = vmatpush.bf16.msra.mxu0 %v2053
    %2208 = vmatpush.bf16.msra.mxu0 %v2052
    %2209 = vmatpush.bf16.msra.mxu0 %v2051
    %2210 = vmatpush.bf16.msra.mxu0 %v2050
    %2211 = vmatpush.bf16.msra.mxu0 %v2049
    %2212 = vmatmul.bf16.gmra.mxu0 %v1592
    %v2213 = vpop.f32.mrf.mxu0
    %v2214 = vadd.f32 %v2195, %v2213
    %v2215 = vpop.f32.mrf.mxu0
    %v2216 = vadd.f32 %v2197, %v2215
    %2217 = vmatmul.bf16.gmra.mxu0 %v1601
    %v2218 = vpop.f32.mrf.mxu0
    %v2219 = vadd.f32 %v2200, %v2218
    %v2220 = vpop.f32.mrf.mxu0
    %v2221 = vadd.f32 %v2202, %v2220
    %2222 = vdwg.mxu0
    %2223 = vmatpush.bf16.msra.mxu0 %v2064
    %2224 = vmatpush.bf16.msra.mxu0 %v2063
    %2225 = vmatpush.bf16.msra.mxu0 %v2062
    %2226 = vmatpush.bf16.msra.mxu0 %v2061
    %2227 = vmatpush.bf16.msra.mxu0 %v2060
    %2228 = vmatpush.bf16.msra.mxu0 %v2059
    %2229 = vmatpush.bf16.msra.mxu0 %v2058
    %2230 = vmatpush.bf16.msra.mxu0 %v2057
    %2231 = vmatmul.bf16.gmra.mxu0 %v1593
    %v2232 = vpop.f32.mrf.mxu0
    %v2233 = vadd.f32 %v2214, %v2232
    %v2234 = vpop.f32.mrf.mxu0
    %v2235 = vadd.f32 %v2216, %v2234
    %2236 = vmatmul.bf16.gmra.mxu0 %v1602
    %v2237 = vpop.f32.mrf.mxu0
    %v2238 = vadd.f32 %v2219, %v2237
    %v2239 = vpop.f32.mrf.mxu0
    %v2240 = vadd.f32 %v2221, %v2239
    %2241 = vdwg.mxu0
    %2242 = vmatpush.bf16.msra.mxu0 %v2072
    %2243 = vmatpush.bf16.msra.mxu0 %v2071
    %2244 = vmatpush.bf16.msra.mxu0 %v2070
    %2245 = vmatpush.bf16.msra.mxu0 %v2069
    %2246 = vmatpush.bf16.msra.mxu0 %v2068
    %2247 = vmatpush.bf16.msra.mxu0 %v2067
    %2248 = vmatpush.bf16.msra.mxu0 %v2066
    %2249 = vmatpush.bf16.msra.mxu0 %v2065
    %2250 = vmatmul.bf16.gmra.mxu0 %v1594
    %v2251 = vpop.f32.mrf.mxu0
    %v2252 = vadd.f32 %v2233, %v2251
    %v2253 = vpop.f32.mrf.mxu0
    %v2254 = vadd.f32 %v2235, %v2253
    %2255 = vmatmul.bf16.gmra.mxu0 %v1603
    %v2256 = vpop.f32.mrf.mxu0
    %v2257 = vadd.f32 %v2238, %v2256
    %v2258 = vpop.f32.mrf.mxu0
    %v2259 = vadd.f32 %v2240, %v2258
    %2260 = vdwg.mxu0
    %2261 = vmatpush.bf16.msra.mxu0 %v2080
    %2262 = vmatpush.bf16.msra.mxu0 %v2079
    %2263 = vmatpush.bf16.msra.mxu0 %v2078
    %2264 = vmatpush.bf16.msra.mxu0 %v2077
    %2265 = vmatpush.bf16.msra.mxu0 %v2076
    %2266 = vmatpush.bf16.msra.mxu0 %v2075
    %2267 = vmatpush.bf16.msra.mxu0 %v2074
    %2268 = vmatpush.bf16.msra.mxu0 %v2073
    %2269 = vmatmul.bf16.gmra.mxu0 %v1595
    %v2270 = vpop.f32.mrf.mxu0
    %v2271 = vadd.f32 %v2252, %v2270
    %v2272 = vpop.f32.mrf.mxu0
    %v2273 = vadd.f32 %v2254, %v2272
    %2274 = vmatmul.bf16.gmra.mxu0 %v1604
    %v2275 = vpop.f32.mrf.mxu0
    %v2276 = vadd.f32 %v2257, %v2275
    %v2277 = vpop.f32.mrf.mxu0
    %v2278 = vadd.f32 %v2259, %v2277
    %2279 = vdwg.mxu0
    %2280 = vmatpush.bf16.msra.mxu0 %v2088
    %2281 = vmatpush.bf16.msra.mxu0 %v2087
    %2282 = vmatpush.bf16.msra.mxu0 %v2086
    %2283 = vmatpush.bf16.msra.mxu0 %v2085
    %2284 = vmatpush.bf16.msra.mxu0 %v2084
    %2285 = vmatpush.bf16.msra.mxu0 %v2083
    %2286 = vmatpush.bf16.msra.mxu0 %v2082
    %2287 = vmatpush.bf16.msra.mxu0 %v2081
    %2288 = vmatmul.bf16.gmra.mxu0 %v1596
    %v2289 = vpop.f32.mrf.mxu0
    %v2290 = vadd.f32 %v2271, %v2289
    %v2291 = vpop.f32.mrf.mxu0
    %v2292 = vadd.f32 %v2273, %v2291
    %2293 = vmatmul.bf16.gmra.mxu0 %v1605
    %v2294 = vpop.f32.mrf.mxu0
    %v2295 = vadd.f32 %v2276, %v2294
    %v2296 = vpop.f32.mrf.mxu0
    %v2297 = vadd.f32 %v2278, %v2296
    %2298 = vdwg.mxu0
    %2299 = vmatpush.bf16.msra.mxu0 %v2096
    %2300 = vmatpush.bf16.msra.mxu0 %v2095
    %2301 = vmatpush.bf16.msra.mxu0 %v2094
    %2302 = vmatpush.bf16.msra.mxu0 %v2093
    %2303 = vmatpush.bf16.msra.mxu0 %v2092
    %2304 = vmatpush.bf16.msra.mxu0 %v2091
    %2305 = vmatpush.bf16.msra.mxu0 %v2090
    %2306 = vmatpush.bf16.msra.mxu0 %v2089
    %2307 = vmatmul.bf16.gmra.mxu0 %v1597
    %v2308 = vpop.f32.mrf.mxu0
    %v2309 = vadd.f32 %v2290, %v2308
    %v2310 = vpop.f32.mrf.mxu0
    %v2311 = vadd.f32 %v2292, %v2310
    %2312 = vmatmul.bf16.gmra.mxu0 %v1606
    %v2313 = vpop.f32.mrf.mxu0
    %v2314 = vadd.f32 %v2295, %v2313
    %v2315 = vpop.f32.mrf.mxu0
    %v2316 = vadd.f32 %v2297, %v2315
    %2317 = vdwg.mxu0
    %2318 = vmatpush.bf16.msra.mxu0 %v2104
    %2319 = vmatpush.bf16.msra.mxu0 %v2103
    %2320 = vmatpush.bf16.msra.mxu0 %v2102
    %2321 = vmatpush.bf16.msra.mxu0 %v2101
    %2322 = vmatpush.bf16.msra.mxu0 %v2100
    %2323 = vmatpush.bf16.msra.mxu0 %v2099
    %2324 = vmatpush.bf16.msra.mxu0 %v2098
    %2325 = vmatpush.bf16.msra.mxu0 %v2097
    %2326 = vmatmul.bf16.gmra.mxu0 %v1598
    %v2327 = vpop.f32.mrf.mxu0
    %v2328 = vadd.f32 %v2309, %v2327
    %v2329 = vpop.f32.mrf.mxu0
    %v2330 = vadd.f32 %v2311, %v2329
    %2331 = vmatmul.bf16.gmra.mxu0 %v1607
    %v2332 = vpop.f32.mrf.mxu0
    %v2333 = vadd.f32 %v2314, %v2332
    %v2334 = vpop.f32.mrf.mxu0
    %v2335 = vadd.f32 %v2316, %v2334
    %2336 = vdwg.mxu0
    %2337 = vmatpush.bf16.msra.mxu0 %v2112
    %2338 = vmatpush.bf16.msra.mxu0 %v2111
    %2339 = vmatpush.bf16.msra.mxu0 %v2110
    %2340 = vmatpush.bf16.msra.mxu0 %v2109
    %2341 = vmatpush.bf16.msra.mxu0 %v2108
    %2342 = vmatpush.bf16.msra.mxu0 %v2107
    %2343 = vmatpush.bf16.msra.mxu0 %v2106
    %2344 = vmatpush.bf16.msra.mxu0 %v2105
    %2345 = vmatmul.bf16.gmra.mxu0 %v1599
    %v2346 = vpop.f32.mrf.mxu0
    %v2347 = vadd.f32 %v2328, %v2346
    %v2348 = vpop.f32.mrf.mxu0
    %v2349 = vadd.f32 %v2330, %v2348
    %2350 = vmatmul.bf16.gmra.mxu0 %v1608
    %v2351 = vpop.f32.mrf.mxu0
    %v2352 = vadd.f32 %v2333, %v2351
    %v2353 = vpop.f32.mrf.mxu0
    %v2354 = vadd.f32 %v2335, %v2353
    %2355 = vdwg.mxu0
    %v2356 = vld [vmem:[%s3 + $0xb0] sm:$0xff]
    %v2357 = vld [vmem:[%s3 + $0xb8] sm:$0xff]
    %v2358 = vld [vmem:[%s3 + $0xc0] sm:$0xff]
    %v2359 = vld [vmem:[%s3 + $0xc8] sm:$0xff]
    %vm2360 = vcmask 261120
    %v2361 = vsel %vm2360, %v2347, 0.0
    %2362 = vadd.xlane.f32.xlu0 %v2361
    %v2363 = vpop.xlane.xlu0 %2362
    %v2364 = vsel %vm2360, %v2349, 0.0
    %2365 = vadd.xlane.f32.xlu0 %v2364
    %v2366 = vpop.xlane.xlu0 %2365
    %v2367 = vsel %vm2360, %v2352, 0.0
    %2368 = vadd.xlane.f32.xlu0 %v2367
    %v2369 = vpop.xlane.xlu0 %2368
    %v2370 = vsel %vm2360, %v2354, 0.0
    %2371 = vadd.xlane.f32.xlu0 %v2370
    %v2372 = vpop.xlane.xlu0 %2371
    %v2373 = vmul.f32 %v2363, 0.03125
    %v2374 = vmul.f32 %v2366, 0.03125
    %v2375 = vmul.f32 %v2369, 0.03125
    %v2376 = vmul.f32 %v2372, 0.03125
    %v2377 = vmul.f32 %v2347, %v2347
    %v2378 = vmul.f32 %v2349, %v2349
    %v2379 = vmul.f32 %v2352, %v2352
    %v2380 = vmul.f32 %v2354, %v2354
    %v2381 = vsel %vm2360, %v2377, 0.0
    %2382 = vadd.xlane.f32.xlu0 %v2381
    %v2383 = vpop.xlane.xlu0 %2382
    %v2384 = vsel %vm2360, %v2378, 0.0
    %2385 = vadd.xlane.f32.xlu0 %v2384
    %v2386 = vpop.xlane.xlu0 %2385
    %v2387 = vsel %vm2360, %v2379, 0.0
    %2388 = vadd.xlane.f32.xlu0 %v2387
    %v2389 = vpop.xlane.xlu0 %2388
    %v2390 = vsel %vm2360, %v2380, 0.0
    %2391 = vadd.xlane.f32.xlu0 %v2390
    %v2392 = vpop.xlane.xlu0 %2391
    %v2393 = vmul.f32 %v2383, 0.03125
    %v2394 = vmul.f32 %v2386, 0.03125
    %v2395 = vmul.f32 %v2389, 0.03125
    %v2396 = vmul.f32 %v2392, 0.03125
    %v2397 = vmul.f32 %v2373, %v2373
    %v2398 = vmul.f32 %v2374, %v2374
    %v2399 = vmul.f32 %v2375, %v2375
    %v2400 = vmul.f32 %v2376, %v2376
    %v2401 = vsub.f32 %v2393, %v2397
    %v2402 = vsub.f32 %v2394, %v2398
    %v2403 = vsub.f32 %v2395, %v2399
    %v2404 = vsub.f32 %v2396, %v2400
    %v2405 = vmax.f32 %v2401, 0.0
    %v2406 = vmax.f32 %v2402, 0.0
    %v2407 = vmax.f32 %v2403, 0.0
    %v2408 = vmax.f32 %v2404, 0.0
    %v2409 = vsub.f32 %v2347, %v2373
    %v2410 = vsub.f32 %v2349, %v2374
    %v2411 = vsub.f32 %v2352, %v2375
    %v2412 = vsub.f32 %v2354, %v2376
    %v2413 = vadd.f32 %v2405, 0.001
    %v2414 = vadd.f32 %v2406, 0.001
    %v2415 = vadd.f32 %v2407, 0.001
    %v2416 = vadd.f32 %v2408, 0.001
    %v2417 = vrsqrt.pop %v2413
    %v2418 = vmul.f32 %v2417, %v2413
    %v2419 = vmul.f32 %v2418, %v2417
    %v2420 = vmul.f32 0.5, %v2419
    %v2421 = vsub.f32 1.5, %v2420
    %v2422 = vmul.f32 %v2417, %v2421
    %vm2423 = vweird.f32 %v2413
    %vm2424 = vweird.f32 %v2417
    %vm2425 = vmor %vm2423, %vm2424
    %v2426 = vsel %vm2425, %v2417, %v2422
    %v2427 = vrsqrt.pop %v2414
    %v2428 = vmul.f32 %v2427, %v2414
    %v2429 = vmul.f32 %v2428, %v2427
    %v2430 = vmul.f32 0.5, %v2429
    %v2431 = vsub.f32 1.5, %v2430
    %v2432 = vmul.f32 %v2427, %v2431
    %vm2433 = vweird.f32 %v2414
    %vm2434 = vweird.f32 %v2427
    %vm2435 = vmor %vm2433, %vm2434
    %v2436 = vsel %vm2435, %v2427, %v2432
    %v2437 = vrsqrt.pop %v2415
    %v2438 = vmul.f32 %v2437, %v2415
    %v2439 = vmul.f32 %v2438, %v2437
    %v2440 = vmul.f32 0.5, %v2439
    %v2441 = vsub.f32 1.5, %v2440
    %v2442 = vmul.f32 %v2437, %v2441
    %vm2443 = vweird.f32 %v2415
    %vm2444 = vweird.f32 %v2437
    %vm2445 = vmor %vm2443, %vm2444
    %v2446 = vsel %vm2445, %v2437, %v2442
    %v2447 = vrsqrt.pop %v2416
    %v2448 = vmul.f32 %v2447, %v2416
    %v2449 = vmul.f32 %v2448, %v2447
    %v2450 = vmul.f32 0.5, %v2449
    %v2451 = vsub.f32 1.5, %v2450
    %v2452 = vmul.f32 %v2447, %v2451
    %vm2453 = vweird.f32 %v2416
    %vm2454 = vweird.f32 %v2447
    %vm2455 = vmor %vm2453, %vm2454
    %v2456 = vsel %vm2455, %v2447, %v2452
    %v2457 = vmul.f32 %v2409, %v2426
    %v2458 = vmul.f32 %v2410, %v2436
    %v2459 = vmul.f32 %v2411, %v2446
    %v2460 = vmul.f32 %v2412, %v2456
    %2462 = vset.pattern.permute.xlu0 0
    %2463 = vperm.xlu0 %2462, %v2356
    %v2464 = vpop.permute.xlu0 %2463
    %2467 = vset.pattern.permute.xlu0 0
    %2468 = vperm.xlu0 %2467, %v2357
    %v2469 = vpop.permute.xlu0 %2468
    %2472 = vset.pattern.permute.xlu0 0
    %2473 = vperm.xlu0 %2472, %v2358
    %v2474 = vpop.permute.xlu0 %2473
    %2477 = vset.pattern.permute.xlu0 0
    %2478 = vperm.xlu0 %2477, %v2359
    %v2479 = vpop.permute.xlu0 %2478
    %v2481 = vmul.f32 %v2457, %v2464
    %v2482 = vmul.f32 %v2458, %v2469
    %v2483 = vmul.f32 %v2459, %v2474
    %v2484 = vmul.f32 %v2460, %v2479
    %2485 = vset.pattern.permute.xlu0 1
    %2486 = vperm.xlu0 %2485, %v2356
    %v2487 = vpop.permute.xlu0 %2486
    %2489 = vset.pattern.permute.xlu0 1
    %2490 = vperm.xlu0 %2489, %v2357
    %v2491 = vpop.permute.xlu0 %2490
    %2493 = vset.pattern.permute.xlu0 1
    %2494 = vperm.xlu0 %2493, %v2358
    %v2495 = vpop.permute.xlu0 %2494
    %2497 = vset.pattern.permute.xlu0 1
    %2498 = vperm.xlu0 %2497, %v2359
    %v2499 = vpop.permute.xlu0 %2498
    %v2501 = vadd.f32 %v2481, %v2487
    %v2502 = vadd.f32 %v2482, %v2491
    %v2503 = vadd.f32 %v2483, %v2495
    %v2504 = vadd.f32 %v2484, %v2499
    %v2505 = vxor.u32 %v2501, 2147483648
    %v2506 = vxor.u32 %v2502, 2147483648
    %v2507 = vxor.u32 %v2503, 2147483648
    %v2508 = vxor.u32 %v2504, 2147483648
    %v2509 = vmul.f32 %v2505, 1.442695
    %v2510 = vpow.pop %v2509
    %v2511 = vmul.f32 %v2506, 1.442695
    %v2512 = vpow.pop %v2511
    %v2513 = vmul.f32 %v2507, 1.442695
    %v2514 = vpow.pop %v2513
    %v2515 = vmul.f32 %v2508, 1.442695
    %v2516 = vpow.pop %v2515
    %v2517 = vadd.f32 %v2510, 1.0
    %v2518 = vadd.f32 %v2512, 1.0
    %v2519 = vadd.f32 %v2514, 1.0
    %v2520 = vadd.f32 %v2516, 1.0
    %v2521 = vrcp.pop %v2517
    %v2522 = vmul.f32 %v2517, %v2521
    %v2523 = vsub.f32 1.0, %v2522
    %v2524 = vmul.f32 %v2521, %v2523
    %v2525 = vadd.f32 %v2521, %v2524
    %vm2526 = vweird.f32 %v2517
    %vm2527 = vweird.f32 %v2521
    %vm2528 = vmor %vm2526, %vm2527
    %v2529 = vsel %vm2528, %v2521, %v2525
    %v2530 = vand.u32 2147483647, %v2517
    %vm2531 = vcmp.eq.f32.partialorder %v2530, 8.507059e+37
    %v2532 = vand.u32 %v2517, 2147483648
    %v2533 = vor.u32 1.1754944e-38, %v2532
    %v2534 = vsel %vm2531, %v2533, %v2529
    %v2535 = vmul.f32 1.0, %v2534
    %v2536 = vrcp.pop %v2518
    %v2537 = vmul.f32 %v2518, %v2536
    %v2538 = vsub.f32 1.0, %v2537
    %v2539 = vmul.f32 %v2536, %v2538
    %v2540 = vadd.f32 %v2536, %v2539
    %vm2541 = vweird.f32 %v2518
    %vm2542 = vweird.f32 %v2536
    %vm2543 = vmor %vm2541, %vm2542
    %v2544 = vsel %vm2543, %v2536, %v2540
    %v2545 = vand.u32 2147483647, %v2518
    %vm2546 = vcmp.eq.f32.partialorder %v2545, 8.507059e+37
    %v2547 = vand.u32 %v2518, 2147483648
    %v2548 = vor.u32 1.1754944e-38, %v2547
    %v2549 = vsel %vm2546, %v2548, %v2544
    %v2550 = vmul.f32 1.0, %v2549
    %v2551 = vrcp.pop %v2519
    %v2552 = vmul.f32 %v2519, %v2551
    %v2553 = vsub.f32 1.0, %v2552
    %v2554 = vmul.f32 %v2551, %v2553
    %v2555 = vadd.f32 %v2551, %v2554
    %vm2556 = vweird.f32 %v2519
    %vm2557 = vweird.f32 %v2551
    %vm2558 = vmor %vm2556, %vm2557
    %v2559 = vsel %vm2558, %v2551, %v2555
    %v2560 = vand.u32 2147483647, %v2519
    %vm2561 = vcmp.eq.f32.partialorder %v2560, 8.507059e+37
    %v2562 = vand.u32 %v2519, 2147483648
    %v2563 = vor.u32 1.1754944e-38, %v2562
    %v2564 = vsel %vm2561, %v2563, %v2559
    %v2565 = vmul.f32 1.0, %v2564
    %v2566 = vrcp.pop %v2520
    %v2567 = vmul.f32 %v2520, %v2566
    %v2568 = vsub.f32 1.0, %v2567
    %v2569 = vmul.f32 %v2566, %v2568
    %v2570 = vadd.f32 %v2566, %v2569
    %vm2571 = vweird.f32 %v2520
    %vm2572 = vweird.f32 %v2566
    %vm2573 = vmor %vm2571, %vm2572
    %v2574 = vsel %vm2573, %v2566, %v2570
    %v2575 = vand.u32 2147483647, %v2520
    %vm2576 = vcmp.eq.f32.partialorder %v2575, 8.507059e+37
    %v2577 = vand.u32 %v2520, 2147483648
    %v2578 = vor.u32 1.1754944e-38, %v2577
    %v2579 = vsel %vm2576, %v2578, %v2574
    %v2580 = vmul.f32 1.0, %v2579
    %v2581 = vmul.f32 %v2501, %v2535
    %v2582 = vmul.f32 %v2502, %v2550
    %v2583 = vmul.f32 %v2503, %v2565
    %v2584 = vmul.f32 %v2504, %v2580
    %v2585 = vld [vmem:[%s3 + $0x210] sm:$0x3]
    %v2587 = vsel %vm2360, %v2581, 0
    %v2590 = vsel %vm2360, %v2582, 0
    %v2593 = vsel %vm2360, %v2583, 0
    %v2596 = vsel %vm2360, %v2584, 0
    %v2599 = vsel %vm2360, %v2585, 0
    %2601 = vmatpush.xpose.msra.mxu0 0.0
    %2602 = vmatpush.xpose.msra.mxu0 0.0
    %2603 = vmatpush.xpose.msra.mxu0 0.0
    %2604 = vmatpush.xpose.msra.mxu0 0.0
    %2605 = vmatpush.xpose.msra.mxu0 0.0
    %2606 = vmatpush.xpose.msra.mxu0 0.0
    %2607 = vmatpush.xpose.msra.mxu0 0.0
    %2608 = vmatpush.xpose.msra.mxu0 0.0
    %2609 = vmatpush.xpose.msra.mxu0 0.0
    %2610 = vmatpush.xpose.msra.mxu0 0.0
    %2611 = vmatpush.xpose.msra.mxu0 0.0
    %2612 = vmatpush.xpose.msra.mxu0 0.0
    %2613 = vmatpush.xpose.msra.mxu0 0.0
    %2614 = vmatpush.xpose.msra.mxu0 0.0
    %2615 = vmatpush.xpose.msra.mxu0 0.0
    %2616 = vmatpush.xpose.msra.mxu0 %v2599
    %2617 = vmatmul.f32.gmra.mxu0 %v2587
    %v2618 = vpop.f32.mrf.mxu0
    %v2619 = vadd.f32 0.0, %v2618
    %2620 = vmatmul.f32.gmra.mxu0 %v2590
    %v2621 = vpop.f32.mrf.mxu0
    %v2622 = vadd.f32 0.0, %v2621
    %2623 = vmatmul.f32.gmra.mxu0 %v2593
    %v2624 = vpop.f32.mrf.mxu0
    %v2625 = vadd.f32 0.0, %v2624
    %2626 = vmatmul.f32.gmra.mxu0 %v2596
    %v2627 = vpop.f32.mrf.mxu0
    %v2628 = vadd.f32 0.0, %v2627
    %2629 = vdwg.mxu0
    %v2630 = vmul.f32 %v2619, 0.0625
    %v2631 = vmul.f32 %v2622, 0.0625
    %v2632 = vmul.f32 %v2625, 0.0625
    %v2633 = vmul.f32 %v2628, 0.0625
    %v2634 = vld [vmem:[%s3 + $0xd0] sm:$0x3]
    %v2635 = vld [vmem:[%s3 + $0xd8] sm:$0x3]
    %2637 = vset.pattern.permute.xlu0 0
    %2638 = vperm.xlu0 %2637, %v2635
    %v2639 = vpop.permute.xlu0 %2638
    %v2642 = vsel %vm2360, %v2634, 0
    %2644 = vmatpush.msra.mxu0 0.0
    %2645 = vmatpush.msra.mxu0 0.0
    %2646 = vmatpush.msra.mxu0 0.0
    %2647 = vmatpush.msra.mxu0 0.0
    %2648 = vmatpush.msra.mxu0 0.0
    %2649 = vmatpush.msra.mxu0 0.0
    %2650 = vmatpush.msra.mxu0 0.0
    %2651 = vmatpush.msra.mxu0 0.0
    %2652 = vmatpush.msra.mxu0 0.0
    %2653 = vmatpush.msra.mxu0 0.0
    %2654 = vmatpush.msra.mxu0 0.0
    %2655 = vmatpush.msra.mxu0 0.0
    %2656 = vmatpush.msra.mxu0 %v2633
    %2657 = vmatpush.msra.mxu0 %v2632
    %2658 = vmatpush.msra.mxu0 %v2631
    %2659 = vmatpush.msra.mxu0 %v2630
    %2660 = vmatmul.f32.gmra.mxu0 %v2642
    %v2661 = vpop.f32.mrf.mxu0
    %v2662 = vadd.f32 %v2639, %v2661
    %2663 = vdwg.mxu0
    %v2664 = vxor.u32 %v2662, 2147483648
    %v2665 = vmul.f32 %v2664, 1.442695
    %v2666 = vpow.pop %v2665
    %v2667 = vadd.f32 %v2666, 1.0
    %v2668 = vrcp.pop %v2667
    %v2669 = vmul.f32 %v2667, %v2668
    %v2670 = vsub.f32 1.0, %v2669
    %v2671 = vmul.f32 %v2668, %v2670
    %v2672 = vadd.f32 %v2668, %v2671
    %vm2673 = vweird.f32 %v2667
    %vm2674 = vweird.f32 %v2668
    %vm2675 = vmor %vm2673, %vm2674
    %v2676 = vsel %vm2675, %v2668, %v2672
    %v2677 = vand.u32 2147483647, %v2667
    %vm2678 = vcmp.eq.f32.partialorder %v2677, 8.507059e+37
    %v2679 = vand.u32 %v2667, 2147483648
    %v2680 = vor.u32 1.1754944e-38, %v2679
    %v2681 = vsel %vm2678, %v2680, %v2676
    %v2682 = vmul.f32 1.0, %v2681
    %v2683 = vmul.f32 %v2662, %v2682
    %v2684 = vld [vmem:[%s3 + $0xe0] sm:$0xff]
    %v2685 = vld [vmem:[%s3 + $0xe8] sm:$0xff]
    %v2686 = vld [vmem:[%s3 + $0xf0] sm:$0xff]
    %v2687 = vld [vmem:[%s3 + $0xf8] sm:$0xff]
    %v2688 = vld [vmem:[%s3 + $0x100] sm:$0xff]
    %v2689 = vld [vmem:[%s3 + $0x108] sm:$0xff]
    %v2690 = vld [vmem:[%s3 + $0x110] sm:$0xff]
    %v2691 = vld [vmem:[%s3 + $0x118] sm:$0xff]
    %2693 = vset.pattern.permute.xlu0 0
    %2694 = vperm.xlu0 %2693, %v2688
    %v2695 = vpop.permute.xlu0 %2694
    %2698 = vset.pattern.permute.xlu0 0
    %2699 = vperm.xlu0 %2698, %v2689
    %v2700 = vpop.permute.xlu0 %2699
    %2703 = vset.pattern.permute.xlu0 0
    %2704 = vperm.xlu0 %2703, %v2690
    %v2705 = vpop.permute.xlu0 %2704
    %2708 = vset.pattern.permute.xlu0 0
    %2709 = vperm.xlu0 %2708, %v2691
    %v2710 = vpop.permute.xlu0 %2709
    %v2713 = vsel %vm1004, %v2684, 0
    %v2716 = vsel %vm1004, %v2685, 0
    %v2719 = vsel %vm1004, %v2686, 0
    %v2722 = vsel %vm1004, %v2687, 0
    %v2725 = vsel %vm1008, %v2683, 0
    %2727 = vmatpush.msra.mxu0 0.0
    %2728 = vmatpush.msra.mxu0 0.0
    %2729 = vmatpush.msra.mxu0 0.0
    %2730 = vmatpush.msra.mxu0 0.0
    %2731 = vmatpush.msra.mxu0 0.0
    %2732 = vmatpush.msra.mxu0 0.0
    %2733 = vmatpush.msra.mxu0 0.0
    %2734 = vmatpush.msra.mxu0 0.0
    %2735 = vmatpush.msra.mxu0 0.0
    %2736 = vmatpush.msra.mxu0 0.0
    %2737 = vmatpush.msra.mxu0 0.0
    %2738 = vmatpush.msra.mxu0 0.0
    %2739 = vmatpush.msra.mxu0 0.0
    %2740 = vmatpush.msra.mxu0 0.0
    %2741 = vmatpush.msra.mxu0 0.0
    %2742 = vmatpush.msra.mxu0 %v2725
    %2743 = vmatmul.f32.gmra.mxu0 %v2713
    %v2744 = vpop.f32.mrf.mxu0
    %v2745 = vadd.f32 %v2695, %v2744
    %2746 = vmatmul.f32.gmra.mxu0 %v2716
    %v2747 = vpop.f32.mrf.mxu0
    %v2748 = vadd.f32 %v2700, %v2747
    %2749 = vmatmul.f32.gmra.mxu0 %v2719
    %v2750 = vpop.f32.mrf.mxu0
    %v2751 = vadd.f32 %v2705, %v2750
    %2752 = vmatmul.f32.gmra.mxu0 %v2722
    %v2753 = vpop.f32.mrf.mxu0
    %v2754 = vadd.f32 %v2710, %v2753
    %2755 = vdwg.mxu0
    %v2756 = vxor.u32 %v2745, 2147483648
    %v2757 = vxor.u32 %v2748, 2147483648
    %v2758 = vxor.u32 %v2751, 2147483648
    %v2759 = vxor.u32 %v2754, 2147483648
    %v2760 = vmul.f32 %v2756, 1.442695
    %v2761 = vpow.pop %v2760
    %v2762 = vmul.f32 %v2757, 1.442695
    %v2763 = vpow.pop %v2762
    %v2764 = vmul.f32 %v2758, 1.442695
    %v2765 = vpow.pop %v2764
    %v2766 = vmul.f32 %v2759, 1.442695
    %v2767 = vpow.pop %v2766
    %v2768 = vadd.f32 %v2761, 1.0
    %v2769 = vadd.f32 %v2763, 1.0
    %v2770 = vadd.f32 %v2765, 1.0
    %v2771 = vadd.f32 %v2767, 1.0
    %v2772 = vrcp.pop %v2768
    %v2773 = vmul.f32 %v2768, %v2772
    %v2774 = vsub.f32 1.0, %v2773
    %v2775 = vmul.f32 %v2772, %v2774
    %v2776 = vadd.f32 %v2772, %v2775
    %vm2777 = vweird.f32 %v2768
    %vm2778 = vweird.f32 %v2772
    %vm2779 = vmor %vm2777, %vm2778
    %v2780 = vsel %vm2779, %v2772, %v2776
    %v2781 = vand.u32 2147483647, %v2768
    %vm2782 = vcmp.eq.f32.partialorder %v2781, 8.507059e+37
    %v2783 = vand.u32 %v2768, 2147483648
    %v2784 = vor.u32 1.1754944e-38, %v2783
    %v2785 = vsel %vm2782, %v2784, %v2780
    %v2786 = vmul.f32 1.0, %v2785
    %v2787 = vrcp.pop %v2769
    %v2788 = vmul.f32 %v2769, %v2787
    %v2789 = vsub.f32 1.0, %v2788
    %v2790 = vmul.f32 %v2787, %v2789
    %v2791 = vadd.f32 %v2787, %v2790
    %vm2792 = vweird.f32 %v2769
    %vm2793 = vweird.f32 %v2787
    %vm2794 = vmor %vm2792, %vm2793
    %v2795 = vsel %vm2794, %v2787, %v2791
    %v2796 = vand.u32 2147483647, %v2769
    %vm2797 = vcmp.eq.f32.partialorder %v2796, 8.507059e+37
    %v2798 = vand.u32 %v2769, 2147483648
    %v2799 = vor.u32 1.1754944e-38, %v2798
    %v2800 = vsel %vm2797, %v2799, %v2795
    %v2801 = vmul.f32 1.0, %v2800
    %v2802 = vrcp.pop %v2770
    %v2803 = vmul.f32 %v2770, %v2802
    %v2804 = vsub.f32 1.0, %v2803
    %v2805 = vmul.f32 %v2802, %v2804
    %v2806 = vadd.f32 %v2802, %v2805
    %vm2807 = vweird.f32 %v2770
    %vm2808 = vweird.f32 %v2802
    %vm2809 = vmor %vm2807, %vm2808
    %v2810 = vsel %vm2809, %v2802, %v2806
    %v2811 = vand.u32 2147483647, %v2770
    %vm2812 = vcmp.eq.f32.partialorder %v2811, 8.507059e+37
    %v2813 = vand.u32 %v2770, 2147483648
    %v2814 = vor.u32 1.1754944e-38, %v2813
    %v2815 = vsel %vm2812, %v2814, %v2810
    %v2816 = vmul.f32 1.0, %v2815
    %v2817 = vrcp.pop %v2771
    %v2818 = vmul.f32 %v2771, %v2817
    %v2819 = vsub.f32 1.0, %v2818
    %v2820 = vmul.f32 %v2817, %v2819
    %v2821 = vadd.f32 %v2817, %v2820
    %vm2822 = vweird.f32 %v2771
    %vm2823 = vweird.f32 %v2817
    %vm2824 = vmor %vm2822, %vm2823
    %v2825 = vsel %vm2824, %v2817, %v2821
    %v2826 = vand.u32 2147483647, %v2771
    %vm2827 = vcmp.eq.f32.partialorder %v2826, 8.507059e+37
    %v2828 = vand.u32 %v2771, 2147483648
    %v2829 = vor.u32 1.1754944e-38, %v2828
    %v2830 = vsel %vm2827, %v2829, %v2825
    %v2831 = vmul.f32 1.0, %v2830
    %v2833 = vsel %vm1004, %v2786, 0
    %v2836 = vsel %vm1004, %v2801, 0
    %v2839 = vsel %vm1004, %v2816, 0
    %v2842 = vsel %vm1004, %v2831, 0
    %v2844 = vsel %vm1008, %v2585, 0
    %2846 = vmatpush.msra.mxu0 0.0
    %2847 = vmatpush.msra.mxu0 0.0
    %2848 = vmatpush.msra.mxu0 0.0
    %2849 = vmatpush.msra.mxu0 0.0
    %2850 = vmatpush.msra.mxu0 0.0
    %2851 = vmatpush.msra.mxu0 0.0
    %2852 = vmatpush.msra.mxu0 0.0
    %2853 = vmatpush.msra.mxu0 0.0
    %2854 = vmatpush.msra.mxu0 0.0
    %2855 = vmatpush.msra.mxu0 0.0
    %2856 = vmatpush.msra.mxu0 0.0
    %2857 = vmatpush.msra.mxu0 0.0
    %2858 = vmatpush.msra.mxu0 0.0
    %2859 = vmatpush.msra.mxu0 0.0
    %2860 = vmatpush.msra.mxu0 0.0
    %2861 = vmatpush.msra.mxu0 %v2844
    %2862 = vmatmul.f32.gmra.mxu0 %v2833
    %v2863 = vpop.f32.mrf.mxu0
    %v2864 = vadd.f32 0.0, %v2863
    %2865 = vmatmul.f32.gmra.mxu0 %v2836
    %v2866 = vpop.f32.mrf.mxu0
    %v2867 = vadd.f32 0.0, %v2866
    %2868 = vmatmul.f32.gmra.mxu0 %v2839
    %v2869 = vpop.f32.mrf.mxu0
    %v2870 = vadd.f32 0.0, %v2869
    %2871 = vmatmul.f32.gmra.mxu0 %v2842
    %v2872 = vpop.f32.mrf.mxu0
    %v2873 = vadd.f32 0.0, %v2872
    %2874 = vdwg.mxu0
    %v2875 = vmul.f32 %v2581, %v2864
    %v2876 = vmul.f32 %v2582, %v2867
    %v2877 = vmul.f32 %v2583, %v2870
    %v2878 = vmul.f32 %v2584, %v2873
    %v2879 = vld [vmem:[%s3 + $0x120] sm:$0xff]
    %v2880 = vld [vmem:[%s3 + $0x128] sm:$0xff]
    %v2882 = vsel %vm2360, %v2879, 0
    %v2885 = vsel %vm2360, %v2880, 0
    %2887 = vmatpush.msra.mxu0 0.0
    %2888 = vmatpush.msra.mxu0 0.0
    %2889 = vmatpush.msra.mxu0 0.0
    %2890 = vmatpush.msra.mxu0 0.0
    %2891 = vmatpush.msra.mxu0 0.0
    %2892 = vmatpush.msra.mxu0 0.0
    %2893 = vmatpush.msra.mxu0 0.0
    %2894 = vmatpush.msra.mxu0 0.0
    %2895 = vmatpush.msra.mxu0 0.0
    %2896 = vmatpush.msra.mxu0 0.0
    %2897 = vmatpush.msra.mxu0 0.0
    %2898 = vmatpush.msra.mxu0 0.0
    %2899 = vmatpush.msra.mxu0 %v2878
    %2900 = vmatpush.msra.mxu0 %v2877
    %2901 = vmatpush.msra.mxu0 %v2876
    %2902 = vmatpush.msra.mxu0 %v2875
    %2903 = vmatmul.f32.gmra.mxu0 %v2882
    %v2904 = vpop.f32.mrf.mxu0
    %v2905 = vadd.f32 0.0, %v2904
    %2906 = vmatmul.f32.gmra.mxu0 %v2885
    %v2907 = vpop.f32.mrf.mxu0
    %v2908 = vadd.f32 0.0, %v2907
    %2909 = vdwg.mxu0
    %v2910 = vld [vmem:[%s3 + $0x130] sm:$0xff]
    %v2911 = vld [vmem:[%s3 + $0x138] sm:$0xff]
    %v2912 = vsel %vm2360, %v2905, 0.0
    %2913 = vadd.xlane.f32.xlu0 %v2912
    %v2914 = vpop.xlane.xlu0 %2913
    %v2915 = vsel %vm2360, %v2908, 0.0
    %2916 = vadd.xlane.f32.xlu0 %v2915
    %v2917 = vpop.xlane.xlu0 %2916
    %v2918 = vmul.f32 %v2914, 0.03125
    %v2919 = vmul.f32 %v2917, 0.03125
    %v2920 = vmul.f32 %v2905, %v2905
    %v2921 = vmul.f32 %v2908, %v2908
    %v2922 = vsel %vm2360, %v2920, 0.0
    %2923 = vadd.xlane.f32.xlu0 %v2922
    %v2924 = vpop.xlane.xlu0 %2923
    %v2925 = vsel %vm2360, %v2921, 0.0
    %2926 = vadd.xlane.f32.xlu0 %v2925
    %v2927 = vpop.xlane.xlu0 %2926
    %v2928 = vmul.f32 %v2924, 0.03125
    %v2929 = vmul.f32 %v2927, 0.03125
    %v2930 = vmul.f32 %v2918, %v2918
    %v2931 = vmul.f32 %v2919, %v2919
    %v2932 = vsub.f32 %v2928, %v2930
    %v2933 = vsub.f32 %v2929, %v2931
    %v2934 = vmax.f32 %v2932, 0.0
    %v2935 = vmax.f32 %v2933, 0.0
    %v2936 = vsub.f32 %v2905, %v2918
    %v2937 = vsub.f32 %v2908, %v2919
    %v2938 = vadd.f32 %v2934, 0.001
    %v2939 = vadd.f32 %v2935, 0.001
    %v2940 = vrsqrt.pop %v2938
    %v2941 = vmul.f32 %v2940, %v2938
    %v2942 = vmul.f32 %v2941, %v2940
    %v2943 = vmul.f32 0.5, %v2942
    %v2944 = vsub.f32 1.5, %v2943
    %v2945 = vmul.f32 %v2940, %v2944
    %vm2946 = vweird.f32 %v2938
    %vm2947 = vweird.f32 %v2940
    %vm2948 = vmor %vm2946, %vm2947
    %v2949 = vsel %vm2948, %v2940, %v2945
    %v2950 = vrsqrt.pop %v2939
    %v2951 = vmul.f32 %v2950, %v2939
    %v2952 = vmul.f32 %v2951, %v2950
    %v2953 = vmul.f32 0.5, %v2952
    %v2954 = vsub.f32 1.5, %v2953
    %v2955 = vmul.f32 %v2950, %v2954
    %vm2956 = vweird.f32 %v2939
    %vm2957 = vweird.f32 %v2950
    %vm2958 = vmor %vm2956, %vm2957
    %v2959 = vsel %vm2958, %v2950, %v2955
    %v2960 = vmul.f32 %v2936, %v2949
    %v2961 = vmul.f32 %v2937, %v2959
    %2963 = vset.pattern.permute.xlu0 0
    %2964 = vperm.xlu0 %2963, %v2910
    %v2965 = vpop.permute.xlu0 %2964
    %2968 = vset.pattern.permute.xlu0 0
    %2969 = vperm.xlu0 %2968, %v2911
    %v2970 = vpop.permute.xlu0 %2969
    %v2972 = vmul.f32 %v2960, %v2965
    %v2973 = vmul.f32 %v2961, %v2970
    %2974 = vset.pattern.permute.xlu0 1
    %2975 = vperm.xlu0 %2974, %v2910
    %v2976 = vpop.permute.xlu0 %2975
    %2978 = vset.pattern.permute.xlu0 1
    %2979 = vperm.xlu0 %2978, %v2911
    %v2980 = vpop.permute.xlu0 %2979
    %v2982 = vadd.f32 %v2972, %v2976
    %v2983 = vadd.f32 %v2973, %v2980
    %v2984 = vld [vmem:[%s3 + $0x140] sm:$0xff]
    %v2985 = vld [vmem:[%s3 + $0x148] sm:$0xff]
    %v2986 = vld [vmem:[%s3 + $0x150] sm:$0xff]
    %v2987 = vld [vmem:[%s3 + $0x158] sm:$0xff]
    %v2988 = vld [vmem:[%s3 + $0x160] sm:$0xff]
    %v2989 = vld [vmem:[%s3 + $0x168] sm:$0xff]
    %v2990 = vld [vmem:[%s3 + $0x170] sm:$0xff]
    %v2991 = vld [vmem:[%s3 + $0x178] sm:$0xff]
    %vm2992 = vcmask 130048
    %v2994 = vsel %vm2992, %v2984, 0
    %v2997 = vsel %vm2992, %v2985, 0
    %v3000 = vsel %vm2992, %v2986, 0
    %v3003 = vsel %vm2992, %v2987, 0
    %v3006 = vsel %vm2992, %v2988, 0
    %v3009 = vsel %vm2992, %v2989, 0
    %v3012 = vsel %vm2992, %v2990, 0
    %v3015 = vsel %vm2992, %v2991, 0
    %3017 = vmatpush.msra.mxu0 0.0
    %3018 = vmatpush.msra.mxu0 0.0
    %3019 = vmatpush.msra.mxu0 0.0
    %3020 = vmatpush.msra.mxu0 0.0
    %3021 = vmatpush.msra.mxu0 0.0
    %3022 = vmatpush.msra.mxu0 0.0
    %3023 = vmatpush.msra.mxu0 0.0
    %3024 = vmatpush.msra.mxu0 0.0
    %3025 = vmatpush.msra.mxu0 0.0
    %3026 = vmatpush.msra.mxu0 0.0
    %3027 = vmatpush.msra.mxu0 0.0
    %3028 = vmatpush.msra.mxu0 0.0
    %3029 = vmatpush.msra.mxu0 0.0
    %3030 = vmatpush.msra.mxu0 0.0
    %3031 = vmatpush.msra.mxu0 %v2983
    %3032 = vmatpush.msra.mxu0 %v2982
    %3033 = vmatmul.f32.gmra.mxu0 %v2994
    %v3034 = vpop.f32.mrf.mxu0
    %v3035 = vadd.f32 0.0, %v3034
    %3036 = vmatmul.f32.gmra.mxu0 %v2997
    %v3037 = vpop.f32.mrf.mxu0
    %v3038 = vadd.f32 0.0, %v3037
    %3039 = vmatmul.f32.gmra.mxu0 %v3000
    %v3040 = vpop.f32.mrf.mxu0
    %v3041 = vadd.f32 0.0, %v3040
    %3042 = vmatmul.f32.gmra.mxu0 %v3003
    %v3043 = vpop.f32.mrf.mxu0
    %v3044 = vadd.f32 0.0, %v3043
    %3045 = vmatmul.f32.gmra.mxu0 %v3006
    %v3046 = vpop.f32.mrf.mxu0
    %v3047 = vadd.f32 0.0, %v3046
    %3048 = vmatmul.f32.gmra.mxu0 %v3009
    %v3049 = vpop.f32.mrf.mxu0
    %v3050 = vadd.f32 0.0, %v3049
    %3051 = vmatmul.f32.gmra.mxu0 %v3012
    %v3052 = vpop.f32.mrf.mxu0
    %v3053 = vadd.f32 0.0, %v3052
    %3054 = vmatmul.f32.gmra.mxu0 %v3015
    %v3055 = vpop.f32.mrf.mxu0
    %v3056 = vadd.f32 0.0, %v3055
    %3057 = vdwg.mxu0
    %v3058 = vld [vmem:[%s3 + $0x180] sm:$0xff]
    %v3059 = vld [vmem:[%s3 + $0x188] sm:$0xff]
    %v3060 = vld [vmem:[%s3 + $0x190] sm:$0xff]
    %v3061 = vld [vmem:[%s3 + $0x198] sm:$0xff]
    %v3062 = vld [vmem:[%s3 + $0x1a0] sm:$0xff]
    %v3063 = vld [vmem:[%s3 + $0x1a8] sm:$0xff]
    %v3064 = vld [vmem:[%s3 + $0x1b0] sm:$0xff]
    %v3065 = vld [vmem:[%s3 + $0x1b8] sm:$0xff]
    %v3066 = vsel %vm2360, %v3035, 0.0
    %3067 = vadd.xlane.f32.xlu0 %v3066
    %v3068 = vpop.xlane.xlu0 %3067
    %v3069 = vsel %vm2360, %v3038, 0.0
    %3070 = vadd.xlane.f32.xlu0 %v3069
    %v3071 = vpop.xlane.xlu0 %3070
    %v3072 = vsel %vm2360, %v3041, 0.0
    %3073 = vadd.xlane.f32.xlu0 %v3072
    %v3074 = vpop.xlane.xlu0 %3073
    %v3075 = vsel %vm2360, %v3044, 0.0
    %3076 = vadd.xlane.f32.xlu0 %v3075
    %v3077 = vpop.xlane.xlu0 %3076
    %v3078 = vsel %vm2360, %v3047, 0.0
    %3079 = vadd.xlane.f32.xlu0 %v3078
    %v3080 = vpop.xlane.xlu0 %3079
    %v3081 = vsel %vm2360, %v3050, 0.0
    %3082 = vadd.xlane.f32.xlu0 %v3081
    %v3083 = vpop.xlane.xlu0 %3082
    %v3084 = vsel %vm2360, %v3053, 0.0
    %3085 = vadd.xlane.f32.xlu0 %v3084
    %v3086 = vpop.xlane.xlu0 %3085
    %v3087 = vsel %vm2360, %v3056, 0.0
    %3088 = vadd.xlane.f32.xlu0 %v3087
    %v3089 = vpop.xlane.xlu0 %3088
    %v3090 = vmul.f32 %v3068, 0.03125
    %v3091 = vmul.f32 %v3071, 0.03125
    %v3092 = vmul.f32 %v3074, 0.03125
    %v3093 = vmul.f32 %v3077, 0.03125
    %v3094 = vmul.f32 %v3080, 0.03125
    %v3095 = vmul.f32 %v3083, 0.03125
    %v3096 = vmul.f32 %v3086, 0.03125
    %v3097 = vmul.f32 %v3089, 0.03125
    %v3098 = vmul.f32 %v3035, %v3035
    %v3099 = vmul.f32 %v3038, %v3038
    %v3100 = vmul.f32 %v3041, %v3041
    %v3101 = vmul.f32 %v3044, %v3044
    %v3102 = vmul.f32 %v3047, %v3047
    %v3103 = vmul.f32 %v3050, %v3050
    %v3104 = vmul.f32 %v3053, %v3053
    %v3105 = vmul.f32 %v3056, %v3056
    %v3106 = vsel %vm2360, %v3098, 0.0
    %3107 = vadd.xlane.f32.xlu0 %v3106
    %v3108 = vpop.xlane.xlu0 %3107
    %v3109 = vsel %vm2360, %v3099, 0.0
    %3110 = vadd.xlane.f32.xlu0 %v3109
    %v3111 = vpop.xlane.xlu0 %3110
    %v3112 = vsel %vm2360, %v3100, 0.0
    %3113 = vadd.xlane.f32.xlu0 %v3112
    %v3114 = vpop.xlane.xlu0 %3113
    %v3115 = vsel %vm2360, %v3101, 0.0
    %3116 = vadd.xlane.f32.xlu0 %v3115
    %v3117 = vpop.xlane.xlu0 %3116
    %v3118 = vsel %vm2360, %v3102, 0.0
    %3119 = vadd.xlane.f32.xlu0 %v3118
    %v3120 = vpop.xlane.xlu0 %3119
    %v3121 = vsel %vm2360, %v3103, 0.0
    %3122 = vadd.xlane.f32.xlu0 %v3121
    %v3123 = vpop.xlane.xlu0 %3122
    %v3124 = vsel %vm2360, %v3104, 0.0
    %3125 = vadd.xlane.f32.xlu0 %v3124
    %v3126 = vpop.xlane.xlu0 %3125
    %v3127 = vsel %vm2360, %v3105, 0.0
    %3128 = vadd.xlane.f32.xlu0 %v3127
    %v3129 = vpop.xlane.xlu0 %3128
    %v3130 = vmul.f32 %v3108, 0.03125
    %v3131 = vmul.f32 %v3111, 0.03125
    %v3132 = vmul.f32 %v3114, 0.03125
    %v3133 = vmul.f32 %v3117, 0.03125
    %v3134 = vmul.f32 %v3120, 0.03125
    %v3135 = vmul.f32 %v3123, 0.03125
    %v3136 = vmul.f32 %v3126, 0.03125
    %v3137 = vmul.f32 %v3129, 0.03125
    %v3138 = vmul.f32 %v3090, %v3090
    %v3139 = vmul.f32 %v3091, %v3091
    %v3140 = vmul.f32 %v3092, %v3092
    %v3141 = vmul.f32 %v3093, %v3093
    %v3142 = vmul.f32 %v3094, %v3094
    %v3143 = vmul.f32 %v3095, %v3095
    %v3144 = vmul.f32 %v3096, %v3096
    %v3145 = vmul.f32 %v3097, %v3097
    %v3146 = vsub.f32 %v3130, %v3138
    %v3147 = vsub.f32 %v3131, %v3139
    %v3148 = vsub.f32 %v3132, %v3140
    %v3149 = vsub.f32 %v3133, %v3141
    %v3150 = vsub.f32 %v3134, %v3142
    %v3151 = vsub.f32 %v3135, %v3143
    %v3152 = vsub.f32 %v3136, %v3144
    %v3153 = vsub.f32 %v3137, %v3145
    %v3154 = vmax.f32 %v3146, 0.0
    %v3155 = vmax.f32 %v3147, 0.0
    %v3156 = vmax.f32 %v3148, 0.0
    %v3157 = vmax.f32 %v3149, 0.0
    %v3158 = vmax.f32 %v3150, 0.0
    %v3159 = vmax.f32 %v3151, 0.0
    %v3160 = vmax.f32 %v3152, 0.0
    %v3161 = vmax.f32 %v3153, 0.0
    %v3162 = vsub.f32 %v3035, %v3090
    %v3163 = vsub.f32 %v3038, %v3091
    %v3164 = vsub.f32 %v3041, %v3092
    %v3165 = vsub.f32 %v3044, %v3093
    %v3166 = vsub.f32 %v3047, %v3094
    %v3167 = vsub.f32 %v3050, %v3095
    %v3168 = vsub.f32 %v3053, %v3096
    %v3169 = vsub.f32 %v3056, %v3097
    %v3170 = vadd.f32 %v3154, 0.001
    %v3171 = vadd.f32 %v3155, 0.001
    %v3172 = vadd.f32 %v3156, 0.001
    %v3173 = vadd.f32 %v3157, 0.001
    %v3174 = vadd.f32 %v3158, 0.001
    %v3175 = vadd.f32 %v3159, 0.001
    %v3176 = vadd.f32 %v3160, 0.001
    %v3177 = vadd.f32 %v3161, 0.001
    %v3178 = vrsqrt.pop %v3170
    %v3179 = vmul.f32 %v3178, %v3170
    %v3180 = vmul.f32 %v3179, %v3178
    %v3181 = vmul.f32 0.5, %v3180
    %v3182 = vsub.f32 1.5, %v3181
    %v3183 = vmul.f32 %v3178, %v3182
    %vm3184 = vweird.f32 %v3170
    %vm3185 = vweird.f32 %v3178
    %vm3186 = vmor %vm3184, %vm3185
    %v3187 = vsel %vm3186, %v3178, %v3183
    %v3188 = vrsqrt.pop %v3171
    %v3189 = vmul.f32 %v3188, %v3171
    %v3190 = vmul.f32 %v3189, %v3188
    %v3191 = vmul.f32 0.5, %v3190
    %v3192 = vsub.f32 1.5, %v3191
    %v3193 = vmul.f32 %v3188, %v3192
    %vm3194 = vweird.f32 %v3171
    %vm3195 = vweird.f32 %v3188
    %vm3196 = vmor %vm3194, %vm3195
    %v3197 = vsel %vm3196, %v3188, %v3193
    %v3198 = vrsqrt.pop %v3172
    %v3199 = vmul.f32 %v3198, %v3172
    %v3200 = vmul.f32 %v3199, %v3198
    %v3201 = vmul.f32 0.5, %v3200
    %v3202 = vsub.f32 1.5, %v3201
    %v3203 = vmul.f32 %v3198, %v3202
    %vm3204 = vweird.f32 %v3172
    %vm3205 = vweird.f32 %v3198
    %vm3206 = vmor %vm3204, %vm3205
    %v3207 = vsel %vm3206, %v3198, %v3203
    %v3208 = vrsqrt.pop %v3173
    %v3209 = vmul.f32 %v3208, %v3173
    %v3210 = vmul.f32 %v3209, %v3208
    %v3211 = vmul.f32 0.5, %v3210
    %v3212 = vsub.f32 1.5, %v3211
    %v3213 = vmul.f32 %v3208, %v3212
    %vm3214 = vweird.f32 %v3173
    %vm3215 = vweird.f32 %v3208
    %vm3216 = vmor %vm3214, %vm3215
    %v3217 = vsel %vm3216, %v3208, %v3213
    %v3218 = vrsqrt.pop %v3174
    %v3219 = vmul.f32 %v3218, %v3174
    %v3220 = vmul.f32 %v3219, %v3218
    %v3221 = vmul.f32 0.5, %v3220
    %v3222 = vsub.f32 1.5, %v3221
    %v3223 = vmul.f32 %v3218, %v3222
    %vm3224 = vweird.f32 %v3174
    %vm3225 = vweird.f32 %v3218
    %vm3226 = vmor %vm3224, %vm3225
    %v3227 = vsel %vm3226, %v3218, %v3223
    %v3228 = vrsqrt.pop %v3175
    %v3229 = vmul.f32 %v3228, %v3175
    %v3230 = vmul.f32 %v3229, %v3228
    %v3231 = vmul.f32 0.5, %v3230
    %v3232 = vsub.f32 1.5, %v3231
    %v3233 = vmul.f32 %v3228, %v3232
    %vm3234 = vweird.f32 %v3175
    %vm3235 = vweird.f32 %v3228
    %vm3236 = vmor %vm3234, %vm3235
    %v3237 = vsel %vm3236, %v3228, %v3233
    %v3238 = vrsqrt.pop %v3176
    %v3239 = vmul.f32 %v3238, %v3176
    %v3240 = vmul.f32 %v3239, %v3238
    %v3241 = vmul.f32 0.5, %v3240
    %v3242 = vsub.f32 1.5, %v3241
    %v3243 = vmul.f32 %v3238, %v3242
    %vm3244 = vweird.f32 %v3176
    %vm3245 = vweird.f32 %v3238
    %vm3246 = vmor %vm3244, %vm3245
    %v3247 = vsel %vm3246, %v3238, %v3243
    %v3248 = vrsqrt.pop %v3177
    %v3249 = vmul.f32 %v3248, %v3177
    %v3250 = vmul.f32 %v3249, %v3248
    %v3251 = vmul.f32 0.5, %v3250
    %v3252 = vsub.f32 1.5, %v3251
    %v3253 = vmul.f32 %v3248, %v3252
    %vm3254 = vweird.f32 %v3177
    %vm3255 = vweird.f32 %v3248
    %vm3256 = vmor %vm3254, %vm3255
    %v3257 = vsel %vm3256, %v3248, %v3253
    %v3258 = vmul.f32 %v3162, %v3187
    %v3259 = vmul.f32 %v3163, %v3197
    %v3260 = vmul.f32 %v3164, %v3207
    %v3261 = vmul.f32 %v3165, %v3217
    %v3262 = vmul.f32 %v3166, %v3227
    %v3263 = vmul.f32 %v3167, %v3237
    %v3264 = vmul.f32 %v3168, %v3247
    %v3265 = vmul.f32 %v3169, %v3257
    %3267 = vset.pattern.permute.xlu0 0
    %3268 = vperm.xlu0 %3267, %v3058
    %v3269 = vpop.permute.xlu0 %3268
    %3272 = vset.pattern.permute.xlu0 0
    %3273 = vperm.xlu0 %3272, %v3059
    %v3274 = vpop.permute.xlu0 %3273
    %3277 = vset.pattern.permute.xlu0 0
    %3278 = vperm.xlu0 %3277, %v3060
    %v3279 = vpop.permute.xlu0 %3278
    %3282 = vset.pattern.permute.xlu0 0
    %3283 = vperm.xlu0 %3282, %v3061
    %v3284 = vpop.permute.xlu0 %3283
    %3287 = vset.pattern.permute.xlu0 0
    %3288 = vperm.xlu0 %3287, %v3062
    %v3289 = vpop.permute.xlu0 %3288
    %3292 = vset.pattern.permute.xlu0 0
    %3293 = vperm.xlu0 %3292, %v3063
    %v3294 = vpop.permute.xlu0 %3293
    %3297 = vset.pattern.permute.xlu0 0
    %3298 = vperm.xlu0 %3297, %v3064
    %v3299 = vpop.permute.xlu0 %3298
    %3302 = vset.pattern.permute.xlu0 0
    %3303 = vperm.xlu0 %3302, %v3065
    %v3304 = vpop.permute.xlu0 %3303
    %v3306 = vmul.f32 %v3258, %v3269
    %v3307 = vmul.f32 %v3259, %v3274
    %v3308 = vmul.f32 %v3260, %v3279
    %v3309 = vmul.f32 %v3261, %v3284
    %v3310 = vmul.f32 %v3262, %v3289
    %v3311 = vmul.f32 %v3263, %v3294
    %v3312 = vmul.f32 %v3264, %v3299
    %v3313 = vmul.f32 %v3265, %v3304
    %3314 = vset.pattern.permute.xlu0 1
    %3315 = vperm.xlu0 %3314, %v3058
    %v3316 = vpop.permute.xlu0 %3315
    %3318 = vset.pattern.permute.xlu0 1
    %3319 = vperm.xlu0 %3318, %v3059
    %v3320 = vpop.permute.xlu0 %3319
    %3322 = vset.pattern.permute.xlu0 1
    %3323 = vperm.xlu0 %3322, %v3060
    %v3324 = vpop.permute.xlu0 %3323
    %3326 = vset.pattern.permute.xlu0 1
    %3327 = vperm.xlu0 %3326, %v3061
    %v3328 = vpop.permute.xlu0 %3327
    %3330 = vset.pattern.permute.xlu0 1
    %3331 = vperm.xlu0 %3330, %v3062
    %v3332 = vpop.permute.xlu0 %3331
    %3334 = vset.pattern.permute.xlu0 1
    %3335 = vperm.xlu0 %3334, %v3063
    %v3336 = vpop.permute.xlu0 %3335
    %3338 = vset.pattern.permute.xlu0 1
    %3339 = vperm.xlu0 %3338, %v3064
    %v3340 = vpop.permute.xlu0 %3339
    %3342 = vset.pattern.permute.xlu0 1
    %3343 = vperm.xlu0 %3342, %v3065
    %v3344 = vpop.permute.xlu0 %3343
    %v3346 = vadd.f32 %v3306, %v3316
    %v3347 = vadd.f32 %v3307, %v3320
    %v3348 = vadd.f32 %v3308, %v3324
    %v3349 = vadd.f32 %v3309, %v3328
    %v3350 = vadd.f32 %v3310, %v3332
    %v3351 = vadd.f32 %v3311, %v3336
    %v3352 = vadd.f32 %v3312, %v3340
    %v3353 = vadd.f32 %v3313, %v3344
    %v3354 = vxor.u32 %v3346, 2147483648
    %v3355 = vxor.u32 %v3347, 2147483648
    %v3356 = vxor.u32 %v3348, 2147483648
    %v3357 = vxor.u32 %v3349, 2147483648
    %v3358 = vxor.u32 %v3350, 2147483648
    %v3359 = vxor.u32 %v3351, 2147483648
    %v3360 = vxor.u32 %v3352, 2147483648
    %v3361 = vxor.u32 %v3353, 2147483648
    %v3362 = vmul.f32 %v3354, 1.442695
    %v3363 = vpow.pop %v3362
    %v3364 = vmul.f32 %v3355, 1.442695
    %v3365 = vpow.pop %v3364
    %v3366 = vmul.f32 %v3356, 1.442695
    %v3367 = vpow.pop %v3366
    %v3368 = vmul.f32 %v3357, 1.442695
    %v3369 = vpow.pop %v3368
    %v3370 = vmul.f32 %v3358, 1.442695
    %v3371 = vpow.pop %v3370
    %v3372 = vmul.f32 %v3359, 1.442695
    %v3373 = vpow.pop %v3372
    %v3374 = vmul.f32 %v3360, 1.442695
    %v3375 = vpow.pop %v3374
    %v3376 = vmul.f32 %v3361, 1.442695
    %v3377 = vpow.pop %v3376
    %v3378 = vadd.f32 %v3363, 1.0
    %v3379 = vadd.f32 %v3365, 1.0
    %v3380 = vadd.f32 %v3367, 1.0
    %v3381 = vadd.f32 %v3369, 1.0
    %v3382 = vadd.f32 %v3371, 1.0
    %v3383 = vadd.f32 %v3373, 1.0
    %v3384 = vadd.f32 %v3375, 1.0
    %v3385 = vadd.f32 %v3377, 1.0
    %v3386 = vrcp.pop %v3378
    %v3387 = vmul.f32 %v3378, %v3386
    %v3388 = vsub.f32 1.0, %v3387
    %v3389 = vmul.f32 %v3386, %v3388
    %v3390 = vadd.f32 %v3386, %v3389
    %vm3391 = vweird.f32 %v3378
    %vm3392 = vweird.f32 %v3386
    %vm3393 = vmor %vm3391, %vm3392
    %v3394 = vsel %vm3393, %v3386, %v3390
    %v3395 = vand.u32 2147483647, %v3378
    %vm3396 = vcmp.eq.f32.partialorder %v3395, 8.507059e+37
    %v3397 = vand.u32 %v3378, 2147483648
    %v3398 = vor.u32 1.1754944e-38, %v3397
    %v3399 = vsel %vm3396, %v3398, %v3394
    %v3400 = vmul.f32 1.0, %v3399
    %v3401 = vrcp.pop %v3379
    %v3402 = vmul.f32 %v3379, %v3401
    %v3403 = vsub.f32 1.0, %v3402
    %v3404 = vmul.f32 %v3401, %v3403
    %v3405 = vadd.f32 %v3401, %v3404
    %vm3406 = vweird.f32 %v3379
    %vm3407 = vweird.f32 %v3401
    %vm3408 = vmor %vm3406, %vm3407
    %v3409 = vsel %vm3408, %v3401, %v3405
    %v3410 = vand.u32 2147483647, %v3379
    %vm3411 = vcmp.eq.f32.partialorder %v3410, 8.507059e+37
    %v3412 = vand.u32 %v3379, 2147483648
    %v3413 = vor.u32 1.1754944e-38, %v3412
    %v3414 = vsel %vm3411, %v3413, %v3409
    %v3415 = vmul.f32 1.0, %v3414
    %v3416 = vrcp.pop %v3380
    %v3417 = vmul.f32 %v3380, %v3416
    %v3418 = vsub.f32 1.0, %v3417
    %v3419 = vmul.f32 %v3416, %v3418
    %v3420 = vadd.f32 %v3416, %v3419
    %vm3421 = vweird.f32 %v3380
    %vm3422 = vweird.f32 %v3416
    %vm3423 = vmor %vm3421, %vm3422
    %v3424 = vsel %vm3423, %v3416, %v3420
    %v3425 = vand.u32 2147483647, %v3380
    %vm3426 = vcmp.eq.f32.partialorder %v3425, 8.507059e+37
    %v3427 = vand.u32 %v3380, 2147483648
    %v3428 = vor.u32 1.1754944e-38, %v3427
    %v3429 = vsel %vm3426, %v3428, %v3424
    %v3430 = vmul.f32 1.0, %v3429
    %v3431 = vrcp.pop %v3381
    %v3432 = vmul.f32 %v3381, %v3431
    %v3433 = vsub.f32 1.0, %v3432
    %v3434 = vmul.f32 %v3431, %v3433
    %v3435 = vadd.f32 %v3431, %v3434
    %vm3436 = vweird.f32 %v3381
    %vm3437 = vweird.f32 %v3431
    %vm3438 = vmor %vm3436, %vm3437
    %v3439 = vsel %vm3438, %v3431, %v3435
    %v3440 = vand.u32 2147483647, %v3381
    %vm3441 = vcmp.eq.f32.partialorder %v3440, 8.507059e+37
    %v3442 = vand.u32 %v3381, 2147483648
    %v3443 = vor.u32 1.1754944e-38, %v3442
    %v3444 = vsel %vm3441, %v3443, %v3439
    %v3445 = vmul.f32 1.0, %v3444
    %v3446 = vrcp.pop %v3382
    %v3447 = vmul.f32 %v3382, %v3446
    %v3448 = vsub.f32 1.0, %v3447
    %v3449 = vmul.f32 %v3446, %v3448
    %v3450 = vadd.f32 %v3446, %v3449
    %vm3451 = vweird.f32 %v3382
    %vm3452 = vweird.f32 %v3446
    %vm3453 = vmor %vm3451, %vm3452
    %v3454 = vsel %vm3453, %v3446, %v3450
    %v3455 = vand.u32 2147483647, %v3382
    %vm3456 = vcmp.eq.f32.partialorder %v3455, 8.507059e+37
    %v3457 = vand.u32 %v3382, 2147483648
    %v3458 = vor.u32 1.1754944e-38, %v3457
    %v3459 = vsel %vm3456, %v3458, %v3454
    %v3460 = vmul.f32 1.0, %v3459
    %v3461 = vrcp.pop %v3383
    %v3462 = vmul.f32 %v3383, %v3461
    %v3463 = vsub.f32 1.0, %v3462
    %v3464 = vmul.f32 %v3461, %v3463
    %v3465 = vadd.f32 %v3461, %v3464
    %vm3466 = vweird.f32 %v3383
    %vm3467 = vweird.f32 %v3461
    %vm3468 = vmor %vm3466, %vm3467
    %v3469 = vsel %vm3468, %v3461, %v3465
    %v3470 = vand.u32 2147483647, %v3383
    %vm3471 = vcmp.eq.f32.partialorder %v3470, 8.507059e+37
    %v3472 = vand.u32 %v3383, 2147483648
    %v3473 = vor.u32 1.1754944e-38, %v3472
    %v3474 = vsel %vm3471, %v3473, %v3469
    %v3475 = vmul.f32 1.0, %v3474
    %v3476 = vrcp.pop %v3384
    %v3477 = vmul.f32 %v3384, %v3476
    %v3478 = vsub.f32 1.0, %v3477
    %v3479 = vmul.f32 %v3476, %v3478
    %v3480 = vadd.f32 %v3476, %v3479
    %vm3481 = vweird.f32 %v3384
    %vm3482 = vweird.f32 %v3476
    %vm3483 = vmor %vm3481, %vm3482
    %v3484 = vsel %vm3483, %v3476, %v3480
    %v3485 = vand.u32 2147483647, %v3384
    %vm3486 = vcmp.eq.f32.partialorder %v3485, 8.507059e+37
    %v3487 = vand.u32 %v3384, 2147483648
    %v3488 = vor.u32 1.1754944e-38, %v3487
    %v3489 = vsel %vm3486, %v3488, %v3484
    %v3490 = vmul.f32 1.0, %v3489
    %v3491 = vrcp.pop %v3385
    %v3492 = vmul.f32 %v3385, %v3491
    %v3493 = vsub.f32 1.0, %v3492
    %v3494 = vmul.f32 %v3491, %v3493
    %v3495 = vadd.f32 %v3491, %v3494
    %vm3496 = vweird.f32 %v3385
    %vm3497 = vweird.f32 %v3491
    %vm3498 = vmor %vm3496, %vm3497
    %v3499 = vsel %vm3498, %v3491, %v3495
    %v3500 = vand.u32 2147483647, %v3385
    %vm3501 = vcmp.eq.f32.partialorder %v3500, 8.507059e+37
    %v3502 = vand.u32 %v3385, 2147483648
    %v3503 = vor.u32 1.1754944e-38, %v3502
    %v3504 = vsel %vm3501, %v3503, %v3499
    %v3505 = vmul.f32 1.0, %v3504
    %v3506 = vmul.f32 %v3346, %v3400
    %v3507 = vmul.f32 %v3347, %v3415
    %v3508 = vmul.f32 %v3348, %v3430
    %v3509 = vmul.f32 %v3349, %v3445
    %v3510 = vmul.f32 %v3350, %v3460
    %v3511 = vmul.f32 %v3351, %v3475
    %v3512 = vmul.f32 %v3352, %v3490
    %v3513 = vmul.f32 %v3353, %v3505
    %v3515 = vsel %vm2360, %v3506, 0
    %v3518 = vsel %vm2360, %v3507, 0
    %v3521 = vsel %vm2360, %v3508, 0
    %v3524 = vsel %vm2360, %v3509, 0
    %v3527 = vsel %vm2360, %v3510, 0
    %v3530 = vsel %vm2360, %v3511, 0
    %v3533 = vsel %vm2360, %v3512, 0
    %v3536 = vsel %vm2360, %v3513, 0
    %3538 = vmatpush.xpose.msra.mxu0 0.0
    %3539 = vmatpush.xpose.msra.mxu0 0.0
    %3540 = vmatpush.xpose.msra.mxu0 0.0
    %3541 = vmatpush.xpose.msra.mxu0 0.0
    %3542 = vmatpush.xpose.msra.mxu0 0.0
    %3543 = vmatpush.xpose.msra.mxu0 0.0
    %3544 = vmatpush.xpose.msra.mxu0 0.0
    %3545 = vmatpush.xpose.msra.mxu0 0.0
    %3546 = vmatpush.xpose.msra.mxu0 %v3536
    %3547 = vmatpush.xpose.msra.mxu0 %v3533
    %3548 = vmatpush.xpose.msra.mxu0 %v3530
    %3549 = vmatpush.xpose.msra.mxu0 %v3527
    %3550 = vmatpush.xpose.msra.mxu0 %v3524
    %3551 = vmatpush.xpose.msra.mxu0 %v3521
    %3552 = vmatpush.xpose.msra.mxu0 %v3518
    %3553 = vmatpush.xpose.msra.mxu0 %v3515
    %3554 = vmatmul.f32.gmra.mxu0 %v2599
    %v3555 = vpop.f32.mrf.mxu0
    %v3556 = vadd.f32 0.0, %v3555
    %3557 = vdwg.mxu0
    %v3558 = vmul.f32 %v3556, 0.0625
    %v3559 = vld [vmem:[%s3 + $0x1c0] sm:$0xff]
    %v3560 = vld [vmem:[%s3 + $0x1c8] sm:$0xff]
    %v3561 = vld [vmem:[%s3 + $0x1d0] sm:$0xff]
    %v3562 = vld [vmem:[%s3 + $0x1d8] sm:$0xff]
    %v3563 = vld [vmem:[%s3 + $0x1e0] sm:$0xff]
    %v3564 = vld [vmem:[%s3 + $0x1e8] sm:$0xff]
    %v3565 = vld [vmem:[%s3 + $0x1f0] sm:$0xff]
    %v3566 = vld [vmem:[%s3 + $0x1f8] sm:$0xff]
    %v3567 = vld [vmem:[%s3 + $0x200] sm:$0x1]
    %v3568 = vperm.slane %v3567, 0
    %vm3569 = vcmask 523264
    %v3571 = vsel %vm3569, %v3558, 0
    %3573 = vmatpush.msra.mxu0 0.0
    %3574 = vmatpush.msra.mxu0 0.0
    %3575 = vmatpush.msra.mxu0 0.0
    %3576 = vmatpush.msra.mxu0 0.0
    %3577 = vmatpush.msra.mxu0 0.0
    %3578 = vmatpush.msra.mxu0 0.0
    %3579 = vmatpush.msra.mxu0 0.0
    %3580 = vmatpush.msra.mxu0 0.0
    %3581 = vmatpush.msra.mxu0 %v3566
    %3582 = vmatpush.msra.mxu0 %v3565
    %3583 = vmatpush.msra.mxu0 %v3564
    %3584 = vmatpush.msra.mxu0 %v3563
    %3585 = vmatpush.msra.mxu0 %v3562
    %3586 = vmatpush.msra.mxu0 %v3561
    %3587 = vmatpush.msra.mxu0 %v3560
    %3588 = vmatpush.msra.mxu0 %v3559
    %3589 = vmatmul.f32.gmra.mxu0 %v3571
    %v3590 = vpop.f32.mrf.mxu0
    %v3591 = vadd.f32 %v3568, %v3590
    %3592 = vdwg.mxu0
    %v3594 = vrot.slane %v3591, 1
    %3595 = vrot.lane.b32.xlu0 %v3594, 32
    %v3596 = vpop.permute.xlu0 %3595
    %v3598 = vsel %vm2360, %v3591, %v3596
    %v3599 = vld [vmem:[%s3 + $0x218] sm:$0xff]
    %v3600 = vld [vmem:[%s3 + $0x220] sm:$0xff]
    %v3601 = vld [vmem:[%s3 + $0x228] sm:$0xff]
    %v3602 = vld [vmem:[%s3 + $0x230] sm:$0xff]
    %v3603 = vld [vmem:[%s3 + $0x238] sm:$0xff]
    %v3604 = vld [vmem:[%s3 + $0x240] sm:$0xff]
    %v3605 = vld [vmem:[%s3 + $0x248] sm:$0xff]
    %v3606 = vld [vmem:[%s3 + $0x250] sm:$0xff]
    %v3607 = vld [vmem:[%s3 + $0x258] sm:$0x1]
    %v3609 = vsel %vm3569, %v3598, 0
    %3611 = vmatpush.msra.mxu0 0.0
    %3612 = vmatpush.msra.mxu0 0.0
    %3613 = vmatpush.msra.mxu0 0.0
    %3614 = vmatpush.msra.mxu0 0.0
    %3615 = vmatpush.msra.mxu0 0.0
    %3616 = vmatpush.msra.mxu0 0.0
    %3617 = vmatpush.msra.mxu0 0.0
    %3618 = vmatpush.msra.mxu0 0.0
    %3619 = vmatpush.msra.mxu0 %v3606
    %3620 = vmatpush.msra.mxu0 %v3605
    %3621 = vmatpush.msra.mxu0 %v3604
    %3622 = vmatpush.msra.mxu0 %v3603
    %3623 = vmatpush.msra.mxu0 %v3602
    %3624 = vmatpush.msra.mxu0 %v3601
    %3625 = vmatpush.msra.mxu0 %v3600
    %3626 = vmatpush.msra.mxu0 %v3599
    %3627 = vmatmul.f32.gmra.mxu0 %v3609
    %v3628 = vpop.f32.mrf.mxu0
    %v3629 = vadd.f32 %v3607, %v3628
    %3630 = vdwg.mxu0
    %3631 = vst [vmem:[#allocation5] sm:$0x1] %v3629
    // Predicated region
    $region22: #{efficientnet_extractor_forward.1} parent=1 // pred_check
      _
    $region23: #{efficientnet_extractor_forward.1} parent=1 // pred_check_branch
      %3633 = sbr.rel (0) target = $region25
    $region24: #{efficientnet_extractor_forward.1} parent=1 // pred_region
      %3635 = vsyncadd [#allocation4], 0
      %s3637 = sshll.u32 [#allocation5], 4
      %s3638 = int_to_ptr.vmem [resolvable:$true] %s3637
      %s3639 = sshll.u32 %s4, 4
      %s3640 = int_to_ptr.hbm [resolvable:$true] %s3639
      %3642 = dma.vmem_to_hbm [thread:$0]  %s3638, 16, %s3640, [#allocation4]
    $region25: #{efficientnet_extractor_forward.1} parent=1 // pred_fallthru
      _
    // Predicated region
    $region26: #{efficientnet_extractor_forward.1} parent=1 // pred_check
      _
    $region27: #{efficientnet_extractor_forward.1} parent=1 // pred_check_branch
      %3644 = sbr.rel (0) target = $region29
    $region28: #{efficientnet_extractor_forward.1} parent=1 // pred_region
      %3646 = dma.done [#allocation4], 16
    $region29: #{efficientnet_extractor_forward.1} parent=1 // pred_fallthru
      _
    %3647 = vsyncpa [#allocation3], 1
    %3648 = vsyncpa [#allocation4], 1

</llo_original>
